<compile_context>
chip_gen: v5e
topology: v5e:2x2
jax: 0.10.0
libtpu: 0.0.40
codegen_flags: <defaults>
</compile_context>

<pallas_src>
import math
import functools

import jax
import jax.numpy as jnp
from jax.experimental import pallas as pl
from jax.experimental.pallas import tpu as pltpu


# ----------------------------------------------------------------------------
# Kernel helpers
# ----------------------------------------------------------------------------
def _layer_norm(x, w, b, eps=1e-5):
    mean = jnp.mean(x, axis=-1, keepdims=True)
    var = jnp.mean((x - mean) ** 2, axis=-1, keepdims=True)
    return (x - mean) * jax.lax.rsqrt(var + eps) * w + b


# ----------------------------------------------------------------------------
# Fused kernel: one (BM sequences, one layer) tile per grid step.
# grid = (B_tiles, L); activation carried across the L axis in VMEM scratch.
# ----------------------------------------------------------------------------
def _fused_layer_kernel(
    x_ref,                    # (BM, S1p, Fin)  row 0 = cls slot (zero), tail rows = pad
    rep_ref,                  # (1, D)
    enc_w_ref, enc_b_ref,     # (Fin, D), (1, D)
    wqkv_ref, bqkv_ref,       # (1, D, 3D), (1, 1, 3D)     <- layer l block
    wo_ref, bo_ref,           # (1, D, D), (1, 1, D)
    ln1w_ref, ln1b_ref,       # (1, 1, D), (1, 1, D)
    w1_ref, b1_ref,           # (1, D, FF), (1, 1, FF)
    w2_ref, b2_ref,           # (1, FF, D), (1, 1, D)
    ln2w_ref, ln2b_ref,       # (1, 1, D), (1, 1, D)
    dec_w_ref, dec_b_ref,     # (D, R), (1, R)
    o_ref,                    # (BM, R)
    h_scratch,                # (BM*S1p, D) f32 activation carry
    *,
    n_heads,
    valid_len,                # number of real (non-pad) rows per sequence (incl. cls)
    use_cls_token,
):
    l = pl.program_id(1)
    n_layers = pl.num_programs(1)

    BM, S1p, Fin = x_ref.shape
    D = enc_w_ref.shape[1]
    Dh = D // n_heads
    M = BM * S1p
    scale = 1.0 / math.sqrt(Dh)

    # ---- l == 0: self.encoder(x), cls-token insert, x * sqrt(d_model) ------
    @pl.when(l == 0)
    def _init():
        x = x_ref[...].reshape(M, Fin)
        h0 = jnp.dot(x, enc_w_ref[...],
                     preferred_element_type=jnp.float32) + enc_b_ref[...]
        h0 = h0.reshape(BM, S1p, D)
        if use_cls_token:
            sidx = jax.lax.broadcasted_iota(jnp.int32, (BM, S1p, D), 1)
            rep = jnp.broadcast_to(rep_ref[...], (BM, S1p, D))
            h0 = jnp.where(sidx == 0, rep, h0)
        h_scratch[...] = (h0 * math.sqrt(D)).reshape(M, D)

    h = h_scratch[...]                                     # (M, D)

    # ---- one post-norm encoder layer with layer-l weights -------------------
    # fused QKV projection over the whole (BM*S1p) row block
    qkv = jnp.dot(h, wqkv_ref[0],
                  preferred_element_type=jnp.float32) + bqkv_ref[0]
    q = qkv[:, 0:D].reshape(BM, S1p, D)
    k = qkv[:, D:2 * D].reshape(BM, S1p, D)
    v = qkv[:, 2 * D:3 * D].reshape(BM, S1p, D)

    # key-padding mask: pad rows (index >= valid_len) get a ~-inf score bias
    kidx = jax.lax.broadcasted_iota(jnp.int32, (1, 1, S1p), 2)
    key_bias = jnp.where(kidx < valid_len, 0.0, -1e30).astype(jnp.float32)

    wo = wo_ref[0]                                         # (D, D)
    attn = jnp.zeros((M, D), jnp.float32)
    for hd in range(n_heads):
        sl = slice(hd * Dh, (hd + 1) * Dh)
        qh, kh, vh = q[:, :, sl], k[:, :, sl], v[:, :, sl]
        s = jnp.einsum("bqd,bkd->bqk", qh, kh,
                       preferred_element_type=jnp.float32) * scale + key_bias
        s = s - jnp.max(s, axis=-1, keepdims=True)
        p = jnp.exp(s)
        p = p * pl.reciprocal(jnp.sum(p, axis=-1, keepdims=True), approx=True)
        ctx = jnp.einsum("bqk,bkd->bqd", p, vh,
                         preferred_element_type=jnp.float32)      # (BM, S1p, Dh)
        # head-merge folded into the output projection (no concat / stack)
        attn = attn + jnp.dot(ctx.reshape(M, Dh), wo[sl, :],
                              preferred_element_type=jnp.float32)
    attn = attn + bo_ref[0]

    # residual + LayerNorm 1
    h1 = _layer_norm(h + attn, ln1w_ref[0], ln1b_ref[0])

    # feed-forward (ReLU)
    f = jnp.dot(h1, w1_ref[0], preferred_element_type=jnp.float32) + b1_ref[0]
    f = jnp.maximum(f, 0.0)
    f = jnp.dot(f, w2_ref[0], preferred_element_type=jnp.float32) + b2_ref[0]

    # residual + LayerNorm 2 -> carry to next layer
    h_new = _layer_norm(h1 + f, ln2w_ref[0], ln2b_ref[0])
    h_scratch[...] = h_new

    # ---- l == L-1: pooling (cls row / masked mean) + self.decoder -----------
    @pl.when(l == n_layers - 1)
    def _finish():
        # pooling expressed as a small (BM, M) selection matrix -> MXU matmul,
        # avoids strided row gathers / rank-3 middle-axis reductions.
        bidx = jax.lax.broadcasted_iota(jnp.int32, (BM, M), 0)
        midx = jax.lax.broadcasted_iota(jnp.int32, (BM, M), 1)
        off = midx - bidx * S1p
        if use_cls_token:
            pool = (off == 0).astype(jnp.float32)
        else:
            pool = jnp.where(jnp.logical_and(off >= 0, off < valid_len),
                             1.0 / valid_len, 0.0).astype(jnp.float32)
        pooled = jnp.dot(pool, h_new, preferred_element_type=jnp.float32)  # (BM, D)
        o_ref[...] = (jnp.dot(pooled, dec_w_ref[...],
                              preferred_element_type=jnp.float32)
                      + dec_b_ref[...])


# ----------------------------------------------------------------------------
# Wrapper
# ----------------------------------------------------------------------------
def transformer_encoder_forward(x, params, *, n_heads, use_cls_token=True,
                                block_b=8):
    """Forward pass of TransformerEncoder.  x: (B, S, input_dim) -> (B, rep_dim)."""
    B, S, Fin = x.shape
    D = params["enc_w"].shape[1]
    R = params["dec_w"].shape[1]
    L = params["wqkv"].shape[0]

    lead = 1 if use_cls_token else 0
    S1 = S + lead                           # true sequence length (incl. cls)
    S1p = ((S1 + 7) // 8) * 8               # pad to a multiple of 8 sublanes
    BM = int(block_b)
    Bp = ((B + BM - 1) // BM) * BM
    M = BM * S1p

    # Host-side glue: reserve row 0 as the cls slot (overwritten in-kernel),
    # zero-pad the tail rows / extra batch entries (masked out in-kernel).
    xp = jnp.zeros((Bp, S1p, Fin), jnp.float32)
    xp = xp.at[:B, lead:lead + S, :].set(x.astype(jnp.float32))

    weights = [
        params["rep_token"].reshape(1, D),
        params["enc_w"], params["enc_b"].reshape(1, D),
        params["wqkv"], params["bqkv"],
        params["wo"], params["bo"],
        params["ln1_w"], params["ln1_b"],
        params["w1"], params["b1"],
        params["w2"], params["b2"],
        params["ln2_w"], params["ln2_b"],
        params["dec_w"], params["dec_b"].reshape(1, R),
    ]

    def _const_spec(a):
        nd = a.ndim
        return pl.BlockSpec(a.shape, lambda bt, l, _nd=nd: (0,) * _nd)

    def _layer_spec(a):                      # stacked (L, ...): stream layer l
        blk = (1,) + tuple(a.shape[1:])
        pad = (0,) * (a.ndim - 1)
        return pl.BlockSpec(blk, lambda bt, l, _p=pad: (l,) + _p)

    in_specs = [pl.BlockSpec((BM, S1p, Fin), lambda bt, l: (bt, 0, 0))]
    for w in weights:
        in_specs.append(_layer_spec(w) if w.ndim == 3 else _const_spec(w))

    out_specs = pl.BlockSpec((BM, R), lambda bt, l: (bt, 0))

    # VMEM budget: one layer of weights (double-buffered) + constants + I/O
    # blocks + the activation carry, with headroom.  Re-derive per chip when
    # changing model size (v7x physical VMEM is 64 MiB).
    f32 = 4
    layer_keys = ("wqkv", "bqkv", "wo", "bo", "ln1_w", "ln1_b",
                  "w1", "b1", "w2", "b2", "ln2_w", "ln2_b")
    layer_bytes = sum(int(params[k].size) // L for k in layer_keys) * f32
    const_bytes = (D + Fin * D + D + D * R + R) * f32
    io_bytes = (BM * S1p * Fin + BM * R) * f32
    need = 2 * (layer_bytes + const_bytes + io_bytes) + M * D * f32 + (2 << 20)
    vmem_limit = int(min(max(need, 16 << 20), 100 << 20))

    kernel = functools.partial(
        _fused_layer_kernel,
        n_heads=n_heads,
        valid_len=S1,
        use_cls_token=use_cls_token,
    )

    out = pl.pallas_call(
        kernel,
        out_shape=jax.ShapeDtypeStruct((Bp, R), jnp.float32),
        grid_spec=pltpu.PrefetchScalarGridSpec(
            num_scalar_prefetch=0,
            grid=(Bp // BM, L),
            in_specs=in_specs,
            out_specs=out_specs,
            scratch_shapes=[pltpu.VMEM((M, D), jnp.float32)],
        ),
        compiler_params=pltpu.CompilerParams(
            dimension_semantics=("parallel", "arbitrary"),
            vmem_limit_bytes=vmem_limit,
        ),
    )(xp, *weights)

    return out[:B]


# ----------------------------------------------------------------------------
# Deterministic parameter construction (shapes from __init__)
# ----------------------------------------------------------------------------
def make_params(key, input_dim, query_dim, heads, dim_feedforward, n_layer, rep_dim):
    keys = iter(jax.random.split(key, 32))
    initrange = 0.1
    D, FF, L = query_dim, dim_feedforward, n_layer

    def unif(shape, r):
        return jax.random.uniform(next(keys), shape, jnp.float32, -r, r)

    r_d = 1.0 / math.sqrt(D)
    r_ff = 1.0 / math.sqrt(FF)

    return {
        # nn.Linear(input_dim, query_dim): weight uniform(-0.1, 0.1) per init_weights
        "enc_w": unif((input_dim, D), initrange),            # stored as W^T: (in, out)
        "enc_b": unif((D,), 1.0 / math.sqrt(input_dim)),
        # nn.Linear(query_dim, rep_dim): weight uniform(-0.1, 0.1), bias zero
        "dec_w": unif((D, rep_dim), initrange),
        "dec_b": jnp.zeros((rep_dim,), jnp.float32),
        # representation_token ~ randn(1, 1, query_dim)
        "rep_token": jax.random.normal(next(keys), (1, 1, D), jnp.float32),
        # per-layer weights stacked on a leading L axis.  Linear weights are
        # (in, out) = W^T; the QKV projection is packed as [Wq | Wk | Wv].
        "wqkv": unif((L, D, 3 * D), r_d),
        "bqkv": unif((L, 1, 3 * D), r_d),
        "wo":   unif((L, D, D), r_d),
        "bo":   unif((L, 1, D), r_d),
        "ln1_w": jnp.ones((L, 1, D), jnp.float32),
        "ln1_b": jnp.zeros((L, 1, D), jnp.float32),
        "w1":   unif((L, D, FF), r_d),
        "b1":   unif((L, 1, FF), r_d),
        "w2":   unif((L, FF, D), r_ff),
        "b2":   unif((L, 1, D), r_ff),
        "ln2_w": jnp.ones((L, 1, D), jnp.float32),
        "ln2_b": jnp.zeros((L, 1, D), jnp.float32),
    }


# ----------------------------------------------------------------------------
if __name__ == "__main__":
    # Small shapes consistent with the module's forward
    batch, seq = 2, 8
    input_dim, query_dim, heads = 16, 32, 4
    dim_feedforward, n_layer, rep_dim = 64, 2, 8

    key = jax.random.PRNGKey(0)
    pkey, xkey = jax.random.split(key)
    params = make_params(pkey, input_dim, query_dim, heads,
                         dim_feedforward, n_layer, rep_dim)

    x = jax.random.normal(xkey, (batch, seq, input_dim), jnp.float32)

    out = transformer_encoder_forward(x, params, n_heads=heads, use_cls_token=True)
    out = jax.block_until_ready(out)
    assert out.shape == (batch, rep_dim), out.shape
    assert bool(jnp.all(jnp.isfinite(out)))
    print("KERNEL_OK")
</pallas_src>

<mosaic_0001>
module attributes {stable_mosaic.version = 11 : i64} {
  func.func @_fused_layer_kernel(%arg0: i32, %arg1: i32, %arg2: memref<8x16x16xf32, #tpu.memory_space<vmem>>, %arg3: memref<1x32xf32, #tpu.memory_space<vmem>>, %arg4: memref<16x32xf32, #tpu.memory_space<vmem>>, %arg5: memref<1x32xf32, #tpu.memory_space<vmem>>, %arg6: memref<1x32x96xf32, #tpu.memory_space<vmem>>, %arg7: memref<1x1x96xf32, #tpu.memory_space<vmem>>, %arg8: memref<1x32x32xf32, #tpu.memory_space<vmem>>, %arg9: memref<1x1x32xf32, #tpu.memory_space<vmem>>, %arg10: memref<1x1x32xf32, #tpu.memory_space<vmem>>, %arg11: memref<1x1x32xf32, #tpu.memory_space<vmem>>, %arg12: memref<1x32x64xf32, #tpu.memory_space<vmem>>, %arg13: memref<1x1x64xf32, #tpu.memory_space<vmem>>, %arg14: memref<1x64x32xf32, #tpu.memory_space<vmem>>, %arg15: memref<1x1x32xf32, #tpu.memory_space<vmem>>, %arg16: memref<1x1x32xf32, #tpu.memory_space<vmem>>, %arg17: memref<1x1x32xf32, #tpu.memory_space<vmem>>, %arg18: memref<32x8xf32, #tpu.memory_space<vmem>>, %arg19: memref<1x8xf32, #tpu.memory_space<vmem>>, %arg20: memref<8x8xf32, #tpu.memory_space<vmem>>, %arg21: memref<128x32xf32, #tpu.memory_space<vmem>>) attributes {dimension_semantics = [#tpu.dimension_semantics<parallel>, #tpu.dimension_semantics<arbitrary>], iteration_bounds = array<i64: 1, 2>, scalar_prefetch = 0 : i64, scratch_operands = 1 : i64, tpu.core_type = #tpu.core_type<tc>, window_params = [{transform_indices = @transform_0, window_bounds = array<i64: 8, 16, 16>}, {pipeline_mode = #tpu.pipeline_mode<synchronous>, transform_indices = @transform_1, window_bounds = array<i64: 1, 32>}, {pipeline_mode = #tpu.pipeline_mode<synchronous>, transform_indices = @transform_2, window_bounds = array<i64: 16, 32>}, {pipeline_mode = #tpu.pipeline_mode<synchronous>, transform_indices = @transform_3, window_bounds = array<i64: 1, 32>}, {transform_indices = @transform_4, window_bounds = array<i64: 1, 32, 96>}, {transform_indices = @transform_5, window_bounds = array<i64: 1, 1, 96>}, {transform_indices = @transform_6, window_bounds = array<i64: 1, 32, 32>}, {transform_indices = @transform_7, window_bounds = array<i64: 1, 1, 32>}, {transform_indices = @transform_8, window_bounds = array<i64: 1, 1, 32>}, {transform_indices = @transform_9, window_bounds = array<i64: 1, 1, 32>}, {transform_indices = @transform_10, window_bounds = array<i64: 1, 32, 64>}, {transform_indices = @transform_11, window_bounds = array<i64: 1, 1, 64>}, {transform_indices = @transform_12, window_bounds = array<i64: 1, 64, 32>}, {transform_indices = @transform_13, window_bounds = array<i64: 1, 1, 32>}, {transform_indices = @transform_14, window_bounds = array<i64: 1, 1, 32>}, {transform_indices = @transform_15, window_bounds = array<i64: 1, 1, 32>}, {pipeline_mode = #tpu.pipeline_mode<synchronous>, transform_indices = @transform_16, window_bounds = array<i64: 32, 8>}, {pipeline_mode = #tpu.pipeline_mode<synchronous>, transform_indices = @transform_17, window_bounds = array<i64: 1, 8>}, {transform_indices = @transform_18, window_bounds = array<i64: 8, 8>}]} {
    %c0_i32 = arith.constant 0 : i32
    %0 = arith.cmpi eq, %arg1, %c0_i32 : i32
    %1 = arith.extui %0 : i1 to i32
    %c0_i32_0 = arith.constant 0 : i32
    %2 = arith.cmpi ne, %1, %c0_i32_0 : i32
    scf.if %2 {
      %c0_81 = arith.constant 0 : index
      %c0_82 = arith.constant 0 : index
      %c0_83 = arith.constant 0 : index
      %196 = vector.load %arg2[%c0_81, %c0_82, %c0_83] : memref<8x16x16xf32, #tpu.memory_space<vmem>>, vector<8x16x16xf32>
      %197 = vector.shape_cast %196 : vector<8x16x16xf32> to vector<128x16xf32>
      %c0_84 = arith.constant 0 : index
      %c0_85 = arith.constant 0 : index
      %198 = vector.load %arg4[%c0_84, %c0_85] : memref<16x32xf32, #tpu.memory_space<vmem>>, vector<16x32xf32>
      %cst_86 = arith.constant dense<0.000000e+00> : vector<128x32xf32>
      %199 = tpu.matmul %197, %198, %cst_86 {dimension_numbers = #tpu.dot_dimension_numbers<[1], [0], [0], [1], [0, 0, 1, 1], [], []>} : vector<128x16xf32>, vector<16x32xf32>, vector<128x32xf32> -> vector<128x32xf32>
      %c0_87 = arith.constant 0 : index
      %c0_88 = arith.constant 0 : index
      %200 = vector.load %arg5[%c0_87, %c0_88] : memref<1x32xf32, #tpu.memory_space<vmem>>, vector<1x32xf32>
      %201 = vector.broadcast %200 : vector<1x32xf32> to vector<128x32xf32>
      %202 = arith.addf %199, %201 : vector<128x32xf32>
      %203 = vector.shape_cast %202 : vector<128x32xf32> to vector<8x16x32xf32>
      %204 = tpu.iota {dimensions = array<i32: 1>} : vector<8x16x32xi32>
      %c0_89 = arith.constant 0 : index
      %c0_90 = arith.constant 0 : index
      %205 = vector.load %arg3[%c0_89, %c0_90] : memref<1x32xf32, #tpu.memory_space<vmem>>, vector<1x32xf32>
      %206 = vector.shape_cast %205 : vector<1x32xf32> to vector<1x1x32xf32>
      %207 = vector.broadcast %206 : vector<1x1x32xf32> to vector<8x16x32xf32>
      %c0_i32_91 = arith.constant 0 : i32
      %208 = vector.broadcast %c0_i32_91 : i32 to vector<8x16x32xi32>
      %209 = arith.cmpi eq, %204, %208 : vector<8x16x32xi32>
      %210 = arith.select %209, %207, %203 : vector<8x16x32xi1>, vector<8x16x32xf32>
      %cst_92 = arith.constant 5.65685415 : f32
      %211 = vector.broadcast %cst_92 : f32 to vector<8x16x32xf32>
      %212 = arith.mulf %210, %211 : vector<8x16x32xf32>
      %213 = vector.shape_cast %212 : vector<8x16x32xf32> to vector<128x32xf32>
      %c0_93 = arith.constant 0 : index
      %c0_94 = arith.constant 0 : index
      %214 = vector.load %arg21[%c0_93, %c0_94] : memref<128x32xf32, #tpu.memory_space<vmem>>, vector<128x32xf32>
      tpu.vector_store %arg21[%c0_93, %c0_94], %213 {strides = array<i32>} : memref<128x32xf32, #tpu.memory_space<vmem>>, vector<128x32xf32>,
    } else {
    }
    %c0 = arith.constant 0 : index
    %c0_1 = arith.constant 0 : index
    %3 = vector.load %arg21[%c0, %c0_1] : memref<128x32xf32, #tpu.memory_space<vmem>>, vector<128x32xf32>
    %c0_2 = arith.constant 0 : index
    %c0_3 = arith.constant 0 : index
    %c0_4 = arith.constant 0 : index
    %4 = vector.load %arg6[%c0_2, %c0_3, %c0_4] : memref<1x32x96xf32, #tpu.memory_space<vmem>>, vector<1x32x96xf32>
    %5 = vector.shape_cast %4 : vector<1x32x96xf32> to vector<32x96xf32>
    %cst = arith.constant dense<0.000000e+00> : vector<128x96xf32>
    %6 = tpu.matmul %3, %5, %cst {dimension_numbers = #tpu.dot_dimension_numbers<[1], [0], [0], [1], [0, 0, 1, 1], [], []>} : vector<128x32xf32>, vector<32x96xf32>, vector<128x96xf32> -> vector<128x96xf32>
    %c0_5 = arith.constant 0 : index
    %c0_6 = arith.constant 0 : index
    %c0_7 = arith.constant 0 : index
    %7 = vector.load %arg7[%c0_5, %c0_6, %c0_7] : memref<1x1x96xf32, #tpu.memory_space<vmem>>, vector<1x1x96xf32>
    %8 = vector.shape_cast %7 : vector<1x1x96xf32> to vector<1x96xf32>
    %9 = vector.broadcast %8 : vector<1x96xf32> to vector<128x96xf32>
    %10 = arith.addf %6, %9 : vector<128x96xf32>
    %11 = vector.extract_strided_slice %10 {offsets = [0, 0], sizes = [128, 32], strides = [1, 1]} : vector<128x96xf32> to vector<128x32xf32>
    %12 = vector.shape_cast %11 : vector<128x32xf32> to vector<8x16x32xf32>
    %13 = vector.extract_strided_slice %10 {offsets = [0, 32], sizes = [128, 32], strides = [1, 1]} : vector<128x96xf32> to vector<128x32xf32>
    %14 = vector.shape_cast %13 : vector<128x32xf32> to vector<8x16x32xf32>
    %15 = vector.extract_strided_slice %10 {offsets = [0, 64], sizes = [128, 32], strides = [1, 1]} : vector<128x96xf32> to vector<128x32xf32>
    %16 = vector.shape_cast %15 : vector<128x32xf32> to vector<8x16x32xf32>
    %17 = tpu.iota {dimensions = array<i32: 2>} : vector<1x1x16xi32>
    %c9_i32 = arith.constant 9 : i32
    %18 = vector.broadcast %c9_i32 : i32 to vector<1x1x16xi32>
    %19 = arith.cmpi slt, %17, %18 : vector<1x1x16xi32>
    %cst_8 = arith.constant 0.000000e+00 : f32
    %cst_9 = arith.constant -1.000000e+30 : f32
    %20 = vector.broadcast %cst_8 : f32 to vector<1x1x16xf32>
    %21 = vector.broadcast %cst_9 : f32 to vector<1x1x16xf32>
    %22 = arith.select %19, %20, %21 : vector<1x1x16xi1>, vector<1x1x16xf32>
    %c0_10 = arith.constant 0 : index
    %c0_11 = arith.constant 0 : index
    %c0_12 = arith.constant 0 : index
    %23 = vector.load %arg8[%c0_10, %c0_11, %c0_12] : memref<1x32x32xf32, #tpu.memory_space<vmem>>, vector<1x32x32xf32>
    %24 = vector.shape_cast %23 : vector<1x32x32xf32> to vector<32x32xf32>
    %cst_13 = arith.constant 0.000000e+00 : f32
    %25 = vector.broadcast %cst_13 : f32 to vector<128x32xf32>
    %26 = vector.extract_strided_slice %12 {offsets = [0, 0, 0], sizes = [8, 16, 8], strides = [1, 1, 1]} : vector<8x16x32xf32> to vector<8x16x8xf32>
    %27 = vector.extract_strided_slice %14 {offsets = [0, 0, 0], sizes = [8, 16, 8], strides = [1, 1, 1]} : vector<8x16x32xf32> to vector<8x16x8xf32>
    %28 = vector.extract_strided_slice %16 {offsets = [0, 0, 0], sizes = [8, 16, 8], strides = [1, 1, 1]} : vector<8x16x32xf32> to vector<8x16x8xf32>
    "tpu.trace_start"() <{level = 10 : i32, message = "bqd,bkd->bqk"}> : () -> ()
    %cst_14 = arith.constant dense<0.000000e+00> : vector<8x16x16xf32>
    %29 = tpu.matmul %26, %27, %cst_14 {dimension_numbers = #tpu.dot_dimension_numbers<[2], [2], [1], [1], [0, 0, 0, 1, 1, 1], [0], [0]>} : vector<8x16x8xf32>, vector<8x16x8xf32>, vector<8x16x16xf32> -> vector<8x16x16xf32>
    "tpu.trace_stop"() : () -> ()
    %cst_15 = arith.constant 0.353553385 : f32
    %30 = vector.broadcast %cst_15 : f32 to vector<8x16x16xf32>
    %31 = arith.mulf %29, %30 : vector<8x16x16xf32>
    %32 = vector.broadcast %22 : vector<1x1x16xf32> to vector<8x16x16xf32>
    %33 = arith.addf %31, %32 : vector<8x16x16xf32>
    %cst_16 = arith.constant dense<0xFF800000> : vector<8x16xf32>
    %34 = vector.multi_reduction <maximumf>, %33, %cst_16 [2] : vector<8x16x16xf32> to vector<8x16xf32>
    %35 = vector.shape_cast %34 : vector<8x16xf32> to vector<8x16x1xf32>
    %36 = vector.broadcast %35 : vector<8x16x1xf32> to vector<8x16x16xf32>
    %37 = arith.subf %33, %36 : vector<8x16x16xf32>
    %38 = math.exp %37 : vector<8x16x16xf32>
    %cst_17 = arith.constant dense<0.000000e+00> : vector<8x16xf32>
    %39 = vector.multi_reduction <add>, %38, %cst_17 [2] : vector<8x16x16xf32> to vector<8x16xf32>
    %40 = vector.shape_cast %39 : vector<8x16xf32> to vector<8x16x1xf32>
    %41 = tpu.reciprocal %40 {approx = true} : vector<8x16x1xf32> -> vector<8x16x1xf32>
    %42 = vector.broadcast %41 : vector<8x16x1xf32> to vector<8x16x16xf32>
    %43 = arith.mulf %38, %42 : vector<8x16x16xf32>
    "tpu.trace_start"() <{level = 10 : i32, message = "bqk,bkd->bqd"}> : () -> ()
    %cst_18 = arith.constant dense<0.000000e+00> : vector<8x16x8xf32>
    %44 = tpu.matmul %43, %28, %cst_18 {dimension_numbers = #tpu.dot_dimension_numbers<[2], [1], [1], [2], [0, 0, 0, 1, 1, 2], [0], [0]>} : vector<8x16x16xf32>, vector<8x16x8xf32>, vector<8x16x8xf32> -> vector<8x16x8xf32>
    "tpu.trace_stop"() : () -> ()
    %45 = vector.shape_cast %44 : vector<8x16x8xf32> to vector<128x8xf32>
    %46 = vector.extract_strided_slice %24 {offsets = [0, 0], sizes = [8, 32], strides = [1, 1]} : vector<32x32xf32> to vector<8x32xf32>
    %cst_19 = arith.constant dense<0.000000e+00> : vector<128x32xf32>
    %47 = tpu.matmul %45, %46, %cst_19 {dimension_numbers = #tpu.dot_dimension_numbers<[1], [0], [0], [1], [0, 0, 1, 1], [], []>} : vector<128x8xf32>, vector<8x32xf32>, vector<128x32xf32> -> vector<128x32xf32>
    %48 = arith.addf %25, %47 : vector<128x32xf32>
    %49 = vector.extract_strided_slice %12 {offsets = [0, 0, 8], sizes = [8, 16, 8], strides = [1, 1, 1]} : vector<8x16x32xf32> to vector<8x16x8xf32>
    %50 = vector.extract_strided_slice %14 {offsets = [0, 0, 8], sizes = [8, 16, 8], strides = [1, 1, 1]} : vector<8x16x32xf32> to vector<8x16x8xf32>
    %51 = vector.extract_strided_slice %16 {offsets = [0, 0, 8], sizes = [8, 16, 8], strides = [1, 1, 1]} : vector<8x16x32xf32> to vector<8x16x8xf32>
    "tpu.trace_start"() <{level = 10 : i32, message = "bqd,bkd->bqk"}> : () -> ()
    %cst_20 = arith.constant dense<0.000000e+00> : vector<8x16x16xf32>
    %52 = tpu.matmul %49, %50, %cst_20 {dimension_numbers = #tpu.dot_dimension_numbers<[2], [2], [1], [1], [0, 0, 0, 1, 1, 1], [0], [0]>} : vector<8x16x8xf32>, vector<8x16x8xf32>, vector<8x16x16xf32> -> vector<8x16x16xf32>
    "tpu.trace_stop"() : () -> ()
    %cst_21 = arith.constant 0.353553385 : f32
    %53 = vector.broadcast %cst_21 : f32 to vector<8x16x16xf32>
    %54 = arith.mulf %52, %53 : vector<8x16x16xf32>
    %55 = vector.broadcast %22 : vector<1x1x16xf32> to vector<8x16x16xf32>
    %56 = arith.addf %54, %55 : vector<8x16x16xf32>
    %cst_22 = arith.constant dense<0xFF800000> : vector<8x16xf32>
    %57 = vector.multi_reduction <maximumf>, %56, %cst_22 [2] : vector<8x16x16xf32> to vector<8x16xf32>
    %58 = vector.shape_cast %57 : vector<8x16xf32> to vector<8x16x1xf32>
    %59 = vector.broadcast %58 : vector<8x16x1xf32> to vector<8x16x16xf32>
    %60 = arith.subf %56, %59 : vector<8x16x16xf32>
    %61 = math.exp %60 : vector<8x16x16xf32>
    %cst_23 = arith.constant dense<0.000000e+00> : vector<8x16xf32>
    %62 = vector.multi_reduction <add>, %61, %cst_23 [2] : vector<8x16x16xf32> to vector<8x16xf32>
    %63 = vector.shape_cast %62 : vector<8x16xf32> to vector<8x16x1xf32>
    %64 = tpu.reciprocal %63 {approx = true} : vector<8x16x1xf32> -> vector<8x16x1xf32>
    %65 = vector.broadcast %64 : vector<8x16x1xf32> to vector<8x16x16xf32>
    %66 = arith.mulf %61, %65 : vector<8x16x16xf32>
    "tpu.trace_start"() <{level = 10 : i32, message = "bqk,bkd->bqd"}> : () -> ()
    %cst_24 = arith.constant dense<0.000000e+00> : vector<8x16x8xf32>
    %67 = tpu.matmul %66, %51, %cst_24 {dimension_numbers = #tpu.dot_dimension_numbers<[2], [1], [1], [2], [0, 0, 0, 1, 1, 2], [0], [0]>} : vector<8x16x16xf32>, vector<8x16x8xf32>, vector<8x16x8xf32> -> vector<8x16x8xf32>
    "tpu.trace_stop"() : () -> ()
    %68 = vector.shape_cast %67 : vector<8x16x8xf32> to vector<128x8xf32>
    %69 = vector.extract_strided_slice %24 {offsets = [8, 0], sizes = [8, 32], strides = [1, 1]} : vector<32x32xf32> to vector<8x32xf32>
    %cst_25 = arith.constant dense<0.000000e+00> : vector<128x32xf32>
    %70 = tpu.matmul %68, %69, %cst_25 {dimension_numbers = #tpu.dot_dimension_numbers<[1], [0], [0], [1], [0, 0, 1, 1], [], []>} : vector<128x8xf32>, vector<8x32xf32>, vector<128x32xf32> -> vector<128x32xf32>
    %71 = arith.addf %48, %70 : vector<128x32xf32>
    %72 = vector.extract_strided_slice %12 {offsets = [0, 0, 16], sizes = [8, 16, 8], strides = [1, 1, 1]} : vector<8x16x32xf32> to vector<8x16x8xf32>
    %73 = vector.extract_strided_slice %14 {offsets = [0, 0, 16], sizes = [8, 16, 8], strides = [1, 1, 1]} : vector<8x16x32xf32> to vector<8x16x8xf32>
    %74 = vector.extract_strided_slice %16 {offsets = [0, 0, 16], sizes = [8, 16, 8], strides = [1, 1, 1]} : vector<8x16x32xf32> to vector<8x16x8xf32>
    "tpu.trace_start"() <{level = 10 : i32, message = "bqd,bkd->bqk"}> : () -> ()
    %cst_26 = arith.constant dense<0.000000e+00> : vector<8x16x16xf32>
    %75 = tpu.matmul %72, %73, %cst_26 {dimension_numbers = #tpu.dot_dimension_numbers<[2], [2], [1], [1], [0, 0, 0, 1, 1, 1], [0], [0]>} : vector<8x16x8xf32>, vector<8x16x8xf32>, vector<8x16x16xf32> -> vector<8x16x16xf32>
    "tpu.trace_stop"() : () -> ()
    %cst_27 = arith.constant 0.353553385 : f32
    %76 = vector.broadcast %cst_27 : f32 to vector<8x16x16xf32>
    %77 = arith.mulf %75, %76 : vector<8x16x16xf32>
    %78 = vector.broadcast %22 : vector<1x1x16xf32> to vector<8x16x16xf32>
    %79 = arith.addf %77, %78 : vector<8x16x16xf32>
    %cst_28 = arith.constant dense<0xFF800000> : vector<8x16xf32>
    %80 = vector.multi_reduction <maximumf>, %79, %cst_28 [2] : vector<8x16x16xf32> to vector<8x16xf32>
    %81 = vector.shape_cast %80 : vector<8x16xf32> to vector<8x16x1xf32>
    %82 = vector.broadcast %81 : vector<8x16x1xf32> to vector<8x16x16xf32>
    %83 = arith.subf %79, %82 : vector<8x16x16xf32>
    %84 = math.exp %83 : vector<8x16x16xf32>
    %cst_29 = arith.constant dense<0.000000e+00> : vector<8x16xf32>
    %85 = vector.multi_reduction <add>, %84, %cst_29 [2] : vector<8x16x16xf32> to vector<8x16xf32>
    %86 = vector.shape_cast %85 : vector<8x16xf32> to vector<8x16x1xf32>
    %87 = tpu.reciprocal %86 {approx = true} : vector<8x16x1xf32> -> vector<8x16x1xf32>
    %88 = vector.broadcast %87 : vector<8x16x1xf32> to vector<8x16x16xf32>
    %89 = arith.mulf %84, %88 : vector<8x16x16xf32>
    "tpu.trace_start"() <{level = 10 : i32, message = "bqk,bkd->bqd"}> : () -> ()
    %cst_30 = arith.constant dense<0.000000e+00> : vector<8x16x8xf32>
    %90 = tpu.matmul %89, %74, %cst_30 {dimension_numbers = #tpu.dot_dimension_numbers<[2], [1], [1], [2], [0, 0, 0, 1, 1, 2], [0], [0]>} : vector<8x16x16xf32>, vector<8x16x8xf32>, vector<8x16x8xf32> -> vector<8x16x8xf32>
    "tpu.trace_stop"() : () -> ()
    %91 = vector.shape_cast %90 : vector<8x16x8xf32> to vector<128x8xf32>
    %92 = vector.extract_strided_slice %24 {offsets = [16, 0], sizes = [8, 32], strides = [1, 1]} : vector<32x32xf32> to vector<8x32xf32>
    %cst_31 = arith.constant dense<0.000000e+00> : vector<128x32xf32>
    %93 = tpu.matmul %91, %92, %cst_31 {dimension_numbers = #tpu.dot_dimension_numbers<[1], [0], [0], [1], [0, 0, 1, 1], [], []>} : vector<128x8xf32>, vector<8x32xf32>, vector<128x32xf32> -> vector<128x32xf32>
    %94 = arith.addf %71, %93 : vector<128x32xf32>
    %95 = vector.extract_strided_slice %12 {offsets = [0, 0, 24], sizes = [8, 16, 8], strides = [1, 1, 1]} : vector<8x16x32xf32> to vector<8x16x8xf32>
    %96 = vector.extract_strided_slice %14 {offsets = [0, 0, 24], sizes = [8, 16, 8], strides = [1, 1, 1]} : vector<8x16x32xf32> to vector<8x16x8xf32>
    %97 = vector.extract_strided_slice %16 {offsets = [0, 0, 24], sizes = [8, 16, 8], strides = [1, 1, 1]} : vector<8x16x32xf32> to vector<8x16x8xf32>
    "tpu.trace_start"() <{level = 10 : i32, message = "bqd,bkd->bqk"}> : () -> ()
    %cst_32 = arith.constant dense<0.000000e+00> : vector<8x16x16xf32>
    %98 = tpu.matmul %95, %96, %cst_32 {dimension_numbers = #tpu.dot_dimension_numbers<[2], [2], [1], [1], [0, 0, 0, 1, 1, 1], [0], [0]>} : vector<8x16x8xf32>, vector<8x16x8xf32>, vector<8x16x16xf32> -> vector<8x16x16xf32>
    "tpu.trace_stop"() : () -> ()
    %cst_33 = arith.constant 0.353553385 : f32
    %99 = vector.broadcast %cst_33 : f32 to vector<8x16x16xf32>
    %100 = arith.mulf %98, %99 : vector<8x16x16xf32>
    %101 = vector.broadcast %22 : vector<1x1x16xf32> to vector<8x16x16xf32>
    %102 = arith.addf %100, %101 : vector<8x16x16xf32>
    %cst_34 = arith.constant dense<0xFF800000> : vector<8x16xf32>
    %103 = vector.multi_reduction <maximumf>, %102, %cst_34 [2] : vector<8x16x16xf32> to vector<8x16xf32>
    %104 = vector.shape_cast %103 : vector<8x16xf32> to vector<8x16x1xf32>
    %105 = vector.broadcast %104 : vector<8x16x1xf32> to vector<8x16x16xf32>
    %106 = arith.subf %102, %105 : vector<8x16x16xf32>
    %107 = math.exp %106 : vector<8x16x16xf32>
    %cst_35 = arith.constant dense<0.000000e+00> : vector<8x16xf32>
    %108 = vector.multi_reduction <add>, %107, %cst_35 [2] : vector<8x16x16xf32> to vector<8x16xf32>
    %109 = vector.shape_cast %108 : vector<8x16xf32> to vector<8x16x1xf32>
    %110 = tpu.reciprocal %109 {approx = true} : vector<8x16x1xf32> -> vector<8x16x1xf32>
    %111 = vector.broadcast %110 : vector<8x16x1xf32> to vector<8x16x16xf32>
    %112 = arith.mulf %107, %111 : vector<8x16x16xf32>
    "tpu.trace_start"() <{level = 10 : i32, message = "bqk,bkd->bqd"}> : () -> ()
    %cst_36 = arith.constant dense<0.000000e+00> : vector<8x16x8xf32>
    %113 = tpu.matmul %112, %97, %cst_36 {dimension_numbers = #tpu.dot_dimension_numbers<[2], [1], [1], [2], [0, 0, 0, 1, 1, 2], [0], [0]>} : vector<8x16x16xf32>, vector<8x16x8xf32>, vector<8x16x8xf32> -> vector<8x16x8xf32>
    "tpu.trace_stop"() : () -> ()
    %114 = vector.shape_cast %113 : vector<8x16x8xf32> to vector<128x8xf32>
    %115 = vector.extract_strided_slice %24 {offsets = [24, 0], sizes = [8, 32], strides = [1, 1]} : vector<32x32xf32> to vector<8x32xf32>
    %cst_37 = arith.constant dense<0.000000e+00> : vector<128x32xf32>
    %116 = tpu.matmul %114, %115, %cst_37 {dimension_numbers = #tpu.dot_dimension_numbers<[1], [0], [0], [1], [0, 0, 1, 1], [], []>} : vector<128x8xf32>, vector<8x32xf32>, vector<128x32xf32> -> vector<128x32xf32>
    %117 = arith.addf %94, %116 : vector<128x32xf32>
    %c0_38 = arith.constant 0 : index
    %c0_39 = arith.constant 0 : index
    %c0_40 = arith.constant 0 : index
    %118 = vector.load %arg9[%c0_38, %c0_39, %c0_40] : memref<1x1x32xf32, #tpu.memory_space<vmem>>, vector<1x1x32xf32>
    %119 = vector.shape_cast %118 : vector<1x1x32xf32> to vector<1x32xf32>
    %120 = vector.broadcast %119 : vector<1x32xf32> to vector<128x32xf32>
    %121 = arith.addf %117, %120 : vector<128x32xf32>
    %122 = arith.addf %3, %121 : vector<128x32xf32>
    %c0_41 = arith.constant 0 : index
    %c0_42 = arith.constant 0 : index
    %c0_43 = arith.constant 0 : index
    %123 = vector.load %arg10[%c0_41, %c0_42, %c0_43] : memref<1x1x32xf32, #tpu.memory_space<vmem>>, vector<1x1x32xf32>
    %124 = vector.shape_cast %123 : vector<1x1x32xf32> to vector<1x32xf32>
    %c0_44 = arith.constant 0 : index
    %c0_45 = arith.constant 0 : index
    %c0_46 = arith.constant 0 : index
    %125 = vector.load %arg11[%c0_44, %c0_45, %c0_46] : memref<1x1x32xf32, #tpu.memory_space<vmem>>, vector<1x1x32xf32>
    %126 = vector.shape_cast %125 : vector<1x1x32xf32> to vector<1x32xf32>
    %cst_47 = arith.constant dense<0.000000e+00> : vector<128xf32>
    %127 = vector.multi_reduction <add>, %122, %cst_47 [1] : vector<128x32xf32> to vector<128xf32>
    %128 = vector.shape_cast %127 : vector<128xf32> to vector<128x1xf32>
    %cst_48 = arith.constant 3.200000e+01 : f32
    %129 = vector.broadcast %cst_48 : f32 to vector<128x1xf32>
    %130 = arith.divf %128, %129 : vector<128x1xf32>
    %131 = vector.broadcast %130 : vector<128x1xf32> to vector<128x32xf32>
    %132 = arith.subf %122, %131 : vector<128x32xf32>
    %133 = arith.mulf %132, %132 : vector<128x32xf32>
    %cst_49 = arith.constant dense<0.000000e+00> : vector<128xf32>
    %134 = vector.multi_reduction <add>, %133, %cst_49 [1] : vector<128x32xf32> to vector<128xf32>
    %135 = vector.shape_cast %134 : vector<128xf32> to vector<128x1xf32>
    %cst_50 = arith.constant 3.200000e+01 : f32
    %136 = vector.broadcast %cst_50 : f32 to vector<128x1xf32>
    %137 = arith.divf %135, %136 : vector<128x1xf32>
    %138 = vector.broadcast %130 : vector<128x1xf32> to vector<128x32xf32>
    %139 = arith.subf %122, %138 : vector<128x32xf32>
    %cst_51 = arith.constant 9.99999974E-6 : f32
    %140 = vector.broadcast %cst_51 : f32 to vector<128x1xf32>
    %141 = arith.addf %137, %140 : vector<128x1xf32>
    %142 = math.rsqrt %141 : vector<128x1xf32>
    %143 = vector.broadcast %142 : vector<128x1xf32> to vector<128x32xf32>
    %144 = arith.mulf %139, %143 : vector<128x32xf32>
    %145 = vector.broadcast %124 : vector<1x32xf32> to vector<128x32xf32>
    %146 = arith.mulf %144, %145 : vector<128x32xf32>
    %147 = vector.broadcast %126 : vector<1x32xf32> to vector<128x32xf32>
    %148 = arith.addf %146, %147 : vector<128x32xf32>
    %c0_52 = arith.constant 0 : index
    %c0_53 = arith.constant 0 : index
    %c0_54 = arith.constant 0 : index
    %149 = vector.load %arg12[%c0_52, %c0_53, %c0_54] : memref<1x32x64xf32, #tpu.memory_space<vmem>>, vector<1x32x64xf32>
    %150 = vector.shape_cast %149 : vector<1x32x64xf32> to vector<32x64xf32>
    %cst_55 = arith.constant dense<0.000000e+00> : vector<128x64xf32>
    %151 = tpu.matmul %148, %150, %cst_55 {dimension_numbers = #tpu.dot_dimension_numbers<[1], [0], [0], [1], [0, 0, 1, 1], [], []>} : vector<128x32xf32>, vector<32x64xf32>, vector<128x64xf32> -> vector<128x64xf32>
    %c0_56 = arith.constant 0 : index
    %c0_57 = arith.constant 0 : index
    %c0_58 = arith.constant 0 : index
    %152 = vector.load %arg13[%c0_56, %c0_57, %c0_58] : memref<1x1x64xf32, #tpu.memory_space<vmem>>, vector<1x1x64xf32>
    %153 = vector.shape_cast %152 : vector<1x1x64xf32> to vector<1x64xf32>
    %154 = vector.broadcast %153 : vector<1x64xf32> to vector<128x64xf32>
    %155 = arith.addf %151, %154 : vector<128x64xf32>
    %cst_59 = arith.constant 0.000000e+00 : f32
    %156 = vector.broadcast %cst_59 : f32 to vector<128x64xf32>
    %157 = arith.maximumf %155, %156 : vector<128x64xf32>
    %c0_60 = arith.constant 0 : index
    %c0_61 = arith.constant 0 : index
    %c0_62 = arith.constant 0 : index
    %158 = vector.load %arg14[%c0_60, %c0_61, %c0_62] : memref<1x64x32xf32, #tpu.memory_space<vmem>>, vector<1x64x32xf32>
    %159 = vector.shape_cast %158 : vector<1x64x32xf32> to vector<64x32xf32>
    %cst_63 = arith.constant dense<0.000000e+00> : vector<128x32xf32>
    %160 = tpu.matmul %157, %159, %cst_63 {dimension_numbers = #tpu.dot_dimension_numbers<[1], [0], [0], [1], [0, 0, 1, 1], [], []>} : vector<128x64xf32>, vector<64x32xf32>, vector<128x32xf32> -> vector<128x32xf32>
    %c0_64 = arith.constant 0 : index
    %c0_65 = arith.constant 0 : index
    %c0_66 = arith.constant 0 : index
    %161 = vector.load %arg15[%c0_64, %c0_65, %c0_66] : memref<1x1x32xf32, #tpu.memory_space<vmem>>, vector<1x1x32xf32>
    %162 = vector.shape_cast %161 : vector<1x1x32xf32> to vector<1x32xf32>
    %163 = vector.broadcast %162 : vector<1x32xf32> to vector<128x32xf32>
    %164 = arith.addf %160, %163 : vector<128x32xf32>
    %165 = arith.addf %148, %164 : vector<128x32xf32>
    %c0_67 = arith.constant 0 : index
    %c0_68 = arith.constant 0 : index
    %c0_69 = arith.constant 0 : index
    %166 = vector.load %arg16[%c0_67, %c0_68, %c0_69] : memref<1x1x32xf32, #tpu.memory_space<vmem>>, vector<1x1x32xf32>
    %167 = vector.shape_cast %166 : vector<1x1x32xf32> to vector<1x32xf32>
    %c0_70 = arith.constant 0 : index
    %c0_71 = arith.constant 0 : index
    %c0_72 = arith.constant 0 : index
    %168 = vector.load %arg17[%c0_70, %c0_71, %c0_72] : memref<1x1x32xf32, #tpu.memory_space<vmem>>, vector<1x1x32xf32>
    %169 = vector.shape_cast %168 : vector<1x1x32xf32> to vector<1x32xf32>
    %cst_73 = arith.constant dense<0.000000e+00> : vector<128xf32>
    %170 = vector.multi_reduction <add>, %165, %cst_73 [1] : vector<128x32xf32> to vector<128xf32>
    %171 = vector.shape_cast %170 : vector<128xf32> to vector<128x1xf32>
    %cst_74 = arith.constant 3.200000e+01 : f32
    %172 = vector.broadcast %cst_74 : f32 to vector<128x1xf32>
    %173 = arith.divf %171, %172 : vector<128x1xf32>
    %174 = vector.broadcast %173 : vector<128x1xf32> to vector<128x32xf32>
    %175 = arith.subf %165, %174 : vector<128x32xf32>
    %176 = arith.mulf %175, %175 : vector<128x32xf32>
    %cst_75 = arith.constant dense<0.000000e+00> : vector<128xf32>
    %177 = vector.multi_reduction <add>, %176, %cst_75 [1] : vector<128x32xf32> to vector<128xf32>
    %178 = vector.shape_cast %177 : vector<128xf32> to vector<128x1xf32>
    %cst_76 = arith.constant 3.200000e+01 : f32
    %179 = vector.broadcast %cst_76 : f32 to vector<128x1xf32>
    %180 = arith.divf %178, %179 : vector<128x1xf32>
    %181 = vector.broadcast %173 : vector<128x1xf32> to vector<128x32xf32>
    %182 = arith.subf %165, %181 : vector<128x32xf32>
    %cst_77 = arith.constant 9.99999974E-6 : f32
    %183 = vector.broadcast %cst_77 : f32 to vector<128x1xf32>
    %184 = arith.addf %180, %183 : vector<128x1xf32>
    %185 = math.rsqrt %184 : vector<128x1xf32>
    %186 = vector.broadcast %185 : vector<128x1xf32> to vector<128x32xf32>
    %187 = arith.mulf %182, %186 : vector<128x32xf32>
    %188 = vector.broadcast %167 : vector<1x32xf32> to vector<128x32xf32>
    %189 = arith.mulf %187, %188 : vector<128x32xf32>
    %190 = vector.broadcast %169 : vector<1x32xf32> to vector<128x32xf32>
    %191 = arith.addf %189, %190 : vector<128x32xf32>
    %c0_78 = arith.constant 0 : index
    %c0_79 = arith.constant 0 : index
    %192 = vector.load %arg21[%c0_78, %c0_79] : memref<128x32xf32, #tpu.memory_space<vmem>>, vector<128x32xf32>
    tpu.vector_store %arg21[%c0_78, %c0_79], %191 {strides = array<i32>} : memref<128x32xf32, #tpu.memory_space<vmem>>, vector<128x32xf32>,
    %c1_i32 = arith.constant 1 : i32
    %193 = arith.cmpi eq, %arg1, %c1_i32 : i32
    %194 = arith.extui %193 : i1 to i32
    %c0_i32_80 = arith.constant 0 : i32
    %195 = arith.cmpi ne, %194, %c0_i32_80 : i32
    scf.if %195 {
      %196 = tpu.iota {dimensions = array<i32: 0>} : vector<8x128xi32>
      %197 = tpu.iota {dimensions = array<i32: 1>} : vector<8x128xi32>
      %c16_i32 = arith.constant 16 : i32
      %198 = vector.broadcast %c16_i32 : i32 to vector<8x128xi32>
      %199 = arith.muli %196, %198 : vector<8x128xi32>
      %200 = arith.subi %197, %199 : vector<8x128xi32>
      %c0_i32_81 = arith.constant 0 : i32
      %201 = vector.broadcast %c0_i32_81 : i32 to vector<8x128xi32>
      %202 = arith.cmpi eq, %200, %201 : vector<8x128xi32>
      %203 = arith.extui %202 : vector<8x128xi1> to vector<8x128xi32>
      %204 = arith.sitofp %203 : vector<8x128xi32> to vector<8x128xf32>
      %cst_82 = arith.constant dense<0.000000e+00> : vector<8x32xf32>
      %205 = tpu.matmul %204, %191, %cst_82 {dimension_numbers = #tpu.dot_dimension_numbers<[1], [0], [0], [1], [0, 0, 1, 1], [], []>} : vector<8x128xf32>, vector<128x32xf32>, vector<8x32xf32> -> vector<8x32xf32>
      %c0_83 = arith.constant 0 : index
      %c0_84 = arith.constant 0 : index
      %206 = vector.load %arg18[%c0_83, %c0_84] : memref<32x8xf32, #tpu.memory_space<vmem>>, vector<32x8xf32>
      %cst_85 = arith.constant dense<0.000000e+00> : vector<8x8xf32>
      %207 = tpu.matmul %205, %206, %cst_85 {dimension_numbers = #tpu.dot_dimension_numbers<[1], [0], [0], [1], [0, 0, 1, 1], [], []>} : vector<8x32xf32>, vector<32x8xf32>, vector<8x8xf32> -> vector<8x8xf32>
      %c0_86 = arith.constant 0 : index
      %c0_87 = arith.constant 0 : index
      %208 = vector.load %arg19[%c0_86, %c0_87] : memref<1x8xf32, #tpu.memory_space<vmem>>, vector<1x8xf32>
      %209 = vector.broadcast %208 : vector<1x8xf32> to vector<8x8xf32>
      %210 = arith.addf %207, %209 : vector<8x8xf32>
      %c0_88 = arith.constant 0 : index
      %c0_89 = arith.constant 0 : index
      %211 = vector.load %arg20[%c0_88, %c0_89] : memref<8x8xf32, #tpu.memory_space<vmem>>, vector<8x8xf32>
      tpu.vector_store %arg20[%c0_88, %c0_89], %210 {strides = array<i32>} : memref<8x8xf32, #tpu.memory_space<vmem>>, vector<8x8xf32>,
    } else {
    }
    return
  }
  func.func @transform_0(%arg0: i32, %arg1: i32) -> (i32, i32, i32) {
    %c0_i32 = arith.constant 0 : i32
    %c0_i32_0 = arith.constant 0 : i32
    %c0_i32_1 = arith.constant 0 : i32
    return %arg0, %c0_i32, %c0_i32_0 : i32, i32, i32
  }
  func.func @transform_1(%arg0: i32, %arg1: i32) -> (i32, i32) {
    %c0_i32 = arith.constant 0 : i32
    %c0_i32_0 = arith.constant 0 : i32
    %c0_i32_1 = arith.constant 0 : i32
    return %c0_i32, %c0_i32_0 : i32, i32
  }
  func.func @transform_2(%arg0: i32, %arg1: i32) -> (i32, i32) {
    %c0_i32 = arith.constant 0 : i32
    %c0_i32_0 = arith.constant 0 : i32
    %c0_i32_1 = arith.constant 0 : i32
    return %c0_i32, %c0_i32_0 : i32, i32
  }
  func.func @transform_3(%arg0: i32, %arg1: i32) -> (i32, i32) {
    %c0_i32 = arith.constant 0 : i32
    %c0_i32_0 = arith.constant 0 : i32
    %c0_i32_1 = arith.constant 0 : i32
    return %c0_i32, %c0_i32_0 : i32, i32
  }
  func.func @transform_4(%arg0: i32, %arg1: i32) -> (i32, i32, i32) {
    %c0_i32 = arith.constant 0 : i32
    %c0_i32_0 = arith.constant 0 : i32
    %c0_i32_1 = arith.constant 0 : i32
    return %arg1, %c0_i32, %c0_i32_0 : i32, i32, i32
  }
  func.func @transform_5(%arg0: i32, %arg1: i32) -> (i32, i32, i32) {
    %c0_i32 = arith.constant 0 : i32
    %c0_i32_0 = arith.constant 0 : i32
    %c0_i32_1 = arith.constant 0 : i32
    return %arg1, %c0_i32, %c0_i32_0 : i32, i32, i32
  }
  func.func @transform_6(%arg0: i32, %arg1: i32) -> (i32, i32, i32) {
    %c0_i32 = arith.constant 0 : i32
    %c0_i32_0 = arith.constant 0 : i32
    %c0_i32_1 = arith.constant 0 : i32
    return %arg1, %c0_i32, %c0_i32_0 : i32, i32, i32
  }
  func.func @transform_7(%arg0: i32, %arg1: i32) -> (i32, i32, i32) {
    %c0_i32 = arith.constant 0 : i32
    %c0_i32_0 = arith.constant 0 : i32
    %c0_i32_1 = arith.constant 0 : i32
    return %arg1, %c0_i32, %c0_i32_0 : i32, i32, i32
  }
  func.func @transform_8(%arg0: i32, %arg1: i32) -> (i32, i32, i32) {
    %c0_i32 = arith.constant 0 : i32
    %c0_i32_0 = arith.constant 0 : i32
    %c0_i32_1 = arith.constant 0 : i32
    return %arg1, %c0_i32, %c0_i32_0 : i32, i32, i32
  }
  func.func @transform_9(%arg0: i32, %arg1: i32) -> (i32, i32, i32) {
    %c0_i32 = arith.constant 0 : i32
    %c0_i32_0 = arith.constant 0 : i32
    %c0_i32_1 = arith.constant 0 : i32
    return %arg1, %c0_i32, %c0_i32_0 : i32, i32, i32
  }
  func.func @transform_10(%arg0: i32, %arg1: i32) -> (i32, i32, i32) {
    %c0_i32 = arith.constant 0 : i32
    %c0_i32_0 = arith.constant 0 : i32
    %c0_i32_1 = arith.constant 0 : i32
    return %arg1, %c0_i32, %c0_i32_0 : i32, i32, i32
  }
  func.func @transform_11(%arg0: i32, %arg1: i32) -> (i32, i32, i32) {
    %c0_i32 = arith.constant 0 : i32
    %c0_i32_0 = arith.constant 0 : i32
    %c0_i32_1 = arith.constant 0 : i32
    return %arg1, %c0_i32, %c0_i32_0 : i32, i32, i32
  }
  func.func @transform_12(%arg0: i32, %arg1: i32) -> (i32, i32, i32) {
    %c0_i32 = arith.constant 0 : i32
    %c0_i32_0 = arith.constant 0 : i32
    %c0_i32_1 = arith.constant 0 : i32
    return %arg1, %c0_i32, %c0_i32_0 : i32, i32, i32
  }
  func.func @transform_13(%arg0: i32, %arg1: i32) -> (i32, i32, i32) {
    %c0_i32 = arith.constant 0 : i32
    %c0_i32_0 = arith.constant 0 : i32
    %c0_i32_1 = arith.constant 0 : i32
    return %arg1, %c0_i32, %c0_i32_0 : i32, i32, i32
  }
  func.func @transform_14(%arg0: i32, %arg1: i32) -> (i32, i32, i32) {
    %c0_i32 = arith.constant 0 : i32
    %c0_i32_0 = arith.constant 0 : i32
    %c0_i32_1 = arith.constant 0 : i32
    return %arg1, %c0_i32, %c0_i32_0 : i32, i32, i32
  }
  func.func @transform_15(%arg0: i32, %arg1: i32) -> (i32, i32, i32) {
    %c0_i32 = arith.constant 0 : i32
    %c0_i32_0 = arith.constant 0 : i32
    %c0_i32_1 = arith.constant 0 : i32
    return %arg1, %c0_i32, %c0_i32_0 : i32, i32, i32
  }
  func.func @transform_16(%arg0: i32, %arg1: i32) -> (i32, i32) {
    %c0_i32 = arith.constant 0 : i32
    %c0_i32_0 = arith.constant 0 : i32
    %c0_i32_1 = arith.constant 0 : i32
    return %c0_i32, %c0_i32_0 : i32, i32
  }
  func.func @transform_17(%arg0: i32, %arg1: i32) -> (i32, i32) {
    %c0_i32 = arith.constant 0 : i32
    %c0_i32_0 = arith.constant 0 : i32
    %c0_i32_1 = arith.constant 0 : i32
    return %c0_i32, %c0_i32_0 : i32, i32
  }
  func.func @transform_18(%arg0: i32, %arg1: i32) -> (i32, i32) {
    %c0_i32 = arith.constant 0 : i32
    %c0_i32_0 = arith.constant 0 : i32
    return %arg0, %c0_i32 : i32, i32
  }
}

</mosaic_0001>

<llo_original>
// kernel: tpu_custom_call.1
$region0: #{tpu_custom_call.1}
  #allocation0 [shape = 'u32[]', space=smem, size = 0x4, offset = 0x4, fixed_abs, tag = 'smem constant byte address 0x4 - core index']
  #allocation1 [shape = 'u32[72,128]{1,0:T(1,128)}', space=vmem, size = 0x9000, scoped, tag = 'internal scratch']
  #allocation2 [shape = 'f32[128,32]{1,0:T(8,128)}', space=vmem, size = 0x10000, scoped, tag = 'scratch operand']
  %s0 = inlined_call_operand.vmem [shape: f32[8,16,16], index: 0, kind: input, shape index: {}]
  %s1 = inlined_call_operand.vmem [shape: f32[1,32], index: 1, kind: input, shape index: {}]
  %s2 = inlined_call_operand.vmem [shape: f32[16,32], index: 2, kind: input, shape index: {}]
  %s3 = inlined_call_operand.vmem [shape: f32[1,32], index: 3, kind: input, shape index: {}]
  %s4 = inlined_call_operand.vmem [shape: f32[2,32,96], index: 4, kind: input, shape index: {}]
  %s5 = inlined_call_operand.vmem [shape: f32[2,1,96], index: 5, kind: input, shape index: {}]
  %s6 = inlined_call_operand.hbm [shape: f32[2,32,32], index: 6, kind: input, shape index: {}]
  %s7 = inlined_call_operand.vmem [shape: f32[2,1,32], index: 7, kind: input, shape index: {}]
  %s8 = inlined_call_operand.vmem [shape: f32[2,1,32], index: 8, kind: input, shape index: {}]
  %s9 = inlined_call_operand.vmem [shape: f32[2,1,32], index: 9, kind: input, shape index: {}]
  %s10 = inlined_call_operand.hbm [shape: f32[2,32,64], index: 10, kind: input, shape index: {}]
  %s11 = inlined_call_operand.vmem [shape: f32[2,1,64], index: 11, kind: input, shape index: {}]
  %s12 = inlined_call_operand.vmem [shape: f32[2,64,32], index: 12, kind: input, shape index: {}]
  %s13 = inlined_call_operand.vmem [shape: f32[2,1,32], index: 13, kind: input, shape index: {}]
  %s14 = inlined_call_operand.vmem [shape: f32[2,1,32], index: 14, kind: input, shape index: {}]
  %s15 = inlined_call_operand.vmem [shape: f32[2,1,32], index: 15, kind: input, shape index: {}]
  %s16 = inlined_call_operand.vmem [shape: f32[32,8], index: 16, kind: input, shape index: {}]
  %s17 = inlined_call_operand.vmem [shape: f32[1,8], index: 17, kind: input, shape index: {}]
  %s18 = inlined_call_operand.hbm [shape: f32[8,8], index: 18, kind: output, shape index: {}]
  %s19 = sld [smem:[#allocation0]]
  $region121: #{tpu_custom_call.1} parent=0
    _
  %s21 = ssub.s32 1, %s19
  %s22 = scalar_select 0, %s21, %s19
  $region1: #{tpu_custom_call.1} parent=0
    #allocation3 [shape = 'u8[32768]{0}', space=vmem, size = 0x8000, scoped, tag = 'input window, operand 6']
    #allocation4 [shape = 's32[2]{0}', space=sflag, size = 0x8, scoped, tag = 'scoped memory for tpu_custom_call.1']
    #allocation5 [shape = 's32[2]{0}', space=sflag, size = 0x8, scoped, tag = 'scoped memory for tpu_custom_call.1']
    #allocation6 [shape = 'u8[32768]{0}', space=vmem, size = 0x8000, scoped, tag = 'input window, operand 10']
    #allocation7 [shape = 's32[2]{0}', space=sflag, size = 0x8, scoped, tag = 'scoped memory for tpu_custom_call.1']
    #allocation8 [shape = 'u8[4096]{0}', space=vmem, size = 0x1000, scoped, tag = 'output window, operand 0, single buffered']
    %23 = vsyncpa [#allocation4], 0
    %s24 = scalar_lea.sflag [#allocation4], 1
    %25 = vsyncpa %s24, 0
    %26 = vsyncpa [#allocation7], 0
    %s27 = scalar_lea.sflag [#allocation7], 1
    %28 = vsyncpa %s27, 0
    %29 = vsyncpa [#allocation5], 0
    loop: start=0, step=1, limit=4
    $region2: #{tpu_custom_call.1} parent=1 // loop_pre_header
      _
    $region3: #{tpu_custom_call.1} parent=1 // loop_header
      %s31 = sphi 0, %s35
      %p32 = scmp.ge.s32.totalorder %s31, 4
      %s38 = sphi 0, %s50
      %s39 = sphi 0, %s46
      %s40 = sphi 0, %s38
      %s41 = sphi 0, %s39
      %s42 = sphi 0, %s40
      %s43 = sphi 0, %s41
      %s53 = sphi 0, %s55
      %s56 = sphi 0, %s53
      %s57 = sphi 0, %s56
      %s73 = sphi 0, %s57
      %s77 = sphi 0, %s77
      %s79 = sphi 0, %s77
      %s80 = sphi 0, %s79
      %s94 = sphi 0, %s80
      %s98 = sphi 0, %s98
      %s100 = sphi 0, %s98
      %s101 = sphi 0, %s100
      %s115 = sphi 0, %s101
      %s119 = sphi 0, %s119
      %s121 = sphi 0, %s119
      %s122 = sphi 0, %s121
      %s136 = sphi 0, %s122
      %s142 = sphi 0, %s144
      %s145 = sphi 0, %s142
      %s146 = sphi 0, %s145
      %s162 = sphi 0, %s146
      %s168 = sphi 0, %s170
      %s171 = sphi 0, %s168
      %s172 = sphi 0, %s171
      %s188 = sphi 0, %s172
      %s194 = sphi 0, %s196
      %s197 = sphi 0, %s194
      %s198 = sphi 0, %s197
      %s214 = sphi 0, %s198
      %s220 = sphi 0, %s222
      %s223 = sphi 0, %s220
      %s224 = sphi 0, %s223
      %s240 = sphi 0, %s224
      %s246 = sphi 0, %s248
      %s249 = sphi 0, %s246
      %s250 = sphi 0, %s249
      %s266 = sphi 0, %s250
      %s272 = sphi 0, %s274
      %s275 = sphi 0, %s272
      %s276 = sphi 0, %s275
      %s292 = sphi 0, %s276
      %s298 = sphi 0, %s300
      %s301 = sphi 0, %s298
      %s302 = sphi 0, %s301
      %s318 = sphi 0, %s302
      %s324 = sphi 0, %s326
      %s327 = sphi 0, %s324
      %s328 = sphi 0, %s327
      %s344 = sphi 0, %s328
      %s350 = sphi 0, %s352
      %s353 = sphi 0, %s350
      %s354 = sphi 0, %s353
      %s370 = sphi 0, %s354
      %s376 = sphi 0, %s378
      %s379 = sphi 0, %s376
      %s380 = sphi 0, %s379
      %s396 = sphi 0, %s380
      %s402 = sphi 0, %s404
      %s405 = sphi 0, %s402
      %s406 = sphi 0, %s405
      %s422 = sphi 0, %s406
      %s428 = sphi 0, %s430
      %s431 = sphi 0, %s428
      %s432 = sphi 0, %s431
      %s448 = sphi 0, %s432
      %s452 = sphi 0, %s452
      %s454 = sphi 0, %s452
      %s455 = sphi 0, %s454
      %s469 = sphi 0, %s455
      %s473 = sphi 0, %s473
      %s475 = sphi 0, %s473
      %s476 = sphi 0, %s475
      %s490 = sphi 0, %s476
      %s496 = sphi 0, %s498
      %s499 = sphi 0, %s496
      %s500 = sphi 0, %s499
      %s516 = sphi 0, %s500
    $region4: #{tpu_custom_call.1} parent=1 // loop_header_branch
      %34 = sbr.rel (%p32) target = $region8
    $region5: #{tpu_custom_call.1} parent=1 // loop_body
      %s36 = ssub.s32 %s31, 1
      %s37 = ssub.s32 %s31, 2
      %s44 = sadd.s32 1, %s39
      %p45 = scmp.ge.s32.totalorder %s44, 2
      %s46 = scalar_select %p45, 0, %s44
      %s47 = sadd.s32 1, %s38
      %s48 = scalar_select %p45, %s47, %s38
      %p49 = scmp.ge.s32.totalorder %s48, 1
      %s50 = scalar_select %p49, 0, %s48
      %s51 = ssub.s32 %s38, %s50
      %p52 = scmp.eq.s32.totalorder %s51, 0
      %s54 = sadd.s32 %s53, 1
      %s55 = scalar_select %p52, %s53, %s54
      %p58 = pneg %p52
      %p59 = scmp.eq.s32.totalorder %s31, 1
      %p60 = por %p58, %p59
      %p61 = scmp.ne.s32.totalorder %s53, %s56
      %p62 = scmp.eq.s32.totalorder %s31, 0
      %p63 = por %p61, %p62
      %p64 = scmp.ne.s32.totalorder %s53, %s56
      %p65 = scmp.eq.s32.totalorder %s36, 1
      %p66 = por %p64, %p65
      %p67 = scmp.ne.s32.totalorder %s56, %s57
      %p68 = scmp.eq.s32.totalorder %s36, 0
      %p69 = por %p67, %p68
      %p70 = scmp.ne.s32.totalorder %s56, %s57
      %p71 = scmp.eq.s32.totalorder %s37, 1
      %p72 = por %p70, %p71
      %p74 = scmp.ne.s32.totalorder %s57, %s73
      %p75 = scmp.eq.s32.totalorder %s37, 0
      %p76 = por %p74, %p75
      %s78 = sadd.s32 %s77, 1
      %p81 = scmp.eq.s32.totalorder %s31, 1
      %p82 = scmp.ne.s32.totalorder %s77, %s79
      %p83 = scmp.eq.s32.totalorder %s31, 0
      %p84 = por %p82, %p83
      %p85 = scmp.ne.s32.totalorder %s77, %s79
      %p86 = scmp.eq.s32.totalorder %s36, 1
      %p87 = por %p85, %p86
      %p88 = scmp.ne.s32.totalorder %s79, %s80
      %p89 = scmp.eq.s32.totalorder %s36, 0
      %p90 = por %p88, %p89
      %p91 = scmp.ne.s32.totalorder %s79, %s80
      %p92 = scmp.eq.s32.totalorder %s37, 1
      %p93 = por %p91, %p92
      %p95 = scmp.ne.s32.totalorder %s80, %s94
      %p96 = scmp.eq.s32.totalorder %s37, 0
      %p97 = por %p95, %p96
      %s99 = sadd.s32 %s98, 1
      %p102 = scmp.eq.s32.totalorder %s31, 1
      %p103 = scmp.ne.s32.totalorder %s98, %s100
      %p104 = scmp.eq.s32.totalorder %s31, 0
      %p105 = por %p103, %p104
      %p106 = scmp.ne.s32.totalorder %s98, %s100
      %p107 = scmp.eq.s32.totalorder %s36, 1
      %p108 = por %p106, %p107
      %p109 = scmp.ne.s32.totalorder %s100, %s101
      %p110 = scmp.eq.s32.totalorder %s36, 0
      %p111 = por %p109, %p110
      %p112 = scmp.ne.s32.totalorder %s100, %s101
      %p113 = scmp.eq.s32.totalorder %s37, 1
      %p114 = por %p112, %p113
      %p116 = scmp.ne.s32.totalorder %s101, %s115
      %p117 = scmp.eq.s32.totalorder %s37, 0
      %p118 = por %p116, %p117
      %s120 = sadd.s32 %s119, 1
      %p123 = scmp.eq.s32.totalorder %s31, 1
      %p124 = scmp.ne.s32.totalorder %s119, %s121
      %p125 = scmp.eq.s32.totalorder %s31, 0
      %p126 = por %p124, %p125
      %p127 = scmp.ne.s32.totalorder %s119, %s121
      %p128 = scmp.eq.s32.totalorder %s36, 1
      %p129 = por %p127, %p128
      %p130 = scmp.ne.s32.totalorder %s121, %s122
      %p131 = scmp.eq.s32.totalorder %s36, 0
      %p132 = por %p130, %p131
      %p133 = scmp.ne.s32.totalorder %s121, %s122
      %p134 = scmp.eq.s32.totalorder %s37, 1
      %p135 = por %p133, %p134
      %p137 = scmp.ne.s32.totalorder %s122, %s136
      %p138 = scmp.eq.s32.totalorder %s37, 0
      %p139 = por %p137, %p138
      %s140 = ssub.s32 %s39, %s46
      %p141 = scmp.eq.s32.totalorder %s140, 0
      %s143 = sadd.s32 %s142, 1
      %s144 = scalar_select %p141, %s142, %s143
      %p147 = pneg %p141
      %p148 = scmp.eq.s32.totalorder %s31, 1
      %p149 = por %p147, %p148
      %p150 = scmp.ne.s32.totalorder %s142, %s145
      %p151 = scmp.eq.s32.totalorder %s31, 0
      %p152 = por %p150, %p151
      %p153 = scmp.ne.s32.totalorder %s142, %s145
      %p154 = scmp.eq.s32.totalorder %s36, 1
      %p155 = por %p153, %p154
      %p156 = scmp.ne.s32.totalorder %s145, %s146
      %p157 = scmp.eq.s32.totalorder %s36, 0
      %p158 = por %p156, %p157
      %p159 = scmp.ne.s32.totalorder %s145, %s146
      %p160 = scmp.eq.s32.totalorder %s37, 1
      %p161 = por %p159, %p160
      %p163 = scmp.ne.s32.totalorder %s146, %s162
      %p164 = scmp.eq.s32.totalorder %s37, 0
      %p165 = por %p163, %p164
      %s166 = ssub.s32 %s39, %s46
      %p167 = scmp.eq.s32.totalorder %s166, 0
      %s169 = sadd.s32 %s168, 1
      %s170 = scalar_select %p167, %s168, %s169
      %p173 = pneg %p167
      %p174 = scmp.eq.s32.totalorder %s31, 1
      %p175 = por %p173, %p174
      %p176 = scmp.ne.s32.totalorder %s168, %s171
      %p177 = scmp.eq.s32.totalorder %s31, 0
      %p178 = por %p176, %p177
      %p179 = scmp.ne.s32.totalorder %s168, %s171
      %p180 = scmp.eq.s32.totalorder %s36, 1
      %p181 = por %p179, %p180
      %p182 = scmp.ne.s32.totalorder %s171, %s172
      %p183 = scmp.eq.s32.totalorder %s36, 0
      %p184 = por %p182, %p183
      %p185 = scmp.ne.s32.totalorder %s171, %s172
      %p186 = scmp.eq.s32.totalorder %s37, 1
      %p187 = por %p185, %p186
      %p189 = scmp.ne.s32.totalorder %s172, %s188
      %p190 = scmp.eq.s32.totalorder %s37, 0
      %p191 = por %p189, %p190
      %s192 = ssub.s32 %s39, %s46
      %p193 = scmp.eq.s32.totalorder %s192, 0
      %s195 = sadd.s32 %s194, 1
      %s196 = scalar_select %p193, %s194, %s195
      %p199 = pneg %p193
      %p200 = scmp.eq.s32.totalorder %s31, 1
      %p201 = por %p199, %p200
      %p202 = scmp.ne.s32.totalorder %s194, %s197
      %p203 = scmp.eq.s32.totalorder %s31, 0
      %p204 = por %p202, %p203
      %p205 = scmp.ne.s32.totalorder %s194, %s197
      %p206 = scmp.eq.s32.totalorder %s36, 1
      %p207 = por %p205, %p206
      %p208 = scmp.ne.s32.totalorder %s197, %s198
      %p209 = scmp.eq.s32.totalorder %s36, 0
      %p210 = por %p208, %p209
      %p211 = scmp.ne.s32.totalorder %s197, %s198
      %p212 = scmp.eq.s32.totalorder %s37, 1
      %p213 = por %p211, %p212
      %p215 = scmp.ne.s32.totalorder %s198, %s214
      %p216 = scmp.eq.s32.totalorder %s37, 0
      %p217 = por %p215, %p216
      %s218 = ssub.s32 %s39, %s46
      %p219 = scmp.eq.s32.totalorder %s218, 0
      %s221 = sadd.s32 %s220, 1
      %s222 = scalar_select %p219, %s220, %s221
      %p225 = pneg %p219
      %p226 = scmp.eq.s32.totalorder %s31, 1
      %p227 = por %p225, %p226
      %p228 = scmp.ne.s32.totalorder %s220, %s223
      %p229 = scmp.eq.s32.totalorder %s31, 0
      %p230 = por %p228, %p229
      %p231 = scmp.ne.s32.totalorder %s220, %s223
      %p232 = scmp.eq.s32.totalorder %s36, 1
      %p233 = por %p231, %p232
      %p234 = scmp.ne.s32.totalorder %s223, %s224
      %p235 = scmp.eq.s32.totalorder %s36, 0
      %p236 = por %p234, %p235
      %p237 = scmp.ne.s32.totalorder %s223, %s224
      %p238 = scmp.eq.s32.totalorder %s37, 1
      %p239 = por %p237, %p238
      %p241 = scmp.ne.s32.totalorder %s224, %s240
      %p242 = scmp.eq.s32.totalorder %s37, 0
      %p243 = por %p241, %p242
      %s244 = ssub.s32 %s39, %s46
      %p245 = scmp.eq.s32.totalorder %s244, 0
      %s247 = sadd.s32 %s246, 1
      %s248 = scalar_select %p245, %s246, %s247
      %p251 = pneg %p245
      %p252 = scmp.eq.s32.totalorder %s31, 1
      %p253 = por %p251, %p252
      %p254 = scmp.ne.s32.totalorder %s246, %s249
      %p255 = scmp.eq.s32.totalorder %s31, 0
      %p256 = por %p254, %p255
      %p257 = scmp.ne.s32.totalorder %s246, %s249
      %p258 = scmp.eq.s32.totalorder %s36, 1
      %p259 = por %p257, %p258
      %p260 = scmp.ne.s32.totalorder %s249, %s250
      %p261 = scmp.eq.s32.totalorder %s36, 0
      %p262 = por %p260, %p261
      %p263 = scmp.ne.s32.totalorder %s249, %s250
      %p264 = scmp.eq.s32.totalorder %s37, 1
      %p265 = por %p263, %p264
      %p267 = scmp.ne.s32.totalorder %s250, %s266
      %p268 = scmp.eq.s32.totalorder %s37, 0
      %p269 = por %p267, %p268
      %s270 = ssub.s32 %s39, %s46
      %p271 = scmp.eq.s32.totalorder %s270, 0
      %s273 = sadd.s32 %s272, 1
      %s274 = scalar_select %p271, %s272, %s273
      %p277 = pneg %p271
      %p278 = scmp.eq.s32.totalorder %s31, 1
      %p279 = por %p277, %p278
      %p280 = scmp.ne.s32.totalorder %s272, %s275
      %p281 = scmp.eq.s32.totalorder %s31, 0
      %p282 = por %p280, %p281
      %p283 = scmp.ne.s32.totalorder %s272, %s275
      %p284 = scmp.eq.s32.totalorder %s36, 1
      %p285 = por %p283, %p284
      %p286 = scmp.ne.s32.totalorder %s275, %s276
      %p287 = scmp.eq.s32.totalorder %s36, 0
      %p288 = por %p286, %p287
      %p289 = scmp.ne.s32.totalorder %s275, %s276
      %p290 = scmp.eq.s32.totalorder %s37, 1
      %p291 = por %p289, %p290
      %p293 = scmp.ne.s32.totalorder %s276, %s292
      %p294 = scmp.eq.s32.totalorder %s37, 0
      %p295 = por %p293, %p294
      %s296 = ssub.s32 %s39, %s46
      %p297 = scmp.eq.s32.totalorder %s296, 0
      %s299 = sadd.s32 %s298, 1
      %s300 = scalar_select %p297, %s298, %s299
      %p303 = pneg %p297
      %p304 = scmp.eq.s32.totalorder %s31, 1
      %p305 = por %p303, %p304
      %p306 = scmp.ne.s32.totalorder %s298, %s301
      %p307 = scmp.eq.s32.totalorder %s31, 0
      %p308 = por %p306, %p307
      %p309 = scmp.ne.s32.totalorder %s298, %s301
      %p310 = scmp.eq.s32.totalorder %s36, 1
      %p311 = por %p309, %p310
      %p312 = scmp.ne.s32.totalorder %s301, %s302
      %p313 = scmp.eq.s32.totalorder %s36, 0
      %p314 = por %p312, %p313
      %p315 = scmp.ne.s32.totalorder %s301, %s302
      %p316 = scmp.eq.s32.totalorder %s37, 1
      %p317 = por %p315, %p316
      %p319 = scmp.ne.s32.totalorder %s302, %s318
      %p320 = scmp.eq.s32.totalorder %s37, 0
      %p321 = por %p319, %p320
      %s322 = ssub.s32 %s39, %s46
      %p323 = scmp.eq.s32.totalorder %s322, 0
      %s325 = sadd.s32 %s324, 1
      %s326 = scalar_select %p323, %s324, %s325
      %p329 = pneg %p323
      %p330 = scmp.eq.s32.totalorder %s31, 1
      %p331 = por %p329, %p330
      %p332 = scmp.ne.s32.totalorder %s324, %s327
      %p333 = scmp.eq.s32.totalorder %s31, 0
      %p334 = por %p332, %p333
      %p335 = scmp.ne.s32.totalorder %s324, %s327
      %p336 = scmp.eq.s32.totalorder %s36, 1
      %p337 = por %p335, %p336
      %p338 = scmp.ne.s32.totalorder %s327, %s328
      %p339 = scmp.eq.s32.totalorder %s36, 0
      %p340 = por %p338, %p339
      %p341 = scmp.ne.s32.totalorder %s327, %s328
      %p342 = scmp.eq.s32.totalorder %s37, 1
      %p343 = por %p341, %p342
      %p345 = scmp.ne.s32.totalorder %s328, %s344
      %p346 = scmp.eq.s32.totalorder %s37, 0
      %p347 = por %p345, %p346
      %s348 = ssub.s32 %s39, %s46
      %p349 = scmp.eq.s32.totalorder %s348, 0
      %s351 = sadd.s32 %s350, 1
      %s352 = scalar_select %p349, %s350, %s351
      %p355 = pneg %p349
      %p356 = scmp.eq.s32.totalorder %s31, 1
      %p357 = por %p355, %p356
      %p358 = scmp.ne.s32.totalorder %s350, %s353
      %p359 = scmp.eq.s32.totalorder %s31, 0
      %p360 = por %p358, %p359
      %p361 = scmp.ne.s32.totalorder %s350, %s353
      %p362 = scmp.eq.s32.totalorder %s36, 1
      %p363 = por %p361, %p362
      %p364 = scmp.ne.s32.totalorder %s353, %s354
      %p365 = scmp.eq.s32.totalorder %s36, 0
      %p366 = por %p364, %p365
      %p367 = scmp.ne.s32.totalorder %s353, %s354
      %p368 = scmp.eq.s32.totalorder %s37, 1
      %p369 = por %p367, %p368
      %p371 = scmp.ne.s32.totalorder %s354, %s370
      %p372 = scmp.eq.s32.totalorder %s37, 0
      %p373 = por %p371, %p372
      %s374 = ssub.s32 %s39, %s46
      %p375 = scmp.eq.s32.totalorder %s374, 0
      %s377 = sadd.s32 %s376, 1
      %s378 = scalar_select %p375, %s376, %s377
      %p381 = pneg %p375
      %p382 = scmp.eq.s32.totalorder %s31, 1
      %p383 = por %p381, %p382
      %p384 = scmp.ne.s32.totalorder %s376, %s379
      %p385 = scmp.eq.s32.totalorder %s31, 0
      %p386 = por %p384, %p385
      %p387 = scmp.ne.s32.totalorder %s376, %s379
      %p388 = scmp.eq.s32.totalorder %s36, 1
      %p389 = por %p387, %p388
      %p390 = scmp.ne.s32.totalorder %s379, %s380
      %p391 = scmp.eq.s32.totalorder %s36, 0
      %p392 = por %p390, %p391
      %p393 = scmp.ne.s32.totalorder %s379, %s380
      %p394 = scmp.eq.s32.totalorder %s37, 1
      %p395 = por %p393, %p394
      %p397 = scmp.ne.s32.totalorder %s380, %s396
      %p398 = scmp.eq.s32.totalorder %s37, 0
      %p399 = por %p397, %p398
      %s400 = ssub.s32 %s39, %s46
      %p401 = scmp.eq.s32.totalorder %s400, 0
      %s403 = sadd.s32 %s402, 1
      %s404 = scalar_select %p401, %s402, %s403
      %p407 = pneg %p401
      %p408 = scmp.eq.s32.totalorder %s31, 1
      %p409 = por %p407, %p408
      %p410 = scmp.ne.s32.totalorder %s402, %s405
      %p411 = scmp.eq.s32.totalorder %s31, 0
      %p412 = por %p410, %p411
      %p413 = scmp.ne.s32.totalorder %s402, %s405
      %p414 = scmp.eq.s32.totalorder %s36, 1
      %p415 = por %p413, %p414
      %p416 = scmp.ne.s32.totalorder %s405, %s406
      %p417 = scmp.eq.s32.totalorder %s36, 0
      %p418 = por %p416, %p417
      %p419 = scmp.ne.s32.totalorder %s405, %s406
      %p420 = scmp.eq.s32.totalorder %s37, 1
      %p421 = por %p419, %p420
      %p423 = scmp.ne.s32.totalorder %s406, %s422
      %p424 = scmp.eq.s32.totalorder %s37, 0
      %p425 = por %p423, %p424
      %s426 = ssub.s32 %s39, %s46
      %p427 = scmp.eq.s32.totalorder %s426, 0
      %s429 = sadd.s32 %s428, 1
      %s430 = scalar_select %p427, %s428, %s429
      %p433 = pneg %p427
      %p434 = scmp.eq.s32.totalorder %s31, 1
      %p435 = por %p433, %p434
      %p436 = scmp.ne.s32.totalorder %s428, %s431
      %p437 = scmp.eq.s32.totalorder %s31, 0
      %p438 = por %p436, %p437
      %p439 = scmp.ne.s32.totalorder %s428, %s431
      %p440 = scmp.eq.s32.totalorder %s36, 1
      %p441 = por %p439, %p440
      %p442 = scmp.ne.s32.totalorder %s431, %s432
      %p443 = scmp.eq.s32.totalorder %s36, 0
      %p444 = por %p442, %p443
      %p445 = scmp.ne.s32.totalorder %s431, %s432
      %p446 = scmp.eq.s32.totalorder %s37, 1
      %p447 = por %p445, %p446
      %p449 = scmp.ne.s32.totalorder %s432, %s448
      %p450 = scmp.eq.s32.totalorder %s37, 0
      %p451 = por %p449, %p450
      %s453 = sadd.s32 %s452, 1
      %p456 = scmp.eq.s32.totalorder %s31, 1
      %p457 = scmp.ne.s32.totalorder %s452, %s454
      %p458 = scmp.eq.s32.totalorder %s31, 0
      %p459 = por %p457, %p458
      %p460 = scmp.ne.s32.totalorder %s452, %s454
      %p461 = scmp.eq.s32.totalorder %s36, 1
      %p462 = por %p460, %p461
      %p463 = scmp.ne.s32.totalorder %s454, %s455
      %p464 = scmp.eq.s32.totalorder %s36, 0
      %p465 = por %p463, %p464
      %p466 = scmp.ne.s32.totalorder %s454, %s455
      %p467 = scmp.eq.s32.totalorder %s37, 1
      %p468 = por %p466, %p467
      %p470 = scmp.ne.s32.totalorder %s455, %s469
      %p471 = scmp.eq.s32.totalorder %s37, 0
      %p472 = por %p470, %p471
      %s474 = sadd.s32 %s473, 1
      %p477 = scmp.eq.s32.totalorder %s31, 1
      %p478 = scmp.ne.s32.totalorder %s473, %s475
      %p479 = scmp.eq.s32.totalorder %s31, 0
      %p480 = por %p478, %p479
      %p481 = scmp.ne.s32.totalorder %s473, %s475
      %p482 = scmp.eq.s32.totalorder %s36, 1
      %p483 = por %p481, %p482
      %p484 = scmp.ne.s32.totalorder %s475, %s476
      %p485 = scmp.eq.s32.totalorder %s36, 0
      %p486 = por %p484, %p485
      %p487 = scmp.ne.s32.totalorder %s475, %s476
      %p488 = scmp.eq.s32.totalorder %s37, 1
      %p489 = por %p487, %p488
      %p491 = scmp.ne.s32.totalorder %s476, %s490
      %p492 = scmp.eq.s32.totalorder %s37, 0
      %p493 = por %p491, %p492
      %s494 = ssub.s32 %s38, %s50
      %p495 = scmp.eq.s32.totalorder %s494, 0
      %s497 = sadd.s32 %s496, 1
      %s498 = scalar_select %p495, %s496, %s497
      %p501 = pneg %p495
      %p502 = scmp.eq.s32.totalorder %s31, 1
      %p503 = por %p501, %p502
      %p504 = scmp.ne.s32.totalorder %s496, %s499
      %p505 = scmp.eq.s32.totalorder %s31, 0
      %p506 = por %p504, %p505
      %p507 = scmp.ne.s32.totalorder %s496, %s499
      %p508 = scmp.eq.s32.totalorder %s36, 1
      %p509 = por %p507, %p508
      %p510 = scmp.ne.s32.totalorder %s499, %s500
      %p511 = scmp.eq.s32.totalorder %s36, 0
      %p512 = por %p510, %p511
      %p513 = scmp.ne.s32.totalorder %s499, %s500
      %p514 = scmp.eq.s32.totalorder %s37, 1
      %p515 = por %p513, %p514
      %p517 = scmp.ne.s32.totalorder %s500, %s516
      %p518 = scmp.eq.s32.totalorder %s37, 0
      %p519 = por %p517, %p518
      %p520 = scmp.le.s32.totalorder 1, %s31
      %p521 = scmp.lt.s32.totalorder %s31, 3
      %p522 = pnand %p520, %p521
      %p523 = pneg %p522
      // Predicated region
      $region9: #{tpu_custom_call.1} parent=5 // pred_check
        _
      $region10: #{tpu_custom_call.1} parent=5 // pred_check_branch
        %525 = sbr.rel (%p522) target = $region12
      $region11: #{tpu_custom_call.1} parent=5 // pred_region
        %s526 = ssub.s32 %s31, 1
        // Predicated region
        $region13: #{tpu_custom_call.1} parent=11 // pred_check
          %p527 = pneg %p69
        $region14: #{tpu_custom_call.1} parent=11 // pred_check_branch
          %529 = sbr.rel (%p527) target = $region16
        $region15: #{tpu_custom_call.1} parent=11 // pred_region
          %s530 = smul.u32 8, %s40
          %p531 = scmp.lt.s32.totalorder %s530, 7
          %s532 = scalar_select %p531, %s530, 7
          %s533 = smul.addr %s532, 2
          %s534 = smul.addr %s533, 8
          %s535 = scalar_lea.vmem %s0, %s534
          %s536 = smul.u32 8, %s40
        $region16: #{tpu_custom_call.1} parent=11 // pred_fallthru
          _
        // Predicated region
        $region17: #{tpu_custom_call.1} parent=11 // pred_check
          %p537 = pneg %p90
        $region18: #{tpu_custom_call.1} parent=11 // pred_check_branch
          %539 = sbr.rel (%p537) target = $region20
        $region19: #{tpu_custom_call.1} parent=11 // pred_region
          _
        $region20: #{tpu_custom_call.1} parent=11 // pred_fallthru
          _
        // Predicated region
        $region21: #{tpu_custom_call.1} parent=11 // pred_check
          %p540 = pneg %p111
        $region22: #{tpu_custom_call.1} parent=11 // pred_check_branch
          %542 = sbr.rel (%p540) target = $region24
        $region23: #{tpu_custom_call.1} parent=11 // pred_region
          _
        $region24: #{tpu_custom_call.1} parent=11 // pred_fallthru
          _
        // Predicated region
        $region25: #{tpu_custom_call.1} parent=11 // pred_check
          %p543 = pneg %p132
        $region26: #{tpu_custom_call.1} parent=11 // pred_check_branch
          %545 = sbr.rel (%p543) target = $region28
        $region27: #{tpu_custom_call.1} parent=11 // pred_region
          _
        $region28: #{tpu_custom_call.1} parent=11 // pred_fallthru
          _
        // Predicated region
        $region29: #{tpu_custom_call.1} parent=11 // pred_check
          %p546 = pneg %p465
        $region30: #{tpu_custom_call.1} parent=11 // pred_check_branch
          %548 = sbr.rel (%p546) target = $region32
        $region31: #{tpu_custom_call.1} parent=11 // pred_region
          _
        $region32: #{tpu_custom_call.1} parent=11 // pred_fallthru
          _
        // Predicated region
        $region33: #{tpu_custom_call.1} parent=11 // pred_check
          %p549 = pneg %p486
        $region34: #{tpu_custom_call.1} parent=11 // pred_check_branch
          %551 = sbr.rel (%p549) target = $region36
        $region35: #{tpu_custom_call.1} parent=11 // pred_region
          _
        $region36: #{tpu_custom_call.1} parent=11 // pred_fallthru
          _
      $region12: #{tpu_custom_call.1} parent=5 // pred_fallthru
        _
      %p552 = scmp.lt.s32.totalorder %s31, 2
      // Predicated region
      $region37: #{tpu_custom_call.1} parent=5 // pred_check
        %p553 = pneg %p552
      $region38: #{tpu_custom_call.1} parent=5 // pred_check_branch
        %555 = sbr.rel (%p553) target = $region40
      $region39: #{tpu_custom_call.1} parent=5 // pred_region
        // Predicated region
        $region41: #{tpu_custom_call.1} parent=39 // pred_check
          %p556 = pneg %p152
        $region42: #{tpu_custom_call.1} parent=39 // pred_check_branch
          %558 = sbr.rel (%p556) target = $region44
        $region43: #{tpu_custom_call.1} parent=39 // pred_region
          %p559 = scmp.lt.s32.totalorder %s39, 1
          %s560 = scalar_select %p559, %s39, 1
          %s561 = smul.addr %s560, 4
          %s562 = smul.addr %s561, 8
          %s563 = scalar_lea.vmem %s4, %s562
        $region44: #{tpu_custom_call.1} parent=39 // pred_fallthru
          _
        // Predicated region
        $region45: #{tpu_custom_call.1} parent=39 // pred_check
          %p564 = pneg %p178
        $region46: #{tpu_custom_call.1} parent=39 // pred_check_branch
          %566 = sbr.rel (%p564) target = $region48
        $region47: #{tpu_custom_call.1} parent=39 // pred_region
          %p567 = scmp.lt.s32.totalorder %s39, 1
          %s568 = scalar_select %p567, %s39, 1
          %s569 = scalar_lea.vmem %s5, %s568
        $region48: #{tpu_custom_call.1} parent=39 // pred_fallthru
          _
        // Predicated region
        $region49: #{tpu_custom_call.1} parent=39 // pred_check
          %p570 = pneg %p204
        $region50: #{tpu_custom_call.1} parent=39 // pred_check_branch
          %572 = sbr.rel (%p570) target = $region52
        $region51: #{tpu_custom_call.1} parent=39 // pred_region
          %s573 = sand.u32 %s194, 1
          %s574 = scalar_lea.sflag [#allocation4], %s573
          %s575 = sand.u32 %s194, 1
          %s576 = smul.addr %s575, 32
          %s577 = scalar_lea.vmem [#allocation3], %s576
          %579 = vsyncadd %s574, 0
          %s580 = smul.addr %s39, 4
          %s581 = smul.addr %s580, 8
          %s582 = scalar_lea.hbm %s6, %s581
          %s583 = sshll.u32 %s582, 4
          %s584 = int_to_ptr.hbm [resolvable:$true] %s583
          %s585 = sshll.u32 %s577, 4
          %s586 = int_to_ptr.vmem [resolvable:$true] %s585
          %591 = dma.hbm_to_vmem [thread:$0]  %s584, 512, %s586, %s574, 128, 128, 8
        $region52: #{tpu_custom_call.1} parent=39 // pred_fallthru
          _
        // Predicated region
        $region53: #{tpu_custom_call.1} parent=39 // pred_check
          %p592 = pneg %p230
        $region54: #{tpu_custom_call.1} parent=39 // pred_check_branch
          %594 = sbr.rel (%p592) target = $region56
        $region55: #{tpu_custom_call.1} parent=39 // pred_region
          %p595 = scmp.lt.s32.totalorder %s39, 1
          %s596 = scalar_select %p595, %s39, 1
          %s597 = scalar_lea.vmem %s7, %s596
        $region56: #{tpu_custom_call.1} parent=39 // pred_fallthru
          _
        // Predicated region
        $region57: #{tpu_custom_call.1} parent=39 // pred_check
          %p598 = pneg %p256
        $region58: #{tpu_custom_call.1} parent=39 // pred_check_branch
          %600 = sbr.rel (%p598) target = $region60
        $region59: #{tpu_custom_call.1} parent=39 // pred_region
          %p601 = scmp.lt.s32.totalorder %s39, 1
          %s602 = scalar_select %p601, %s39, 1
          %s603 = scalar_lea.vmem %s8, %s602
        $region60: #{tpu_custom_call.1} parent=39 // pred_fallthru
          _
        // Predicated region
        $region61: #{tpu_custom_call.1} parent=39 // pred_check
          %p604 = pneg %p282
        $region62: #{tpu_custom_call.1} parent=39 // pred_check_branch
          %606 = sbr.rel (%p604) target = $region64
        $region63: #{tpu_custom_call.1} parent=39 // pred_region
          %p607 = scmp.lt.s32.totalorder %s39, 1
          %s608 = scalar_select %p607, %s39, 1
          %s609 = scalar_lea.vmem %s9, %s608
        $region64: #{tpu_custom_call.1} parent=39 // pred_fallthru
          _
        // Predicated region
        $region65: #{tpu_custom_call.1} parent=39 // pred_check
          %p610 = pneg %p308
        $region66: #{tpu_custom_call.1} parent=39 // pred_check_branch
          %612 = sbr.rel (%p610) target = $region68
        $region67: #{tpu_custom_call.1} parent=39 // pred_region
          %s613 = sand.u32 %s298, 1
          %s614 = scalar_lea.sflag [#allocation7], %s613
          %s615 = sand.u32 %s298, 1
          %s616 = smul.addr %s615, 32
          %s617 = scalar_lea.vmem [#allocation6], %s616
          %619 = vsyncadd %s614, 0
          %s620 = smul.addr %s39, 4
          %s621 = smul.addr %s620, 8
          %s622 = scalar_lea.hbm %s10, %s621
          %s623 = sshll.u32 %s622, 4
          %s624 = int_to_ptr.hbm [resolvable:$true] %s623
          %s625 = sshll.u32 %s617, 4
          %s626 = int_to_ptr.vmem [resolvable:$true] %s625
          %631 = dma.hbm_to_vmem [thread:$0]  %s624, 512, %s626, %s614, 128, 128, 8
        $region68: #{tpu_custom_call.1} parent=39 // pred_fallthru
          _
        // Predicated region
        $region69: #{tpu_custom_call.1} parent=39 // pred_check
          %p632 = pneg %p334
        $region70: #{tpu_custom_call.1} parent=39 // pred_check_branch
          %634 = sbr.rel (%p632) target = $region72
        $region71: #{tpu_custom_call.1} parent=39 // pred_region
          %p635 = scmp.lt.s32.totalorder %s39, 1
          %s636 = scalar_select %p635, %s39, 1
          %s637 = scalar_lea.vmem %s11, %s636
        $region72: #{tpu_custom_call.1} parent=39 // pred_fallthru
          _
        // Predicated region
        $region73: #{tpu_custom_call.1} parent=39 // pred_check
          %p638 = pneg %p360
        $region74: #{tpu_custom_call.1} parent=39 // pred_check_branch
          %640 = sbr.rel (%p638) target = $region76
        $region75: #{tpu_custom_call.1} parent=39 // pred_region
          %p641 = scmp.lt.s32.totalorder %s39, 1
          %s642 = scalar_select %p641, %s39, 1
          %s643 = smul.addr %s642, 8
          %s644 = smul.addr %s643, 8
          %s645 = scalar_lea.vmem %s12, %s644
        $region76: #{tpu_custom_call.1} parent=39 // pred_fallthru
          _
        // Predicated region
        $region77: #{tpu_custom_call.1} parent=39 // pred_check
          %p646 = pneg %p386
        $region78: #{tpu_custom_call.1} parent=39 // pred_check_branch
          %648 = sbr.rel (%p646) target = $region80
        $region79: #{tpu_custom_call.1} parent=39 // pred_region
          %p649 = scmp.lt.s32.totalorder %s39, 1
          %s650 = scalar_select %p649, %s39, 1
          %s651 = scalar_lea.vmem %s13, %s650
        $region80: #{tpu_custom_call.1} parent=39 // pred_fallthru
          _
        // Predicated region
        $region81: #{tpu_custom_call.1} parent=39 // pred_check
          %p652 = pneg %p412
        $region82: #{tpu_custom_call.1} parent=39 // pred_check_branch
          %654 = sbr.rel (%p652) target = $region84
        $region83: #{tpu_custom_call.1} parent=39 // pred_region
          %p655 = scmp.lt.s32.totalorder %s39, 1
          %s656 = scalar_select %p655, %s39, 1
          %s657 = scalar_lea.vmem %s14, %s656
        $region84: #{tpu_custom_call.1} parent=39 // pred_fallthru
          _
        // Predicated region
        $region85: #{tpu_custom_call.1} parent=39 // pred_check
          %p658 = pneg %p438
        $region86: #{tpu_custom_call.1} parent=39 // pred_check_branch
          %660 = sbr.rel (%p658) target = $region88
        $region87: #{tpu_custom_call.1} parent=39 // pred_region
          %p661 = scmp.lt.s32.totalorder %s39, 1
          %s662 = scalar_select %p661, %s39, 1
          %s663 = scalar_lea.vmem %s15, %s662
        $region88: #{tpu_custom_call.1} parent=39 // pred_fallthru
          _
      $region40: #{tpu_custom_call.1} parent=5 // pred_fallthru
        _
      %p664 = scmp.le.s32.totalorder 1, %s31
      %p665 = scmp.lt.s32.totalorder %s31, 3
      %p666 = pnand %p664, %p665
      %p667 = pneg %p666
      // Predicated region
      $region89: #{tpu_custom_call.1} parent=5 // pred_check
        _
      $region90: #{tpu_custom_call.1} parent=5 // pred_check_branch
        %669 = sbr.rel (%p666) target = $region92
      $region91: #{tpu_custom_call.1} parent=5 // pred_region
        %s670 = ssub.s32 %s31, 1
        %s671 = sand.u32 %s197, 1
        %s672 = scalar_lea.sflag [#allocation4], %s671
        %s673 = sand.u32 %s197, 1
        %s674 = smul.addr %s673, 32
        %s675 = scalar_lea.vmem [#allocation3], %s674
        // Predicated region
        $region93: #{tpu_custom_call.1} parent=91 // pred_check
          %p676 = pneg %p210
        $region94: #{tpu_custom_call.1} parent=91 // pred_check_branch
          %678 = sbr.rel (%p676) target = $region96
        $region95: #{tpu_custom_call.1} parent=91 // pred_region
          %680 = dma.done %s672, 512
        $region96: #{tpu_custom_call.1} parent=91 // pred_fallthru
          _
        %s681 = sand.u32 %s301, 1
        %s682 = scalar_lea.sflag [#allocation7], %s681
        %s683 = sand.u32 %s301, 1
        %s684 = smul.addr %s683, 32
        %s685 = scalar_lea.vmem [#allocation6], %s684
        // Predicated region
        $region97: #{tpu_custom_call.1} parent=91 // pred_check
          %p686 = pneg %p314
        $region98: #{tpu_custom_call.1} parent=91 // pred_check_branch
          %688 = sbr.rel (%p686) target = $region100
        $region99: #{tpu_custom_call.1} parent=91 // pred_region
          %690 = dma.done %s682, 512
        $region100: #{tpu_custom_call.1} parent=91 // pred_fallthru
          _
        %s691 = smul.u32 8, %s40
        %p692 = scmp.lt.s32.totalorder %s691, 7
        %s693 = scalar_select %p692, %s691, 7
        %s694 = smul.addr %s693, 2
        %s695 = smul.addr %s694, 8
        %s696 = scalar_lea.vmem %s0, %s695
        %p697 = pneg %p69
        %p698 = pneg %p66
        %p699 = pneg %p90
        %p700 = pneg %p87
        %p701 = pneg %p111
        %p702 = pneg %p108
        %p703 = pneg %p132
        %p704 = pneg %p129
        %p705 = scmp.lt.s32.totalorder %s41, 1
        %s706 = scalar_select %p705, %s41, 1
        %s707 = smul.addr %s706, 4
        %s708 = smul.addr %s707, 8
        %s709 = scalar_lea.vmem %s4, %s708
        %p710 = pneg %p158
        %p711 = pneg %p155
        %p712 = scmp.lt.s32.totalorder %s41, 1
        %s713 = scalar_select %p712, %s41, 1
        %s714 = scalar_lea.vmem %s5, %s713
        %p715 = pneg %p184
        %p716 = pneg %p181
        %s717 = sand.u32 %s197, 1
        %s718 = scalar_lea.sflag [#allocation4], %s717
        %s719 = sand.u32 %s197, 1
        %s720 = smul.addr %s719, 32
        %s721 = scalar_lea.vmem [#allocation3], %s720
        %p722 = pneg %p210
        %p723 = pneg %p207
        %p724 = scmp.lt.s32.totalorder %s41, 1
        %s725 = scalar_select %p724, %s41, 1
        %s726 = scalar_lea.vmem %s7, %s725
        %p727 = pneg %p236
        %p728 = pneg %p233
        %p729 = scmp.lt.s32.totalorder %s41, 1
        %s730 = scalar_select %p729, %s41, 1
        %s731 = scalar_lea.vmem %s8, %s730
        %p732 = pneg %p262
        %p733 = pneg %p259
        %p734 = scmp.lt.s32.totalorder %s41, 1
        %s735 = scalar_select %p734, %s41, 1
        %s736 = scalar_lea.vmem %s9, %s735
        %p737 = pneg %p288
        %p738 = pneg %p285
        %s739 = sand.u32 %s301, 1
        %s740 = scalar_lea.sflag [#allocation7], %s739
        %s741 = sand.u32 %s301, 1
        %s742 = smul.addr %s741, 32
        %s743 = scalar_lea.vmem [#allocation6], %s742
        %p744 = pneg %p314
        %p745 = pneg %p311
        %p746 = scmp.lt.s32.totalorder %s41, 1
        %s747 = scalar_select %p746, %s41, 1
        %s748 = scalar_lea.vmem %s11, %s747
        %p749 = pneg %p340
        %p750 = pneg %p337
        %p751 = scmp.lt.s32.totalorder %s41, 1
        %s752 = scalar_select %p751, %s41, 1
        %s753 = smul.addr %s752, 8
        %s754 = smul.addr %s753, 8
        %s755 = scalar_lea.vmem %s12, %s754
        %p756 = pneg %p366
        %p757 = pneg %p363
        %p758 = scmp.lt.s32.totalorder %s41, 1
        %s759 = scalar_select %p758, %s41, 1
        %s760 = scalar_lea.vmem %s13, %s759
        %p761 = pneg %p392
        %p762 = pneg %p389
        %p763 = scmp.lt.s32.totalorder %s41, 1
        %s764 = scalar_select %p763, %s41, 1
        %s765 = scalar_lea.vmem %s14, %s764
        %p766 = pneg %p418
        %p767 = pneg %p415
        %p768 = scmp.lt.s32.totalorder %s41, 1
        %s769 = scalar_select %p768, %s41, 1
        %s770 = scalar_lea.vmem %s15, %s769
        %p771 = pneg %p444
        %p772 = pneg %p441
        %p773 = pneg %p465
        %p774 = pneg %p462
        %p775 = pneg %p486
        %p776 = pneg %p483
        %p777 = pneg %p512
        %p778 = pneg %p509
        %s779 = smul.u32 8, %s40
        %p780 = scmp.lt.s32.totalorder %s779, 7
        %s781 = scalar_select %p780, %s779, 7
        %s782 = smul.addr %s781, 2
        %s783 = smul.addr %s782, 8
        %s784 = scalar_lea.vmem %s0, %s783
        %s785 = smul.u32 8, %s40
        %p786 = scmp.lt.s32.totalorder %s41, 1
        %s787 = scalar_select %p786, %s41, 1
        %s788 = smul.addr %s787, 4
        %s789 = smul.addr %s788, 8
        %s790 = scalar_lea.vmem %s4, %s789
        %p791 = scmp.lt.s32.totalorder %s41, 1
        %s792 = scalar_select %p791, %s41, 1
        %s793 = scalar_lea.vmem %s5, %s792
        %p794 = scmp.lt.s32.totalorder %s41, 1
        %s795 = scalar_select %p794, %s41, 1
        %s796 = scalar_lea.vmem %s7, %s795
        %p797 = scmp.lt.s32.totalorder %s41, 1
        %s798 = scalar_select %p797, %s41, 1
        %s799 = scalar_lea.vmem %s8, %s798
        %p800 = scmp.lt.s32.totalorder %s41, 1
        %s801 = scalar_select %p800, %s41, 1
        %s802 = scalar_lea.vmem %s9, %s801
        %p803 = scmp.lt.s32.totalorder %s41, 1
        %s804 = scalar_select %p803, %s41, 1
        %s805 = scalar_lea.vmem %s11, %s804
        %p806 = scmp.lt.s32.totalorder %s41, 1
        %s807 = scalar_select %p806, %s41, 1
        %s808 = smul.addr %s807, 8
        %s809 = smul.addr %s808, 8
        %s810 = scalar_lea.vmem %s12, %s809
        %p811 = scmp.lt.s32.totalorder %s41, 1
        %s812 = scalar_select %p811, %s41, 1
        %s813 = scalar_lea.vmem %s13, %s812
        %p814 = scmp.lt.s32.totalorder %s41, 1
        %s815 = scalar_select %p814, %s41, 1
        %s816 = scalar_lea.vmem %s14, %s815
        %p817 = scmp.lt.s32.totalorder %s41, 1
        %s818 = scalar_select %p817, %s41, 1
        %s819 = scalar_lea.vmem %s15, %s818
        %p820 = scmp.eq.s32.totalorder %s41, 0
        // Predicated region
        $region101: #{tpu_custom_call.1} parent=91 // pred_check
          %p821 = pneg %p820
        $region102: #{tpu_custom_call.1} parent=91 // pred_check_branch
          %823 = sbr.rel (%p821) target = $region104
        $region103: #{tpu_custom_call.1} parent=91 // pred_region
          %v824 = vld [vmem:[%s784] sm:$0xff]
          %v825 = vld [vmem:[%s784 + $0x8] sm:$0xff]
          %v826 = vld [vmem:[%s784 + $0x10] sm:$0xff]
          %v827 = vld [vmem:[%s784 + $0x18] sm:$0xff]
          %v828 = vld [vmem:[%s784 + $0x20] sm:$0xff]
          %v829 = vld [vmem:[%s784 + $0x28] sm:$0xff]
          %v830 = vld [vmem:[%s784 + $0x30] sm:$0xff]
          %v831 = vld [vmem:[%s784 + $0x38] sm:$0xff]
          %v832 = vld [vmem:[%s784 + $0x40] sm:$0xff]
          %v833 = vld [vmem:[%s784 + $0x48] sm:$0xff]
          %v834 = vld [vmem:[%s784 + $0x50] sm:$0xff]
          %v835 = vld [vmem:[%s784 + $0x58] sm:$0xff]
          %v836 = vld [vmem:[%s784 + $0x60] sm:$0xff]
          %v837 = vld [vmem:[%s784 + $0x68] sm:$0xff]
          %v838 = vld [vmem:[%s784 + $0x70] sm:$0xff]
          %v839 = vld [vmem:[%s784 + $0x78] sm:$0xff]
          %v840 = vld [vmem:[%s2] sm:$0xff]
          %v841 = vld [vmem:[%s2 + $0x8] sm:$0xff]
          %v842 = vld [vmem:[%s3] sm:$0x1]
          %v844 = vperm.slane %v842, 0
          %vm846 = vcmask 130048
          %v848 = vsel %vm846, %v824, 0
          %v851 = vsel %vm846, %v825, 0
          %v854 = vsel %vm846, %v826, 0
          %v857 = vsel %vm846, %v827, 0
          %v860 = vsel %vm846, %v828, 0
          %v863 = vsel %vm846, %v829, 0
          %v866 = vsel %vm846, %v830, 0
          %v869 = vsel %vm846, %v831, 0
          %v872 = vsel %vm846, %v832, 0
          %v875 = vsel %vm846, %v833, 0
          %v878 = vsel %vm846, %v834, 0
          %v881 = vsel %vm846, %v835, 0
          %v884 = vsel %vm846, %v836, 0
          %v887 = vsel %vm846, %v837, 0
          %v890 = vsel %vm846, %v838, 0
          %v893 = vsel %vm846, %v839, 0
          %895 = vmatpush.msra.mxu0 0.0
          %896 = vmatpush.msra.mxu0 0.0
          %897 = vmatpush.msra.mxu0 0.0
          %898 = vmatpush.msra.mxu0 0.0
          %899 = vmatpush.msra.mxu0 0.0
          %900 = vmatpush.msra.mxu0 0.0
          %901 = vmatpush.msra.mxu0 0.0
          %902 = vmatpush.msra.mxu0 0.0
          %903 = vmatpush.msra.mxu0 0.0
          %904 = vmatpush.msra.mxu0 0.0
          %905 = vmatpush.msra.mxu0 0.0
          %906 = vmatpush.msra.mxu0 0.0
          %907 = vmatpush.msra.mxu0 0.0
          %908 = vmatpush.msra.mxu0 0.0
          %909 = vmatpush.msra.mxu0 %v841
          %910 = vmatpush.msra.mxu0 %v840
          %911 = vmatmul.f32.gmra.mxu0 %v848
          %v912 = vpop.f32.mrf.mxu0
          %v913 = vadd.f32 %v844, %v912
          %914 = vmatmul.f32.gmra.mxu0 %v851
          %v915 = vpop.f32.mrf.mxu0
          %v916 = vadd.f32 %v844, %v915
          %917 = vmatmul.f32.gmra.mxu0 %v854
          %v918 = vpop.f32.mrf.mxu0
          %v919 = vadd.f32 %v844, %v918
          %920 = vmatmul.f32.gmra.mxu0 %v857
          %v921 = vpop.f32.mrf.mxu0
          %v922 = vadd.f32 %v844, %v921
          %923 = vmatmul.f32.gmra.mxu0 %v860
          %v924 = vpop.f32.mrf.mxu0
          %v925 = vadd.f32 %v844, %v924
          %926 = vmatmul.f32.gmra.mxu0 %v863
          %v927 = vpop.f32.mrf.mxu0
          %v928 = vadd.f32 %v844, %v927
          %929 = vmatmul.f32.gmra.mxu0 %v866
          %v930 = vpop.f32.mrf.mxu0
          %v931 = vadd.f32 %v844, %v930
          %932 = vmatmul.f32.gmra.mxu0 %v869
          %v933 = vpop.f32.mrf.mxu0
          %v934 = vadd.f32 %v844, %v933
          %935 = vmatmul.f32.gmra.mxu0 %v872
          %v936 = vpop.f32.mrf.mxu0
          %v937 = vadd.f32 %v844, %v936
          %938 = vmatmul.f32.gmra.mxu0 %v875
          %v939 = vpop.f32.mrf.mxu0
          %v940 = vadd.f32 %v844, %v939
          %941 = vmatmul.f32.gmra.mxu0 %v878
          %v942 = vpop.f32.mrf.mxu0
          %v943 = vadd.f32 %v844, %v942
          %944 = vmatmul.f32.gmra.mxu0 %v881
          %v945 = vpop.f32.mrf.mxu0
          %v946 = vadd.f32 %v844, %v945
          %947 = vmatmul.f32.gmra.mxu0 %v884
          %v948 = vpop.f32.mrf.mxu0
          %v949 = vadd.f32 %v844, %v948
          %950 = vmatmul.f32.gmra.mxu0 %v887
          %v951 = vpop.f32.mrf.mxu0
          %v952 = vadd.f32 %v844, %v951
          %953 = vmatmul.f32.gmra.mxu0 %v890
          %v954 = vpop.f32.mrf.mxu0
          %v955 = vadd.f32 %v844, %v954
          %956 = vmatmul.f32.gmra.mxu0 %v893
          %v957 = vpop.f32.mrf.mxu0
          %v958 = vadd.f32 %v844, %v957
          %959 = vdwg.mxu0
          %v960 = vlaneseq
          %v961 = vshrl.u32 %v960, 7
          %v962 = vadd.s32 %v961, 8
          %v963 = vld [vmem:[%s1] sm:$0x1]
          %v965 = vperm.slane %v963, 0
          %vm967 = vcmp.eq.s32.totalorder %v961, 0
          %vm968 = vcmp.eq.s32.totalorder %v962, 0
          %v969 = vsel %vm967, %v965, %v913
          %v970 = vsel %vm968, %v965, %v916
          %v971 = vsel %vm967, %v965, %v919
          %v972 = vsel %vm968, %v965, %v922
          %v973 = vsel %vm967, %v965, %v925
          %v974 = vsel %vm968, %v965, %v928
          %v975 = vsel %vm967, %v965, %v931
          %v976 = vsel %vm968, %v965, %v934
          %v977 = vsel %vm967, %v965, %v937
          %v978 = vsel %vm968, %v965, %v940
          %v979 = vsel %vm967, %v965, %v943
          %v980 = vsel %vm968, %v965, %v946
          %v981 = vsel %vm967, %v965, %v949
          %v982 = vsel %vm968, %v965, %v952
          %v983 = vsel %vm967, %v965, %v955
          %v984 = vsel %vm968, %v965, %v958
          %v985 = vmul.f32 %v969, 5.656854
          %v986 = vmul.f32 %v970, 5.656854
          %v987 = vmul.f32 %v971, 5.656854
          %v988 = vmul.f32 %v972, 5.656854
          %v989 = vmul.f32 %v973, 5.656854
          %v990 = vmul.f32 %v974, 5.656854
          %v991 = vmul.f32 %v975, 5.656854
          %v992 = vmul.f32 %v976, 5.656854
          %v993 = vmul.f32 %v977, 5.656854
          %v994 = vmul.f32 %v978, 5.656854
          %v995 = vmul.f32 %v979, 5.656854
          %v996 = vmul.f32 %v980, 5.656854
          %v997 = vmul.f32 %v981, 5.656854
          %v998 = vmul.f32 %v982, 5.656854
          %v999 = vmul.f32 %v983, 5.656854
          %v1000 = vmul.f32 %v984, 5.656854
          %vm1001 = vcmask 261120
          %1002 = vst.msk [vmem:[#allocation2] sm:$0xff] %vm1001, %v985
          %1003 = vst.msk [vmem:[#allocation2 + $0x8] sm:$0xff] %vm1001, %v986
          %1004 = vst.msk [vmem:[#allocation2 + $0x10] sm:$0xff] %vm1001, %v987
          %1005 = vst.msk [vmem:[#allocation2 + $0x18] sm:$0xff] %vm1001, %v988
          %1006 = vst.msk [vmem:[#allocation2 + $0x20] sm:$0xff] %vm1001, %v989
          %1007 = vst.msk [vmem:[#allocation2 + $0x28] sm:$0xff] %vm1001, %v990
          %1008 = vst.msk [vmem:[#allocation2 + $0x30] sm:$0xff] %vm1001, %v991
          %1009 = vst.msk [vmem:[#allocation2 + $0x38] sm:$0xff] %vm1001, %v992
          %1010 = vst.msk [vmem:[#allocation2 + $0x40] sm:$0xff] %vm1001, %v993
          %1011 = vst.msk [vmem:[#allocation2 + $0x48] sm:$0xff] %vm1001, %v994
          %1012 = vst.msk [vmem:[#allocation2 + $0x50] sm:$0xff] %vm1001, %v995
          %1013 = vst.msk [vmem:[#allocation2 + $0x58] sm:$0xff] %vm1001, %v996
          %1014 = vst.msk [vmem:[#allocation2 + $0x60] sm:$0xff] %vm1001, %v997
          %1015 = vst.msk [vmem:[#allocation2 + $0x68] sm:$0xff] %vm1001, %v998
          %1016 = vst.msk [vmem:[#allocation2 + $0x70] sm:$0xff] %vm1001, %v999
          %1017 = vst.msk [vmem:[#allocation2 + $0x78] sm:$0xff] %vm1001, %v1000
        $region104: #{tpu_custom_call.1} parent=91 // pred_fallthru
          _
        %v1018 = vld [vmem:[#allocation2] sm:$0xff]
        %v1019 = vld [vmem:[#allocation2 + $0x8] sm:$0xff]
        %v1020 = vld [vmem:[#allocation2 + $0x10] sm:$0xff]
        %v1021 = vld [vmem:[#allocation2 + $0x18] sm:$0xff]
        %v1022 = vld [vmem:[#allocation2 + $0x20] sm:$0xff]
        %v1023 = vld [vmem:[#allocation2 + $0x28] sm:$0xff]
        %v1024 = vld [vmem:[#allocation2 + $0x30] sm:$0xff]
        %v1025 = vld [vmem:[#allocation2 + $0x38] sm:$0xff]
        %v1026 = vld [vmem:[#allocation2 + $0x40] sm:$0xff]
        %v1027 = vld [vmem:[#allocation2 + $0x48] sm:$0xff]
        %v1028 = vld [vmem:[#allocation2 + $0x50] sm:$0xff]
        %v1029 = vld [vmem:[#allocation2 + $0x58] sm:$0xff]
        %v1030 = vld [vmem:[#allocation2 + $0x60] sm:$0xff]
        %v1031 = vld [vmem:[#allocation2 + $0x68] sm:$0xff]
        %v1032 = vld [vmem:[#allocation2 + $0x70] sm:$0xff]
        %v1033 = vld [vmem:[#allocation2 + $0x78] sm:$0xff]
        %v1034 = vld [vmem:[%s790] sm:$0xff]
        %v1035 = vld [vmem:[%s790 + $0x8] sm:$0xff]
        %v1036 = vld [vmem:[%s790 + $0x10] sm:$0xff]
        %v1037 = vld [vmem:[%s790 + $0x18] sm:$0xff]
        %v1038 = vld [vmem:[%s793] sm:$0x1]
        %v1040 = vperm.slane %v1038, 0
        %vm1042 = vcmask 261120
        %v1044 = vsel %vm1042, %v1018, 0
        %v1047 = vsel %vm1042, %v1019, 0
        %v1050 = vsel %vm1042, %v1020, 0
        %v1053 = vsel %vm1042, %v1021, 0
        %v1056 = vsel %vm1042, %v1022, 0
        %v1059 = vsel %vm1042, %v1023, 0
        %v1062 = vsel %vm1042, %v1024, 0
        %v1065 = vsel %vm1042, %v1025, 0
        %v1068 = vsel %vm1042, %v1026, 0
        %v1071 = vsel %vm1042, %v1027, 0
        %v1074 = vsel %vm1042, %v1028, 0
        %v1077 = vsel %vm1042, %v1029, 0
        %v1080 = vsel %vm1042, %v1030, 0
        %v1083 = vsel %vm1042, %v1031, 0
        %v1086 = vsel %vm1042, %v1032, 0
        %v1089 = vsel %vm1042, %v1033, 0
        %1091 = vmatpush.msra.mxu0 0.0
        %1092 = vmatpush.msra.mxu0 0.0
        %1093 = vmatpush.msra.mxu0 0.0
        %1094 = vmatpush.msra.mxu0 0.0
        %1095 = vmatpush.msra.mxu0 0.0
        %1096 = vmatpush.msra.mxu0 0.0
        %1097 = vmatpush.msra.mxu0 0.0
        %1098 = vmatpush.msra.mxu0 0.0
        %1099 = vmatpush.msra.mxu0 0.0
        %1100 = vmatpush.msra.mxu0 0.0
        %1101 = vmatpush.msra.mxu0 0.0
        %1102 = vmatpush.msra.mxu0 0.0
        %1103 = vmatpush.msra.mxu0 %v1037
        %1104 = vmatpush.msra.mxu0 %v1036
        %1105 = vmatpush.msra.mxu0 %v1035
        %1106 = vmatpush.msra.mxu0 %v1034
        %1107 = vmatmul.f32.gmra.mxu0 %v1044
        %v1108 = vpop.f32.mrf.mxu0
        %v1109 = vadd.f32 %v1040, %v1108
        %1110 = vmatmul.f32.gmra.mxu0 %v1047
        %v1111 = vpop.f32.mrf.mxu0
        %v1112 = vadd.f32 %v1040, %v1111
        %1113 = vmatmul.f32.gmra.mxu0 %v1050
        %v1114 = vpop.f32.mrf.mxu0
        %v1115 = vadd.f32 %v1040, %v1114
        %1116 = vmatmul.f32.gmra.mxu0 %v1053
        %v1117 = vpop.f32.mrf.mxu0
        %v1118 = vadd.f32 %v1040, %v1117
        %1119 = vmatmul.f32.gmra.mxu0 %v1056
        %v1120 = vpop.f32.mrf.mxu0
        %v1121 = vadd.f32 %v1040, %v1120
        %1122 = vmatmul.f32.gmra.mxu0 %v1059
        %v1123 = vpop.f32.mrf.mxu0
        %v1124 = vadd.f32 %v1040, %v1123
        %1125 = vmatmul.f32.gmra.mxu0 %v1062
        %v1126 = vpop.f32.mrf.mxu0
        %v1127 = vadd.f32 %v1040, %v1126
        %1128 = vmatmul.f32.gmra.mxu0 %v1065
        %v1129 = vpop.f32.mrf.mxu0
        %v1130 = vadd.f32 %v1040, %v1129
        %1131 = vmatmul.f32.gmra.mxu0 %v1068
        %v1132 = vpop.f32.mrf.mxu0
        %v1133 = vadd.f32 %v1040, %v1132
        %1134 = vmatmul.f32.gmra.mxu0 %v1071
        %v1135 = vpop.f32.mrf.mxu0
        %v1136 = vadd.f32 %v1040, %v1135
        %1137 = vmatmul.f32.gmra.mxu0 %v1074
        %v1138 = vpop.f32.mrf.mxu0
        %v1139 = vadd.f32 %v1040, %v1138
        %1140 = vmatmul.f32.gmra.mxu0 %v1077
        %v1141 = vpop.f32.mrf.mxu0
        %v1142 = vadd.f32 %v1040, %v1141
        %1143 = vmatmul.f32.gmra.mxu0 %v1080
        %v1144 = vpop.f32.mrf.mxu0
        %v1145 = vadd.f32 %v1040, %v1144
        %1146 = vmatmul.f32.gmra.mxu0 %v1083
        %v1147 = vpop.f32.mrf.mxu0
        %v1148 = vadd.f32 %v1040, %v1147
        %1149 = vmatmul.f32.gmra.mxu0 %v1086
        %v1150 = vpop.f32.mrf.mxu0
        %v1151 = vadd.f32 %v1040, %v1150
        %1152 = vmatmul.f32.gmra.mxu0 %v1089
        %v1153 = vpop.f32.mrf.mxu0
        %v1154 = vadd.f32 %v1040, %v1153
        %1155 = vdwg.mxu0
        %v1156 = vlaneseq
        %v1157 = vand.u32 %v1156, 127
        %vm1158 = vcmp.lt.s32.totalorder %v1157, 9
        %v1159 = vsel %vm1158, 0.0, -1e+30
        %v1160 = vld [vmem:[%s675] sm:$0xff]
        %v1161 = vld [vmem:[%s675 + $0x8] sm:$0xff]
        %v1162 = vld [vmem:[%s675 + $0x10] sm:$0xff]
        %v1163 = vld [vmem:[%s675 + $0x18] sm:$0xff]
        %1166 = vrot.lane.b32.xlu0 %v1109, 96
        %v1167 = vpop.permute.xlu0 %1166
        %1168 = vrot.lane.b32.xlu0 %v1112, 96
        %v1169 = vpop.permute.xlu0 %1168
        %vm1170 = vcmask 64512
        %v1171 = vsel %vm1170, %v1109, 0
        %v1173 = vsel %vm1170, %v1112, 0
        %v1175 = vsel %vm1170, %v1167, 0
        %v1177 = vsel %vm1170, %v1169, 0
        %1179 = vmatpush.xpose.msra.mxu0 0.0
        %1180 = vmatpush.xpose.msra.mxu0 0.0
        %1181 = vmatpush.xpose.msra.mxu0 0.0
        %1182 = vmatpush.xpose.msra.mxu0 0.0
        %1183 = vmatpush.xpose.msra.mxu0 0.0
        %1184 = vmatpush.xpose.msra.mxu0 0.0
        %1185 = vmatpush.xpose.msra.mxu0 0.0
        %1186 = vmatpush.xpose.msra.mxu0 0.0
        %1187 = vmatpush.xpose.msra.mxu0 0.0
        %1188 = vmatpush.xpose.msra.mxu0 0.0
        %1189 = vmatpush.xpose.msra.mxu0 0.0
        %1190 = vmatpush.xpose.msra.mxu0 0.0
        %1191 = vmatpush.xpose.msra.mxu0 0.0
        %1192 = vmatpush.xpose.msra.mxu0 0.0
        %1193 = vmatpush.xpose.msra.mxu0 %v1177
        %1194 = vmatpush.xpose.msra.mxu0 %v1175
        %1195 = vmatmul.f32.gmra.mxu0 %v1171
        %v1196 = vpop.f32.mrf.mxu0
        %v1197 = vadd.f32 0.0, %v1196
        %1198 = vmatmul.f32.gmra.mxu0 %v1173
        %v1199 = vpop.f32.mrf.mxu0
        %v1200 = vadd.f32 0.0, %v1199
        %1201 = vdwg.mxu0
        %1204 = vrot.lane.b32.xlu0 %v1115, 96
        %v1205 = vpop.permute.xlu0 %1204
        %1206 = vrot.lane.b32.xlu0 %v1118, 96
        %v1207 = vpop.permute.xlu0 %1206
        %v1208 = vsel %vm1170, %v1115, 0
        %v1210 = vsel %vm1170, %v1118, 0
        %v1212 = vsel %vm1170, %v1205, 0
        %v1214 = vsel %vm1170, %v1207, 0
        %1216 = vmatpush.xpose.msra.mxu0 0.0
        %1217 = vmatpush.xpose.msra.mxu0 0.0
        %1218 = vmatpush.xpose.msra.mxu0 0.0
        %1219 = vmatpush.xpose.msra.mxu0 0.0
        %1220 = vmatpush.xpose.msra.mxu0 0.0
        %1221 = vmatpush.xpose.msra.mxu0 0.0
        %1222 = vmatpush.xpose.msra.mxu0 0.0
        %1223 = vmatpush.xpose.msra.mxu0 0.0
        %1224 = vmatpush.xpose.msra.mxu0 0.0
        %1225 = vmatpush.xpose.msra.mxu0 0.0
        %1226 = vmatpush.xpose.msra.mxu0 0.0
        %1227 = vmatpush.xpose.msra.mxu0 0.0
        %1228 = vmatpush.xpose.msra.mxu0 0.0
        %1229 = vmatpush.xpose.msra.mxu0 0.0
        %1230 = vmatpush.xpose.msra.mxu0 %v1214
        %1231 = vmatpush.xpose.msra.mxu0 %v1212
        %1232 = vmatmul.f32.gmra.mxu0 %v1208
        %v1233 = vpop.f32.mrf.mxu0
        %v1234 = vadd.f32 0.0, %v1233
        %1235 = vmatmul.f32.gmra.mxu0 %v1210
        %v1236 = vpop.f32.mrf.mxu0
        %v1237 = vadd.f32 0.0, %v1236
        %1238 = vdwg.mxu0
        %1241 = vrot.lane.b32.xlu0 %v1121, 96
        %v1242 = vpop.permute.xlu0 %1241
        %1243 = vrot.lane.b32.xlu0 %v1124, 96
        %v1244 = vpop.permute.xlu0 %1243
        %v1245 = vsel %vm1170, %v1121, 0
        %v1247 = vsel %vm1170, %v1124, 0
        %v1249 = vsel %vm1170, %v1242, 0
        %v1251 = vsel %vm1170, %v1244, 0
        %1253 = vmatpush.xpose.msra.mxu0 0.0
        %1254 = vmatpush.xpose.msra.mxu0 0.0
        %1255 = vmatpush.xpose.msra.mxu0 0.0
        %1256 = vmatpush.xpose.msra.mxu0 0.0
        %1257 = vmatpush.xpose.msra.mxu0 0.0
        %1258 = vmatpush.xpose.msra.mxu0 0.0
        %1259 = vmatpush.xpose.msra.mxu0 0.0
        %1260 = vmatpush.xpose.msra.mxu0 0.0
        %1261 = vmatpush.xpose.msra.mxu0 0.0
        %1262 = vmatpush.xpose.msra.mxu0 0.0
        %1263 = vmatpush.xpose.msra.mxu0 0.0
        %1264 = vmatpush.xpose.msra.mxu0 0.0
        %1265 = vmatpush.xpose.msra.mxu0 0.0
        %1266 = vmatpush.xpose.msra.mxu0 0.0
        %1267 = vmatpush.xpose.msra.mxu0 %v1251
        %1268 = vmatpush.xpose.msra.mxu0 %v1249
        %1269 = vmatmul.f32.gmra.mxu0 %v1245
        %v1270 = vpop.f32.mrf.mxu0
        %v1271 = vadd.f32 0.0, %v1270
        %1272 = vmatmul.f32.gmra.mxu0 %v1247
        %v1273 = vpop.f32.mrf.mxu0
        %v1274 = vadd.f32 0.0, %v1273
        %1275 = vdwg.mxu0
        %1278 = vrot.lane.b32.xlu0 %v1127, 96
        %v1279 = vpop.permute.xlu0 %1278
        %1280 = vrot.lane.b32.xlu0 %v1130, 96
        %v1281 = vpop.permute.xlu0 %1280
        %v1282 = vsel %vm1170, %v1127, 0
        %v1284 = vsel %vm1170, %v1130, 0
        %v1286 = vsel %vm1170, %v1279, 0
        %v1288 = vsel %vm1170, %v1281, 0
        %1290 = vmatpush.xpose.msra.mxu0 0.0
        %1291 = vmatpush.xpose.msra.mxu0 0.0
        %1292 = vmatpush.xpose.msra.mxu0 0.0
        %1293 = vmatpush.xpose.msra.mxu0 0.0
        %1294 = vmatpush.xpose.msra.mxu0 0.0
        %1295 = vmatpush.xpose.msra.mxu0 0.0
        %1296 = vmatpush.xpose.msra.mxu0 0.0
        %1297 = vmatpush.xpose.msra.mxu0 0.0
        %1298 = vmatpush.xpose.msra.mxu0 0.0
        %1299 = vmatpush.xpose.msra.mxu0 0.0
        %1300 = vmatpush.xpose.msra.mxu0 0.0
        %1301 = vmatpush.xpose.msra.mxu0 0.0
        %1302 = vmatpush.xpose.msra.mxu0 0.0
        %1303 = vmatpush.xpose.msra.mxu0 0.0
        %1304 = vmatpush.xpose.msra.mxu0 %v1288
        %1305 = vmatpush.xpose.msra.mxu0 %v1286
        %1306 = vmatmul.f32.gmra.mxu0 %v1282
        %v1307 = vpop.f32.mrf.mxu0
        %v1308 = vadd.f32 0.0, %v1307
        %1309 = vmatmul.f32.gmra.mxu0 %v1284
        %v1310 = vpop.f32.mrf.mxu0
        %v1311 = vadd.f32 0.0, %v1310
        %1312 = vdwg.mxu0
        %1315 = vrot.lane.b32.xlu0 %v1133, 96
        %v1316 = vpop.permute.xlu0 %1315
        %1317 = vrot.lane.b32.xlu0 %v1136, 96
        %v1318 = vpop.permute.xlu0 %1317
        %v1319 = vsel %vm1170, %v1133, 0
        %v1321 = vsel %vm1170, %v1136, 0
        %v1323 = vsel %vm1170, %v1316, 0
        %v1325 = vsel %vm1170, %v1318, 0
        %1327 = vmatpush.xpose.msra.mxu0 0.0
        %1328 = vmatpush.xpose.msra.mxu0 0.0
        %1329 = vmatpush.xpose.msra.mxu0 0.0
        %1330 = vmatpush.xpose.msra.mxu0 0.0
        %1331 = vmatpush.xpose.msra.mxu0 0.0
        %1332 = vmatpush.xpose.msra.mxu0 0.0
        %1333 = vmatpush.xpose.msra.mxu0 0.0
        %1334 = vmatpush.xpose.msra.mxu0 0.0
        %1335 = vmatpush.xpose.msra.mxu0 0.0
        %1336 = vmatpush.xpose.msra.mxu0 0.0
        %1337 = vmatpush.xpose.msra.mxu0 0.0
        %1338 = vmatpush.xpose.msra.mxu0 0.0
        %1339 = vmatpush.xpose.msra.mxu0 0.0
        %1340 = vmatpush.xpose.msra.mxu0 0.0
        %1341 = vmatpush.xpose.msra.mxu0 %v1325
        %1342 = vmatpush.xpose.msra.mxu0 %v1323
        %1343 = vmatmul.f32.gmra.mxu0 %v1319
        %v1344 = vpop.f32.mrf.mxu0
        %v1345 = vadd.f32 0.0, %v1344
        %1346 = vmatmul.f32.gmra.mxu0 %v1321
        %v1347 = vpop.f32.mrf.mxu0
        %v1348 = vadd.f32 0.0, %v1347
        %1349 = vdwg.mxu0
        %1352 = vrot.lane.b32.xlu0 %v1139, 96
        %v1353 = vpop.permute.xlu0 %1352
        %1354 = vrot.lane.b32.xlu0 %v1142, 96
        %v1355 = vpop.permute.xlu0 %1354
        %v1356 = vsel %vm1170, %v1139, 0
        %v1358 = vsel %vm1170, %v1142, 0
        %v1360 = vsel %vm1170, %v1353, 0
        %v1362 = vsel %vm1170, %v1355, 0
        %1364 = vmatpush.xpose.msra.mxu0 0.0
        %1365 = vmatpush.xpose.msra.mxu0 0.0
        %1366 = vmatpush.xpose.msra.mxu0 0.0
        %1367 = vmatpush.xpose.msra.mxu0 0.0
        %1368 = vmatpush.xpose.msra.mxu0 0.0
        %1369 = vmatpush.xpose.msra.mxu0 0.0
        %1370 = vmatpush.xpose.msra.mxu0 0.0
        %1371 = vmatpush.xpose.msra.mxu0 0.0
        %1372 = vmatpush.xpose.msra.mxu0 0.0
        %1373 = vmatpush.xpose.msra.mxu0 0.0
        %1374 = vmatpush.xpose.msra.mxu0 0.0
        %1375 = vmatpush.xpose.msra.mxu0 0.0
        %1376 = vmatpush.xpose.msra.mxu0 0.0
        %1377 = vmatpush.xpose.msra.mxu0 0.0
        %1378 = vmatpush.xpose.msra.mxu0 %v1362
        %1379 = vmatpush.xpose.msra.mxu0 %v1360
        %1380 = vmatmul.f32.gmra.mxu0 %v1356
        %v1381 = vpop.f32.mrf.mxu0
        %v1382 = vadd.f32 0.0, %v1381
        %1383 = vmatmul.f32.gmra.mxu0 %v1358
        %v1384 = vpop.f32.mrf.mxu0
        %v1385 = vadd.f32 0.0, %v1384
        %1386 = vdwg.mxu0
        %1389 = vrot.lane.b32.xlu0 %v1145, 96
        %v1390 = vpop.permute.xlu0 %1389
        %1391 = vrot.lane.b32.xlu0 %v1148, 96
        %v1392 = vpop.permute.xlu0 %1391
        %v1393 = vsel %vm1170, %v1145, 0
        %v1395 = vsel %vm1170, %v1148, 0
        %v1397 = vsel %vm1170, %v1390, 0
        %v1399 = vsel %vm1170, %v1392, 0
        %1401 = vmatpush.xpose.msra.mxu0 0.0
        %1402 = vmatpush.xpose.msra.mxu0 0.0
        %1403 = vmatpush.xpose.msra.mxu0 0.0
        %1404 = vmatpush.xpose.msra.mxu0 0.0
        %1405 = vmatpush.xpose.msra.mxu0 0.0
        %1406 = vmatpush.xpose.msra.mxu0 0.0
        %1407 = vmatpush.xpose.msra.mxu0 0.0
        %1408 = vmatpush.xpose.msra.mxu0 0.0
        %1409 = vmatpush.xpose.msra.mxu0 0.0
        %1410 = vmatpush.xpose.msra.mxu0 0.0
        %1411 = vmatpush.xpose.msra.mxu0 0.0
        %1412 = vmatpush.xpose.msra.mxu0 0.0
        %1413 = vmatpush.xpose.msra.mxu0 0.0
        %1414 = vmatpush.xpose.msra.mxu0 0.0
        %1415 = vmatpush.xpose.msra.mxu0 %v1399
        %1416 = vmatpush.xpose.msra.mxu0 %v1397
        %1417 = vmatmul.f32.gmra.mxu0 %v1393
        %v1418 = vpop.f32.mrf.mxu0
        %v1419 = vadd.f32 0.0, %v1418
        %1420 = vmatmul.f32.gmra.mxu0 %v1395
        %v1421 = vpop.f32.mrf.mxu0
        %v1422 = vadd.f32 0.0, %v1421
        %1423 = vdwg.mxu0
        %1426 = vrot.lane.b32.xlu0 %v1151, 96
        %v1427 = vpop.permute.xlu0 %1426
        %1428 = vrot.lane.b32.xlu0 %v1154, 96
        %v1429 = vpop.permute.xlu0 %1428
        %v1430 = vsel %vm1170, %v1151, 0
        %v1432 = vsel %vm1170, %v1154, 0
        %v1434 = vsel %vm1170, %v1427, 0
        %v1436 = vsel %vm1170, %v1429, 0
        %1438 = vmatpush.xpose.msra.mxu0 0.0
        %1439 = vmatpush.xpose.msra.mxu0 0.0
        %1440 = vmatpush.xpose.msra.mxu0 0.0
        %1441 = vmatpush.xpose.msra.mxu0 0.0
        %1442 = vmatpush.xpose.msra.mxu0 0.0
        %1443 = vmatpush.xpose.msra.mxu0 0.0
        %1444 = vmatpush.xpose.msra.mxu0 0.0
        %1445 = vmatpush.xpose.msra.mxu0 0.0
        %1446 = vmatpush.xpose.msra.mxu0 0.0
        %1447 = vmatpush.xpose.msra.mxu0 0.0
        %1448 = vmatpush.xpose.msra.mxu0 0.0
        %1449 = vmatpush.xpose.msra.mxu0 0.0
        %1450 = vmatpush.xpose.msra.mxu0 0.0
        %1451 = vmatpush.xpose.msra.mxu0 0.0
        %1452 = vmatpush.xpose.msra.mxu0 %v1436
        %1453 = vmatpush.xpose.msra.mxu0 %v1434
        %1454 = vmatmul.f32.gmra.mxu0 %v1430
        %v1455 = vpop.f32.mrf.mxu0
        %v1456 = vadd.f32 0.0, %v1455
        %1457 = vmatmul.f32.gmra.mxu0 %v1432
        %v1458 = vpop.f32.mrf.mxu0
        %v1459 = vadd.f32 0.0, %v1458
        %1460 = vdwg.mxu0
        %v1461 = vmul.f32 %v1197, 0.35355338
        %v1462 = vmul.f32 %v1200, 0.35355338
        %v1463 = vmul.f32 %v1234, 0.35355338
        %v1464 = vmul.f32 %v1237, 0.35355338
        %v1465 = vmul.f32 %v1271, 0.35355338
        %v1466 = vmul.f32 %v1274, 0.35355338
        %v1467 = vmul.f32 %v1308, 0.35355338
        %v1468 = vmul.f32 %v1311, 0.35355338
        %v1469 = vmul.f32 %v1345, 0.35355338
        %v1470 = vmul.f32 %v1348, 0.35355338
        %v1471 = vmul.f32 %v1382, 0.35355338
        %v1472 = vmul.f32 %v1385, 0.35355338
        %v1473 = vmul.f32 %v1419, 0.35355338
        %v1474 = vmul.f32 %v1422, 0.35355338
        %v1475 = vmul.f32 %v1456, 0.35355338
        %v1476 = vmul.f32 %v1459, 0.35355338
        %v1477 = vadd.f32 %v1461, %v1159
        %v1478 = vadd.f32 %v1462, %v1159
        %v1479 = vadd.f32 %v1463, %v1159
        %v1480 = vadd.f32 %v1464, %v1159
        %v1481 = vadd.f32 %v1465, %v1159
        %v1482 = vadd.f32 %v1466, %v1159
        %v1483 = vadd.f32 %v1467, %v1159
        %v1484 = vadd.f32 %v1468, %v1159
        %v1485 = vadd.f32 %v1469, %v1159
        %v1486 = vadd.f32 %v1470, %v1159
        %v1487 = vadd.f32 %v1471, %v1159
        %v1488 = vadd.f32 %v1472, %v1159
        %v1489 = vadd.f32 %v1473, %v1159
        %v1490 = vadd.f32 %v1474, %v1159
        %v1491 = vadd.f32 %v1475, %v1159
        %v1492 = vadd.f32 %v1476, %v1159
        %vm1493 = vcmask 130048
        %v1494 = vsel %vm1493, %v1477, -inf
        %1495 = vmax.xlane.f32.xlu0 %v1494
        %v1496 = vpop.xlane.xlu0 %1495
        %v1497 = vsel %vm1493, %v1478, -inf
        %1498 = vmax.xlane.f32.xlu0 %v1497
        %v1499 = vpop.xlane.xlu0 %1498
        %v1500 = vsel %vm1493, %v1479, -inf
        %1501 = vmax.xlane.f32.xlu0 %v1500
        %v1502 = vpop.xlane.xlu0 %1501
        %v1503 = vsel %vm1493, %v1480, -inf
        %1504 = vmax.xlane.f32.xlu0 %v1503
        %v1505 = vpop.xlane.xlu0 %1504
        %v1506 = vsel %vm1493, %v1481, -inf
        %1507 = vmax.xlane.f32.xlu0 %v1506
        %v1508 = vpop.xlane.xlu0 %1507
        %v1509 = vsel %vm1493, %v1482, -inf
        %1510 = vmax.xlane.f32.xlu0 %v1509
        %v1511 = vpop.xlane.xlu0 %1510
        %v1512 = vsel %vm1493, %v1483, -inf
        %1513 = vmax.xlane.f32.xlu0 %v1512
        %v1514 = vpop.xlane.xlu0 %1513
        %v1515 = vsel %vm1493, %v1484, -inf
        %1516 = vmax.xlane.f32.xlu0 %v1515
        %v1517 = vpop.xlane.xlu0 %1516
        %v1518 = vsel %vm1493, %v1485, -inf
        %1519 = vmax.xlane.f32.xlu0 %v1518
        %v1520 = vpop.xlane.xlu0 %1519
        %v1521 = vsel %vm1493, %v1486, -inf
        %1522 = vmax.xlane.f32.xlu0 %v1521
        %v1523 = vpop.xlane.xlu0 %1522
        %v1524 = vsel %vm1493, %v1487, -inf
        %1525 = vmax.xlane.f32.xlu0 %v1524
        %v1526 = vpop.xlane.xlu0 %1525
        %v1527 = vsel %vm1493, %v1488, -inf
        %1528 = vmax.xlane.f32.xlu0 %v1527
        %v1529 = vpop.xlane.xlu0 %1528
        %v1530 = vsel %vm1493, %v1489, -inf
        %1531 = vmax.xlane.f32.xlu0 %v1530
        %v1532 = vpop.xlane.xlu0 %1531
        %v1533 = vsel %vm1493, %v1490, -inf
        %1534 = vmax.xlane.f32.xlu0 %v1533
        %v1535 = vpop.xlane.xlu0 %1534
        %v1536 = vsel %vm1493, %v1491, -inf
        %1537 = vmax.xlane.f32.xlu0 %v1536
        %v1538 = vpop.xlane.xlu0 %1537
        %v1539 = vsel %vm1493, %v1492, -inf
        %1540 = vmax.xlane.f32.xlu0 %v1539
        %v1541 = vpop.xlane.xlu0 %1540
        %v1542 = vsub.f32 %v1477, %v1496
        %v1543 = vsub.f32 %v1478, %v1499
        %v1544 = vsub.f32 %v1479, %v1502
        %v1545 = vsub.f32 %v1480, %v1505
        %v1546 = vsub.f32 %v1481, %v1508
        %v1547 = vsub.f32 %v1482, %v1511
        %v1548 = vsub.f32 %v1483, %v1514
        %v1549 = vsub.f32 %v1484, %v1517
        %v1550 = vsub.f32 %v1485, %v1520
        %v1551 = vsub.f32 %v1486, %v1523
        %v1552 = vsub.f32 %v1487, %v1526
        %v1553 = vsub.f32 %v1488, %v1529
        %v1554 = vsub.f32 %v1489, %v1532
        %v1555 = vsub.f32 %v1490, %v1535
        %v1556 = vsub.f32 %v1491, %v1538
        %v1557 = vsub.f32 %v1492, %v1541
        %v1558 = vmul.f32 %v1542, 1.442695
        %v1559 = vpow.pop %v1558
        %v1560 = vmul.f32 %v1543, 1.442695
        %v1561 = vpow.pop %v1560
        %v1562 = vmul.f32 %v1544, 1.442695
        %v1563 = vpow.pop %v1562
        %v1564 = vmul.f32 %v1545, 1.442695
        %v1565 = vpow.pop %v1564
        %v1566 = vmul.f32 %v1546, 1.442695
        %v1567 = vpow.pop %v1566
        %v1568 = vmul.f32 %v1547, 1.442695
        %v1569 = vpow.pop %v1568
        %v1570 = vmul.f32 %v1548, 1.442695
        %v1571 = vpow.pop %v1570
        %v1572 = vmul.f32 %v1549, 1.442695
        %v1573 = vpow.pop %v1572
        %v1574 = vmul.f32 %v1550, 1.442695
        %v1575 = vpow.pop %v1574
        %v1576 = vmul.f32 %v1551, 1.442695
        %v1577 = vpow.pop %v1576
        %v1578 = vmul.f32 %v1552, 1.442695
        %v1579 = vpow.pop %v1578
        %v1580 = vmul.f32 %v1553, 1.442695
        %v1581 = vpow.pop %v1580
        %v1582 = vmul.f32 %v1554, 1.442695
        %v1583 = vpow.pop %v1582
        %v1584 = vmul.f32 %v1555, 1.442695
        %v1585 = vpow.pop %v1584
        %v1586 = vmul.f32 %v1556, 1.442695
        %v1587 = vpow.pop %v1586
        %v1588 = vmul.f32 %v1557, 1.442695
        %v1589 = vpow.pop %v1588
        %v1590 = vsel %vm1493, %v1559, 0.0
        %1591 = vadd.xlane.f32.xlu0 %v1590
        %v1592 = vpop.xlane.xlu0 %1591
        %v1593 = vsel %vm1493, %v1561, 0.0
        %1594 = vadd.xlane.f32.xlu0 %v1593
        %v1595 = vpop.xlane.xlu0 %1594
        %v1596 = vsel %vm1493, %v1563, 0.0
        %1597 = vadd.xlane.f32.xlu0 %v1596
        %v1598 = vpop.xlane.xlu0 %1597
        %v1599 = vsel %vm1493, %v1565, 0.0
        %1600 = vadd.xlane.f32.xlu0 %v1599
        %v1601 = vpop.xlane.xlu0 %1600
        %v1602 = vsel %vm1493, %v1567, 0.0
        %1603 = vadd.xlane.f32.xlu0 %v1602
        %v1604 = vpop.xlane.xlu0 %1603
        %v1605 = vsel %vm1493, %v1569, 0.0
        %1606 = vadd.xlane.f32.xlu0 %v1605
        %v1607 = vpop.xlane.xlu0 %1606
        %v1608 = vsel %vm1493, %v1571, 0.0
        %1609 = vadd.xlane.f32.xlu0 %v1608
        %v1610 = vpop.xlane.xlu0 %1609
        %v1611 = vsel %vm1493, %v1573, 0.0
        %1612 = vadd.xlane.f32.xlu0 %v1611
        %v1613 = vpop.xlane.xlu0 %1612
        %v1614 = vsel %vm1493, %v1575, 0.0
        %1615 = vadd.xlane.f32.xlu0 %v1614
        %v1616 = vpop.xlane.xlu0 %1615
        %v1617 = vsel %vm1493, %v1577, 0.0
        %1618 = vadd.xlane.f32.xlu0 %v1617
        %v1619 = vpop.xlane.xlu0 %1618
        %v1620 = vsel %vm1493, %v1579, 0.0
        %1621 = vadd.xlane.f32.xlu0 %v1620
        %v1622 = vpop.xlane.xlu0 %1621
        %v1623 = vsel %vm1493, %v1581, 0.0
        %1624 = vadd.xlane.f32.xlu0 %v1623
        %v1625 = vpop.xlane.xlu0 %1624
        %v1626 = vsel %vm1493, %v1583, 0.0
        %1627 = vadd.xlane.f32.xlu0 %v1626
        %v1628 = vpop.xlane.xlu0 %1627
        %v1629 = vsel %vm1493, %v1585, 0.0
        %1630 = vadd.xlane.f32.xlu0 %v1629
        %v1631 = vpop.xlane.xlu0 %1630
        %v1632 = vsel %vm1493, %v1587, 0.0
        %1633 = vadd.xlane.f32.xlu0 %v1632
        %v1634 = vpop.xlane.xlu0 %1633
        %v1635 = vsel %vm1493, %v1589, 0.0
        %1636 = vadd.xlane.f32.xlu0 %v1635
        %v1637 = vpop.xlane.xlu0 %1636
        %v1638 = vrcp.pop %v1592
        %v1639 = vrcp.pop %v1595
        %v1640 = vrcp.pop %v1598
        %v1641 = vrcp.pop %v1601
        %v1642 = vrcp.pop %v1604
        %v1643 = vrcp.pop %v1607
        %v1644 = vrcp.pop %v1610
        %v1645 = vrcp.pop %v1613
        %v1646 = vrcp.pop %v1616
        %v1647 = vrcp.pop %v1619
        %v1648 = vrcp.pop %v1622
        %v1649 = vrcp.pop %v1625
        %v1650 = vrcp.pop %v1628
        %v1651 = vrcp.pop %v1631
        %v1652 = vrcp.pop %v1634
        %v1653 = vrcp.pop %v1637
        %v1654 = vmul.f32 %v1559, %v1638
        %v1655 = vmul.f32 %v1561, %v1639
        %v1656 = vmul.f32 %v1563, %v1640
        %v1657 = vmul.f32 %v1565, %v1641
        %v1658 = vmul.f32 %v1567, %v1642
        %v1659 = vmul.f32 %v1569, %v1643
        %v1660 = vmul.f32 %v1571, %v1644
        %v1661 = vmul.f32 %v1573, %v1645
        %v1662 = vmul.f32 %v1575, %v1646
        %v1663 = vmul.f32 %v1577, %v1647
        %v1664 = vmul.f32 %v1579, %v1648
        %v1665 = vmul.f32 %v1581, %v1649
        %v1666 = vmul.f32 %v1583, %v1650
        %v1667 = vmul.f32 %v1585, %v1651
        %v1668 = vmul.f32 %v1587, %v1652
        %v1669 = vmul.f32 %v1589, %v1653
        %1670 = vrot.lane.b32.xlu0 %v1109, 64
        %v1671 = vpop.permute.xlu0 %1670
        %1672 = vrot.lane.b32.xlu0 %v1112, 64
        %v1673 = vpop.permute.xlu0 %1672
        %v1677 = vsel %vm1493, %v1654, 0
        %v1680 = vsel %vm1493, %v1655, 0
        %1682 = vmatpush.msra.mxu0 0.0
        %1683 = vmatpush.msra.mxu0 0.0
        %1684 = vmatpush.msra.mxu0 0.0
        %1685 = vmatpush.msra.mxu0 0.0
        %1686 = vmatpush.msra.mxu0 0.0
        %1687 = vmatpush.msra.mxu0 0.0
        %1688 = vmatpush.msra.mxu0 0.0
        %1689 = vmatpush.msra.mxu0 0.0
        %1690 = vmatpush.msra.mxu0 0.0
        %1691 = vmatpush.msra.mxu0 0.0
        %1692 = vmatpush.msra.mxu0 0.0
        %1693 = vmatpush.msra.mxu0 0.0
        %1694 = vmatpush.msra.mxu0 0.0
        %1695 = vmatpush.msra.mxu0 0.0
        %1696 = vmatpush.msra.mxu0 %v1673
        %1697 = vmatpush.msra.mxu0 %v1671
        %1698 = vmatmul.f32.gmra.mxu0 %v1677
        %v1699 = vpop.f32.mrf.mxu0
        %v1700 = vadd.f32 0.0, %v1699
        %1701 = vmatmul.f32.gmra.mxu0 %v1680
        %v1702 = vpop.f32.mrf.mxu0
        %v1703 = vadd.f32 0.0, %v1702
        %1704 = vdwg.mxu0
        %1705 = vrot.lane.b32.xlu0 %v1115, 64
        %v1706 = vpop.permute.xlu0 %1705
        %1707 = vrot.lane.b32.xlu0 %v1118, 64
        %v1708 = vpop.permute.xlu0 %1707
        %v1712 = vsel %vm1493, %v1656, 0
        %v1715 = vsel %vm1493, %v1657, 0
        %1717 = vmatpush.msra.mxu0 0.0
        %1718 = vmatpush.msra.mxu0 0.0
        %1719 = vmatpush.msra.mxu0 0.0
        %1720 = vmatpush.msra.mxu0 0.0
        %1721 = vmatpush.msra.mxu0 0.0
        %1722 = vmatpush.msra.mxu0 0.0
        %1723 = vmatpush.msra.mxu0 0.0
        %1724 = vmatpush.msra.mxu0 0.0
        %1725 = vmatpush.msra.mxu0 0.0
        %1726 = vmatpush.msra.mxu0 0.0
        %1727 = vmatpush.msra.mxu0 0.0
        %1728 = vmatpush.msra.mxu0 0.0
        %1729 = vmatpush.msra.mxu0 0.0
        %1730 = vmatpush.msra.mxu0 0.0
        %1731 = vmatpush.msra.mxu0 %v1708
        %1732 = vmatpush.msra.mxu0 %v1706
        %1733 = vmatmul.f32.gmra.mxu0 %v1712
        %v1734 = vpop.f32.mrf.mxu0
        %v1735 = vadd.f32 0.0, %v1734
        %1736 = vmatmul.f32.gmra.mxu0 %v1715
        %v1737 = vpop.f32.mrf.mxu0
        %v1738 = vadd.f32 0.0, %v1737
        %1739 = vdwg.mxu0
        %1740 = vrot.lane.b32.xlu0 %v1121, 64
        %v1741 = vpop.permute.xlu0 %1740
        %1742 = vrot.lane.b32.xlu0 %v1124, 64
        %v1743 = vpop.permute.xlu0 %1742
        %v1747 = vsel %vm1493, %v1658, 0
        %v1750 = vsel %vm1493, %v1659, 0
        %1752 = vmatpush.msra.mxu0 0.0
        %1753 = vmatpush.msra.mxu0 0.0
        %1754 = vmatpush.msra.mxu0 0.0
        %1755 = vmatpush.msra.mxu0 0.0
        %1756 = vmatpush.msra.mxu0 0.0
        %1757 = vmatpush.msra.mxu0 0.0
        %1758 = vmatpush.msra.mxu0 0.0
        %1759 = vmatpush.msra.mxu0 0.0
        %1760 = vmatpush.msra.mxu0 0.0
        %1761 = vmatpush.msra.mxu0 0.0
        %1762 = vmatpush.msra.mxu0 0.0
        %1763 = vmatpush.msra.mxu0 0.0
        %1764 = vmatpush.msra.mxu0 0.0
        %1765 = vmatpush.msra.mxu0 0.0
        %1766 = vmatpush.msra.mxu0 %v1743
        %1767 = vmatpush.msra.mxu0 %v1741
        %1768 = vmatmul.f32.gmra.mxu0 %v1747
        %v1769 = vpop.f32.mrf.mxu0
        %v1770 = vadd.f32 0.0, %v1769
        %1771 = vmatmul.f32.gmra.mxu0 %v1750
        %v1772 = vpop.f32.mrf.mxu0
        %v1773 = vadd.f32 0.0, %v1772
        %1774 = vdwg.mxu0
        %1775 = vrot.lane.b32.xlu0 %v1127, 64
        %v1776 = vpop.permute.xlu0 %1775
        %1777 = vrot.lane.b32.xlu0 %v1130, 64
        %v1778 = vpop.permute.xlu0 %1777
        %v1782 = vsel %vm1493, %v1660, 0
        %v1785 = vsel %vm1493, %v1661, 0
        %1787 = vmatpush.msra.mxu0 0.0
        %1788 = vmatpush.msra.mxu0 0.0
        %1789 = vmatpush.msra.mxu0 0.0
        %1790 = vmatpush.msra.mxu0 0.0
        %1791 = vmatpush.msra.mxu0 0.0
        %1792 = vmatpush.msra.mxu0 0.0
        %1793 = vmatpush.msra.mxu0 0.0
        %1794 = vmatpush.msra.mxu0 0.0
        %1795 = vmatpush.msra.mxu0 0.0
        %1796 = vmatpush.msra.mxu0 0.0
        %1797 = vmatpush.msra.mxu0 0.0
        %1798 = vmatpush.msra.mxu0 0.0
        %1799 = vmatpush.msra.mxu0 0.0
        %1800 = vmatpush.msra.mxu0 0.0
        %1801 = vmatpush.msra.mxu0 %v1778
        %1802 = vmatpush.msra.mxu0 %v1776
        %1803 = vmatmul.f32.gmra.mxu0 %v1782
        %v1804 = vpop.f32.mrf.mxu0
        %v1805 = vadd.f32 0.0, %v1804
        %1806 = vmatmul.f32.gmra.mxu0 %v1785
        %v1807 = vpop.f32.mrf.mxu0
        %v1808 = vadd.f32 0.0, %v1807
        %1809 = vdwg.mxu0
        %1810 = vrot.lane.b32.xlu0 %v1133, 64
        %v1811 = vpop.permute.xlu0 %1810
        %1812 = vrot.lane.b32.xlu0 %v1136, 64
        %v1813 = vpop.permute.xlu0 %1812
        %v1817 = vsel %vm1493, %v1662, 0
        %v1820 = vsel %vm1493, %v1663, 0
        %1822 = vmatpush.msra.mxu0 0.0
        %1823 = vmatpush.msra.mxu0 0.0
        %1824 = vmatpush.msra.mxu0 0.0
        %1825 = vmatpush.msra.mxu0 0.0
        %1826 = vmatpush.msra.mxu0 0.0
        %1827 = vmatpush.msra.mxu0 0.0
        %1828 = vmatpush.msra.mxu0 0.0
        %1829 = vmatpush.msra.mxu0 0.0
        %1830 = vmatpush.msra.mxu0 0.0
        %1831 = vmatpush.msra.mxu0 0.0
        %1832 = vmatpush.msra.mxu0 0.0
        %1833 = vmatpush.msra.mxu0 0.0
        %1834 = vmatpush.msra.mxu0 0.0
        %1835 = vmatpush.msra.mxu0 0.0
        %1836 = vmatpush.msra.mxu0 %v1813
        %1837 = vmatpush.msra.mxu0 %v1811
        %1838 = vmatmul.f32.gmra.mxu0 %v1817
        %v1839 = vpop.f32.mrf.mxu0
        %v1840 = vadd.f32 0.0, %v1839
        %1841 = vmatmul.f32.gmra.mxu0 %v1820
        %v1842 = vpop.f32.mrf.mxu0
        %v1843 = vadd.f32 0.0, %v1842
        %1844 = vdwg.mxu0
        %1845 = vrot.lane.b32.xlu0 %v1139, 64
        %v1846 = vpop.permute.xlu0 %1845
        %1847 = vrot.lane.b32.xlu0 %v1142, 64
        %v1848 = vpop.permute.xlu0 %1847
        %v1852 = vsel %vm1493, %v1664, 0
        %v1855 = vsel %vm1493, %v1665, 0
        %1857 = vmatpush.msra.mxu0 0.0
        %1858 = vmatpush.msra.mxu0 0.0
        %1859 = vmatpush.msra.mxu0 0.0
        %1860 = vmatpush.msra.mxu0 0.0
        %1861 = vmatpush.msra.mxu0 0.0
        %1862 = vmatpush.msra.mxu0 0.0
        %1863 = vmatpush.msra.mxu0 0.0
        %1864 = vmatpush.msra.mxu0 0.0
        %1865 = vmatpush.msra.mxu0 0.0
        %1866 = vmatpush.msra.mxu0 0.0
        %1867 = vmatpush.msra.mxu0 0.0
        %1868 = vmatpush.msra.mxu0 0.0
        %1869 = vmatpush.msra.mxu0 0.0
        %1870 = vmatpush.msra.mxu0 0.0
        %1871 = vmatpush.msra.mxu0 %v1848
        %1872 = vmatpush.msra.mxu0 %v1846
        %1873 = vmatmul.f32.gmra.mxu0 %v1852
        %v1874 = vpop.f32.mrf.mxu0
        %v1875 = vadd.f32 0.0, %v1874
        %1876 = vmatmul.f32.gmra.mxu0 %v1855
        %v1877 = vpop.f32.mrf.mxu0
        %v1878 = vadd.f32 0.0, %v1877
        %1879 = vdwg.mxu0
        %1880 = vrot.lane.b32.xlu0 %v1145, 64
        %v1881 = vpop.permute.xlu0 %1880
        %1882 = vrot.lane.b32.xlu0 %v1148, 64
        %v1883 = vpop.permute.xlu0 %1882
        %v1887 = vsel %vm1493, %v1666, 0
        %v1890 = vsel %vm1493, %v1667, 0
        %1892 = vmatpush.msra.mxu0 0.0
        %1893 = vmatpush.msra.mxu0 0.0
        %1894 = vmatpush.msra.mxu0 0.0
        %1895 = vmatpush.msra.mxu0 0.0
        %1896 = vmatpush.msra.mxu0 0.0
        %1897 = vmatpush.msra.mxu0 0.0
        %1898 = vmatpush.msra.mxu0 0.0
        %1899 = vmatpush.msra.mxu0 0.0
        %1900 = vmatpush.msra.mxu0 0.0
        %1901 = vmatpush.msra.mxu0 0.0
        %1902 = vmatpush.msra.mxu0 0.0
        %1903 = vmatpush.msra.mxu0 0.0
        %1904 = vmatpush.msra.mxu0 0.0
        %1905 = vmatpush.msra.mxu0 0.0
        %1906 = vmatpush.msra.mxu0 %v1883
        %1907 = vmatpush.msra.mxu0 %v1881
        %1908 = vmatmul.f32.gmra.mxu0 %v1887
        %v1909 = vpop.f32.mrf.mxu0
        %v1910 = vadd.f32 0.0, %v1909
        %1911 = vmatmul.f32.gmra.mxu0 %v1890
        %v1912 = vpop.f32.mrf.mxu0
        %v1913 = vadd.f32 0.0, %v1912
        %1914 = vdwg.mxu0
        %1915 = vrot.lane.b32.xlu0 %v1151, 64
        %v1916 = vpop.permute.xlu0 %1915
        %1917 = vrot.lane.b32.xlu0 %v1154, 64
        %v1918 = vpop.permute.xlu0 %1917
        %v1922 = vsel %vm1493, %v1668, 0
        %v1925 = vsel %vm1493, %v1669, 0
        %1927 = vmatpush.msra.mxu0 0.0
        %1928 = vmatpush.msra.mxu0 0.0
        %1929 = vmatpush.msra.mxu0 0.0
        %1930 = vmatpush.msra.mxu0 0.0
        %1931 = vmatpush.msra.mxu0 0.0
        %1932 = vmatpush.msra.mxu0 0.0
        %1933 = vmatpush.msra.mxu0 0.0
        %1934 = vmatpush.msra.mxu0 0.0
        %1935 = vmatpush.msra.mxu0 0.0
        %1936 = vmatpush.msra.mxu0 0.0
        %1937 = vmatpush.msra.mxu0 0.0
        %1938 = vmatpush.msra.mxu0 0.0
        %1939 = vmatpush.msra.mxu0 0.0
        %1940 = vmatpush.msra.mxu0 0.0
        %1941 = vmatpush.msra.mxu0 %v1918
        %1942 = vmatpush.msra.mxu0 %v1916
        %1943 = vmatmul.f32.gmra.mxu0 %v1922
        %v1944 = vpop.f32.mrf.mxu0
        %v1945 = vadd.f32 0.0, %v1944
        %1946 = vmatmul.f32.gmra.mxu0 %v1925
        %v1947 = vpop.f32.mrf.mxu0
        %v1948 = vadd.f32 0.0, %v1947
        %1949 = vdwg.mxu0
        %1950 = vrot.lane.b32.xlu0 %v1109, 120
        %v1951 = vpop.permute.xlu0 %1950
        %1952 = vrot.lane.b32.xlu0 %v1112, 120
        %v1953 = vpop.permute.xlu0 %1952
        %1954 = vrot.lane.b32.xlu0 %v1109, 88
        %v1955 = vpop.permute.xlu0 %1954
        %1956 = vrot.lane.b32.xlu0 %v1112, 88
        %v1957 = vpop.permute.xlu0 %1956
        %v1958 = vsel %vm1170, %v1951, 0
        %v1960 = vsel %vm1170, %v1953, 0
        %v1962 = vsel %vm1170, %v1955, 0
        %v1964 = vsel %vm1170, %v1957, 0
        %1966 = vmatpush.xpose.msra.mxu0 0.0
        %1967 = vmatpush.xpose.msra.mxu0 0.0
        %1968 = vmatpush.xpose.msra.mxu0 0.0
        %1969 = vmatpush.xpose.msra.mxu0 0.0
        %1970 = vmatpush.xpose.msra.mxu0 0.0
        %1971 = vmatpush.xpose.msra.mxu0 0.0
        %1972 = vmatpush.xpose.msra.mxu0 0.0
        %1973 = vmatpush.xpose.msra.mxu0 0.0
        %1974 = vmatpush.xpose.msra.mxu0 0.0
        %1975 = vmatpush.xpose.msra.mxu0 0.0
        %1976 = vmatpush.xpose.msra.mxu0 0.0
        %1977 = vmatpush.xpose.msra.mxu0 0.0
        %1978 = vmatpush.xpose.msra.mxu0 0.0
        %1979 = vmatpush.xpose.msra.mxu0 0.0
        %1980 = vmatpush.xpose.msra.mxu0 %v1964
        %1981 = vmatpush.xpose.msra.mxu0 %v1962
        %1982 = vmatmul.f32.gmra.mxu0 %v1958
        %v1983 = vpop.f32.mrf.mxu0
        %v1984 = vadd.f32 0.0, %v1983
        %1985 = vmatmul.f32.gmra.mxu0 %v1960
        %v1986 = vpop.f32.mrf.mxu0
        %v1987 = vadd.f32 0.0, %v1986
        %1988 = vdwg.mxu0
        %1989 = vrot.lane.b32.xlu0 %v1115, 120
        %v1990 = vpop.permute.xlu0 %1989
        %1991 = vrot.lane.b32.xlu0 %v1118, 120
        %v1992 = vpop.permute.xlu0 %1991
        %1993 = vrot.lane.b32.xlu0 %v1115, 88
        %v1994 = vpop.permute.xlu0 %1993
        %1995 = vrot.lane.b32.xlu0 %v1118, 88
        %v1996 = vpop.permute.xlu0 %1995
        %v1997 = vsel %vm1170, %v1990, 0
        %v1999 = vsel %vm1170, %v1992, 0
        %v2001 = vsel %vm1170, %v1994, 0
        %v2003 = vsel %vm1170, %v1996, 0
        %2005 = vmatpush.xpose.msra.mxu0 0.0
        %2006 = vmatpush.xpose.msra.mxu0 0.0
        %2007 = vmatpush.xpose.msra.mxu0 0.0
        %2008 = vmatpush.xpose.msra.mxu0 0.0
        %2009 = vmatpush.xpose.msra.mxu0 0.0
        %2010 = vmatpush.xpose.msra.mxu0 0.0
        %2011 = vmatpush.xpose.msra.mxu0 0.0
        %2012 = vmatpush.xpose.msra.mxu0 0.0
        %2013 = vmatpush.xpose.msra.mxu0 0.0
        %2014 = vmatpush.xpose.msra.mxu0 0.0
        %2015 = vmatpush.xpose.msra.mxu0 0.0
        %2016 = vmatpush.xpose.msra.mxu0 0.0
        %2017 = vmatpush.xpose.msra.mxu0 0.0
        %2018 = vmatpush.xpose.msra.mxu0 0.0
        %2019 = vmatpush.xpose.msra.mxu0 %v2003
        %2020 = vmatpush.xpose.msra.mxu0 %v2001
        %2021 = vmatmul.f32.gmra.mxu0 %v1997
        %v2022 = vpop.f32.mrf.mxu0
        %v2023 = vadd.f32 0.0, %v2022
        %2024 = vmatmul.f32.gmra.mxu0 %v1999
        %v2025 = vpop.f32.mrf.mxu0
        %v2026 = vadd.f32 0.0, %v2025
        %2027 = vdwg.mxu0
        %2028 = vrot.lane.b32.xlu0 %v1121, 120
        %v2029 = vpop.permute.xlu0 %2028
        %2030 = vrot.lane.b32.xlu0 %v1124, 120
        %v2031 = vpop.permute.xlu0 %2030
        %2032 = vrot.lane.b32.xlu0 %v1121, 88
        %v2033 = vpop.permute.xlu0 %2032
        %2034 = vrot.lane.b32.xlu0 %v1124, 88
        %v2035 = vpop.permute.xlu0 %2034
        %v2036 = vsel %vm1170, %v2029, 0
        %v2038 = vsel %vm1170, %v2031, 0
        %v2040 = vsel %vm1170, %v2033, 0
        %v2042 = vsel %vm1170, %v2035, 0
        %2044 = vmatpush.xpose.msra.mxu0 0.0
        %2045 = vmatpush.xpose.msra.mxu0 0.0
        %2046 = vmatpush.xpose.msra.mxu0 0.0
        %2047 = vmatpush.xpose.msra.mxu0 0.0
        %2048 = vmatpush.xpose.msra.mxu0 0.0
        %2049 = vmatpush.xpose.msra.mxu0 0.0
        %2050 = vmatpush.xpose.msra.mxu0 0.0
        %2051 = vmatpush.xpose.msra.mxu0 0.0
        %2052 = vmatpush.xpose.msra.mxu0 0.0
        %2053 = vmatpush.xpose.msra.mxu0 0.0
        %2054 = vmatpush.xpose.msra.mxu0 0.0
        %2055 = vmatpush.xpose.msra.mxu0 0.0
        %2056 = vmatpush.xpose.msra.mxu0 0.0
        %2057 = vmatpush.xpose.msra.mxu0 0.0
        %2058 = vmatpush.xpose.msra.mxu0 %v2042
        %2059 = vmatpush.xpose.msra.mxu0 %v2040
        %2060 = vmatmul.f32.gmra.mxu0 %v2036
        %v2061 = vpop.f32.mrf.mxu0
        %v2062 = vadd.f32 0.0, %v2061
        %2063 = vmatmul.f32.gmra.mxu0 %v2038
        %v2064 = vpop.f32.mrf.mxu0
        %v2065 = vadd.f32 0.0, %v2064
        %2066 = vdwg.mxu0
        %2067 = vrot.lane.b32.xlu0 %v1127, 120
        %v2068 = vpop.permute.xlu0 %2067
        %2069 = vrot.lane.b32.xlu0 %v1130, 120
        %v2070 = vpop.permute.xlu0 %2069
        %2071 = vrot.lane.b32.xlu0 %v1127, 88
        %v2072 = vpop.permute.xlu0 %2071
        %2073 = vrot.lane.b32.xlu0 %v1130, 88
        %v2074 = vpop.permute.xlu0 %2073
        %v2075 = vsel %vm1170, %v2068, 0
        %v2077 = vsel %vm1170, %v2070, 0
        %v2079 = vsel %vm1170, %v2072, 0
        %v2081 = vsel %vm1170, %v2074, 0
        %2083 = vmatpush.xpose.msra.mxu0 0.0
        %2084 = vmatpush.xpose.msra.mxu0 0.0
        %2085 = vmatpush.xpose.msra.mxu0 0.0
        %2086 = vmatpush.xpose.msra.mxu0 0.0
        %2087 = vmatpush.xpose.msra.mxu0 0.0
        %2088 = vmatpush.xpose.msra.mxu0 0.0
        %2089 = vmatpush.xpose.msra.mxu0 0.0
        %2090 = vmatpush.xpose.msra.mxu0 0.0
        %2091 = vmatpush.xpose.msra.mxu0 0.0
        %2092 = vmatpush.xpose.msra.mxu0 0.0
        %2093 = vmatpush.xpose.msra.mxu0 0.0
        %2094 = vmatpush.xpose.msra.mxu0 0.0
        %2095 = vmatpush.xpose.msra.mxu0 0.0
        %2096 = vmatpush.xpose.msra.mxu0 0.0
        %2097 = vmatpush.xpose.msra.mxu0 %v2081
        %2098 = vmatpush.xpose.msra.mxu0 %v2079
        %2099 = vmatmul.f32.gmra.mxu0 %v2075
        %v2100 = vpop.f32.mrf.mxu0
        %v2101 = vadd.f32 0.0, %v2100
        %2102 = vmatmul.f32.gmra.mxu0 %v2077
        %v2103 = vpop.f32.mrf.mxu0
        %v2104 = vadd.f32 0.0, %v2103
        %2105 = vdwg.mxu0
        %2106 = vrot.lane.b32.xlu0 %v1133, 120
        %v2107 = vpop.permute.xlu0 %2106
        %2108 = vrot.lane.b32.xlu0 %v1136, 120
        %v2109 = vpop.permute.xlu0 %2108
        %2110 = vrot.lane.b32.xlu0 %v1133, 88
        %v2111 = vpop.permute.xlu0 %2110
        %2112 = vrot.lane.b32.xlu0 %v1136, 88
        %v2113 = vpop.permute.xlu0 %2112
        %v2114 = vsel %vm1170, %v2107, 0
        %v2116 = vsel %vm1170, %v2109, 0
        %v2118 = vsel %vm1170, %v2111, 0
        %v2120 = vsel %vm1170, %v2113, 0
        %2122 = vmatpush.xpose.msra.mxu0 0.0
        %2123 = vmatpush.xpose.msra.mxu0 0.0
        %2124 = vmatpush.xpose.msra.mxu0 0.0
        %2125 = vmatpush.xpose.msra.mxu0 0.0
        %2126 = vmatpush.xpose.msra.mxu0 0.0
        %2127 = vmatpush.xpose.msra.mxu0 0.0
        %2128 = vmatpush.xpose.msra.mxu0 0.0
        %2129 = vmatpush.xpose.msra.mxu0 0.0
        %2130 = vmatpush.xpose.msra.mxu0 0.0
        %2131 = vmatpush.xpose.msra.mxu0 0.0
        %2132 = vmatpush.xpose.msra.mxu0 0.0
        %2133 = vmatpush.xpose.msra.mxu0 0.0
        %2134 = vmatpush.xpose.msra.mxu0 0.0
        %2135 = vmatpush.xpose.msra.mxu0 0.0
        %2136 = vmatpush.xpose.msra.mxu0 %v2120
        %2137 = vmatpush.xpose.msra.mxu0 %v2118
        %2138 = vmatmul.f32.gmra.mxu0 %v2114
        %v2139 = vpop.f32.mrf.mxu0
        %v2140 = vadd.f32 0.0, %v2139
        %2141 = vmatmul.f32.gmra.mxu0 %v2116
        %v2142 = vpop.f32.mrf.mxu0
        %v2143 = vadd.f32 0.0, %v2142
        %2144 = vdwg.mxu0
        %2145 = vrot.lane.b32.xlu0 %v1139, 120
        %v2146 = vpop.permute.xlu0 %2145
        %2147 = vrot.lane.b32.xlu0 %v1142, 120
        %v2148 = vpop.permute.xlu0 %2147
        %2149 = vrot.lane.b32.xlu0 %v1139, 88
        %v2150 = vpop.permute.xlu0 %2149
        %2151 = vrot.lane.b32.xlu0 %v1142, 88
        %v2152 = vpop.permute.xlu0 %2151
        %v2153 = vsel %vm1170, %v2146, 0
        %v2155 = vsel %vm1170, %v2148, 0
        %v2157 = vsel %vm1170, %v2150, 0
        %v2159 = vsel %vm1170, %v2152, 0
        %2161 = vmatpush.xpose.msra.mxu0 0.0
        %2162 = vmatpush.xpose.msra.mxu0 0.0
        %2163 = vmatpush.xpose.msra.mxu0 0.0
        %2164 = vmatpush.xpose.msra.mxu0 0.0
        %2165 = vmatpush.xpose.msra.mxu0 0.0
        %2166 = vmatpush.xpose.msra.mxu0 0.0
        %2167 = vmatpush.xpose.msra.mxu0 0.0
        %2168 = vmatpush.xpose.msra.mxu0 0.0
        %2169 = vmatpush.xpose.msra.mxu0 0.0
        %2170 = vmatpush.xpose.msra.mxu0 0.0
        %2171 = vmatpush.xpose.msra.mxu0 0.0
        %2172 = vmatpush.xpose.msra.mxu0 0.0
        %2173 = vmatpush.xpose.msra.mxu0 0.0
        %2174 = vmatpush.xpose.msra.mxu0 0.0
        %2175 = vmatpush.xpose.msra.mxu0 %v2159
        %2176 = vmatpush.xpose.msra.mxu0 %v2157
        %2177 = vmatmul.f32.gmra.mxu0 %v2153
        %v2178 = vpop.f32.mrf.mxu0
        %v2179 = vadd.f32 0.0, %v2178
        %2180 = vmatmul.f32.gmra.mxu0 %v2155
        %v2181 = vpop.f32.mrf.mxu0
        %v2182 = vadd.f32 0.0, %v2181
        %2183 = vdwg.mxu0
        %2184 = vrot.lane.b32.xlu0 %v1145, 120
        %v2185 = vpop.permute.xlu0 %2184
        %2186 = vrot.lane.b32.xlu0 %v1148, 120
        %v2187 = vpop.permute.xlu0 %2186
        %2188 = vrot.lane.b32.xlu0 %v1145, 88
        %v2189 = vpop.permute.xlu0 %2188
        %2190 = vrot.lane.b32.xlu0 %v1148, 88
        %v2191 = vpop.permute.xlu0 %2190
        %v2192 = vsel %vm1170, %v2185, 0
        %v2194 = vsel %vm1170, %v2187, 0
        %v2196 = vsel %vm1170, %v2189, 0
        %v2198 = vsel %vm1170, %v2191, 0
        %2200 = vmatpush.xpose.msra.mxu0 0.0
        %2201 = vmatpush.xpose.msra.mxu0 0.0
        %2202 = vmatpush.xpose.msra.mxu0 0.0
        %2203 = vmatpush.xpose.msra.mxu0 0.0
        %2204 = vmatpush.xpose.msra.mxu0 0.0
        %2205 = vmatpush.xpose.msra.mxu0 0.0
        %2206 = vmatpush.xpose.msra.mxu0 0.0
        %2207 = vmatpush.xpose.msra.mxu0 0.0
        %2208 = vmatpush.xpose.msra.mxu0 0.0
        %2209 = vmatpush.xpose.msra.mxu0 0.0
        %2210 = vmatpush.xpose.msra.mxu0 0.0
        %2211 = vmatpush.xpose.msra.mxu0 0.0
        %2212 = vmatpush.xpose.msra.mxu0 0.0
        %2213 = vmatpush.xpose.msra.mxu0 0.0
        %2214 = vmatpush.xpose.msra.mxu0 %v2198
        %2215 = vmatpush.xpose.msra.mxu0 %v2196
        %2216 = vmatmul.f32.gmra.mxu0 %v2192
        %v2217 = vpop.f32.mrf.mxu0
        %v2218 = vadd.f32 0.0, %v2217
        %2219 = vmatmul.f32.gmra.mxu0 %v2194
        %v2220 = vpop.f32.mrf.mxu0
        %v2221 = vadd.f32 0.0, %v2220
        %2222 = vdwg.mxu0
        %2223 = vrot.lane.b32.xlu0 %v1151, 120
        %v2224 = vpop.permute.xlu0 %2223
        %2225 = vrot.lane.b32.xlu0 %v1154, 120
        %v2226 = vpop.permute.xlu0 %2225
        %2227 = vrot.lane.b32.xlu0 %v1151, 88
        %v2228 = vpop.permute.xlu0 %2227
        %2229 = vrot.lane.b32.xlu0 %v1154, 88
        %v2230 = vpop.permute.xlu0 %2229
        %v2231 = vsel %vm1170, %v2224, 0
        %v2233 = vsel %vm1170, %v2226, 0
        %v2235 = vsel %vm1170, %v2228, 0
        %v2237 = vsel %vm1170, %v2230, 0
        %2239 = vmatpush.xpose.msra.mxu0 0.0
        %2240 = vmatpush.xpose.msra.mxu0 0.0
        %2241 = vmatpush.xpose.msra.mxu0 0.0
        %2242 = vmatpush.xpose.msra.mxu0 0.0
        %2243 = vmatpush.xpose.msra.mxu0 0.0
        %2244 = vmatpush.xpose.msra.mxu0 0.0
        %2245 = vmatpush.xpose.msra.mxu0 0.0
        %2246 = vmatpush.xpose.msra.mxu0 0.0
        %2247 = vmatpush.xpose.msra.mxu0 0.0
        %2248 = vmatpush.xpose.msra.mxu0 0.0
        %2249 = vmatpush.xpose.msra.mxu0 0.0
        %2250 = vmatpush.xpose.msra.mxu0 0.0
        %2251 = vmatpush.xpose.msra.mxu0 0.0
        %2252 = vmatpush.xpose.msra.mxu0 0.0
        %2253 = vmatpush.xpose.msra.mxu0 %v2237
        %2254 = vmatpush.xpose.msra.mxu0 %v2235
        %2255 = vmatmul.f32.gmra.mxu0 %v2231
        %v2256 = vpop.f32.mrf.mxu0
        %v2257 = vadd.f32 0.0, %v2256
        %2258 = vmatmul.f32.gmra.mxu0 %v2233
        %v2259 = vpop.f32.mrf.mxu0
        %v2260 = vadd.f32 0.0, %v2259
        %2261 = vdwg.mxu0
        %v2262 = vmul.f32 %v1984, 0.35355338
        %v2263 = vmul.f32 %v1987, 0.35355338
        %v2264 = vmul.f32 %v2023, 0.35355338
        %v2265 = vmul.f32 %v2026, 0.35355338
        %v2266 = vmul.f32 %v2062, 0.35355338
        %v2267 = vmul.f32 %v2065, 0.35355338
        %v2268 = vmul.f32 %v2101, 0.35355338
        %v2269 = vmul.f32 %v2104, 0.35355338
        %v2270 = vmul.f32 %v2140, 0.35355338
        %v2271 = vmul.f32 %v2143, 0.35355338
        %v2272 = vmul.f32 %v2179, 0.35355338
        %v2273 = vmul.f32 %v2182, 0.35355338
        %v2274 = vmul.f32 %v2218, 0.35355338
        %v2275 = vmul.f32 %v2221, 0.35355338
        %v2276 = vmul.f32 %v2257, 0.35355338
        %v2277 = vmul.f32 %v2260, 0.35355338
        %v2278 = vadd.f32 %v2262, %v1159
        %v2279 = vadd.f32 %v2263, %v1159
        %v2280 = vadd.f32 %v2264, %v1159
        %v2281 = vadd.f32 %v2265, %v1159
        %v2282 = vadd.f32 %v2266, %v1159
        %v2283 = vadd.f32 %v2267, %v1159
        %v2284 = vadd.f32 %v2268, %v1159
        %v2285 = vadd.f32 %v2269, %v1159
        %v2286 = vadd.f32 %v2270, %v1159
        %v2287 = vadd.f32 %v2271, %v1159
        %v2288 = vadd.f32 %v2272, %v1159
        %v2289 = vadd.f32 %v2273, %v1159
        %v2290 = vadd.f32 %v2274, %v1159
        %v2291 = vadd.f32 %v2275, %v1159
        %v2292 = vadd.f32 %v2276, %v1159
        %v2293 = vadd.f32 %v2277, %v1159
        %v2294 = vsel %vm1493, %v2278, -inf
        %2295 = vmax.xlane.f32.xlu0 %v2294
        %v2296 = vpop.xlane.xlu0 %2295
        %v2297 = vsel %vm1493, %v2279, -inf
        %2298 = vmax.xlane.f32.xlu0 %v2297
        %v2299 = vpop.xlane.xlu0 %2298
        %v2300 = vsel %vm1493, %v2280, -inf
        %2301 = vmax.xlane.f32.xlu0 %v2300
        %v2302 = vpop.xlane.xlu0 %2301
        %v2303 = vsel %vm1493, %v2281, -inf
        %2304 = vmax.xlane.f32.xlu0 %v2303
        %v2305 = vpop.xlane.xlu0 %2304
        %v2306 = vsel %vm1493, %v2282, -inf
        %2307 = vmax.xlane.f32.xlu0 %v2306
        %v2308 = vpop.xlane.xlu0 %2307
        %v2309 = vsel %vm1493, %v2283, -inf
        %2310 = vmax.xlane.f32.xlu0 %v2309
        %v2311 = vpop.xlane.xlu0 %2310
        %v2312 = vsel %vm1493, %v2284, -inf
        %2313 = vmax.xlane.f32.xlu0 %v2312
        %v2314 = vpop.xlane.xlu0 %2313
        %v2315 = vsel %vm1493, %v2285, -inf
        %2316 = vmax.xlane.f32.xlu0 %v2315
        %v2317 = vpop.xlane.xlu0 %2316
        %v2318 = vsel %vm1493, %v2286, -inf
        %2319 = vmax.xlane.f32.xlu0 %v2318
        %v2320 = vpop.xlane.xlu0 %2319
        %v2321 = vsel %vm1493, %v2287, -inf
        %2322 = vmax.xlane.f32.xlu0 %v2321
        %v2323 = vpop.xlane.xlu0 %2322
        %v2324 = vsel %vm1493, %v2288, -inf
        %2325 = vmax.xlane.f32.xlu0 %v2324
        %v2326 = vpop.xlane.xlu0 %2325
        %v2327 = vsel %vm1493, %v2289, -inf
        %2328 = vmax.xlane.f32.xlu0 %v2327
        %v2329 = vpop.xlane.xlu0 %2328
        %v2330 = vsel %vm1493, %v2290, -inf
        %2331 = vmax.xlane.f32.xlu0 %v2330
        %v2332 = vpop.xlane.xlu0 %2331
        %v2333 = vsel %vm1493, %v2291, -inf
        %2334 = vmax.xlane.f32.xlu0 %v2333
        %v2335 = vpop.xlane.xlu0 %2334
        %v2336 = vsel %vm1493, %v2292, -inf
        %2337 = vmax.xlane.f32.xlu0 %v2336
        %v2338 = vpop.xlane.xlu0 %2337
        %v2339 = vsel %vm1493, %v2293, -inf
        %2340 = vmax.xlane.f32.xlu0 %v2339
        %v2341 = vpop.xlane.xlu0 %2340
        %v2342 = vsub.f32 %v2278, %v2296
        %v2343 = vsub.f32 %v2279, %v2299
        %v2344 = vsub.f32 %v2280, %v2302
        %v2345 = vsub.f32 %v2281, %v2305
        %v2346 = vsub.f32 %v2282, %v2308
        %v2347 = vsub.f32 %v2283, %v2311
        %v2348 = vsub.f32 %v2284, %v2314
        %v2349 = vsub.f32 %v2285, %v2317
        %v2350 = vsub.f32 %v2286, %v2320
        %v2351 = vsub.f32 %v2287, %v2323
        %v2352 = vsub.f32 %v2288, %v2326
        %v2353 = vsub.f32 %v2289, %v2329
        %v2354 = vsub.f32 %v2290, %v2332
        %v2355 = vsub.f32 %v2291, %v2335
        %v2356 = vsub.f32 %v2292, %v2338
        %v2357 = vsub.f32 %v2293, %v2341
        %v2358 = vmul.f32 %v2342, 1.442695
        %v2359 = vpow.pop %v2358
        %v2360 = vmul.f32 %v2343, 1.442695
        %v2361 = vpow.pop %v2360
        %v2362 = vmul.f32 %v2344, 1.442695
        %v2363 = vpow.pop %v2362
        %v2364 = vmul.f32 %v2345, 1.442695
        %v2365 = vpow.pop %v2364
        %v2366 = vmul.f32 %v2346, 1.442695
        %v2367 = vpow.pop %v2366
        %v2368 = vmul.f32 %v2347, 1.442695
        %v2369 = vpow.pop %v2368
        %v2370 = vmul.f32 %v2348, 1.442695
        %v2371 = vpow.pop %v2370
        %v2372 = vmul.f32 %v2349, 1.442695
        %v2373 = vpow.pop %v2372
        %v2374 = vmul.f32 %v2350, 1.442695
        %v2375 = vpow.pop %v2374
        %v2376 = vmul.f32 %v2351, 1.442695
        %v2377 = vpow.pop %v2376
        %v2378 = vmul.f32 %v2352, 1.442695
        %v2379 = vpow.pop %v2378
        %v2380 = vmul.f32 %v2353, 1.442695
        %v2381 = vpow.pop %v2380
        %v2382 = vmul.f32 %v2354, 1.442695
        %v2383 = vpow.pop %v2382
        %v2384 = vmul.f32 %v2355, 1.442695
        %v2385 = vpow.pop %v2384
        %v2386 = vmul.f32 %v2356, 1.442695
        %v2387 = vpow.pop %v2386
        %v2388 = vmul.f32 %v2357, 1.442695
        %v2389 = vpow.pop %v2388
        %v2390 = vsel %vm1493, %v2359, 0.0
        %2391 = vadd.xlane.f32.xlu0 %v2390
        %v2392 = vpop.xlane.xlu0 %2391
        %v2393 = vsel %vm1493, %v2361, 0.0
        %2394 = vadd.xlane.f32.xlu0 %v2393
        %v2395 = vpop.xlane.xlu0 %2394
        %v2396 = vsel %vm1493, %v2363, 0.0
        %2397 = vadd.xlane.f32.xlu0 %v2396
        %v2398 = vpop.xlane.xlu0 %2397
        %v2399 = vsel %vm1493, %v2365, 0.0
        %2400 = vadd.xlane.f32.xlu0 %v2399
        %v2401 = vpop.xlane.xlu0 %2400
        %v2402 = vsel %vm1493, %v2367, 0.0
        %2403 = vadd.xlane.f32.xlu0 %v2402
        %v2404 = vpop.xlane.xlu0 %2403
        %v2405 = vsel %vm1493, %v2369, 0.0
        %2406 = vadd.xlane.f32.xlu0 %v2405
        %v2407 = vpop.xlane.xlu0 %2406
        %v2408 = vsel %vm1493, %v2371, 0.0
        %2409 = vadd.xlane.f32.xlu0 %v2408
        %v2410 = vpop.xlane.xlu0 %2409
        %v2411 = vsel %vm1493, %v2373, 0.0
        %2412 = vadd.xlane.f32.xlu0 %v2411
        %v2413 = vpop.xlane.xlu0 %2412
        %v2414 = vsel %vm1493, %v2375, 0.0
        %2415 = vadd.xlane.f32.xlu0 %v2414
        %v2416 = vpop.xlane.xlu0 %2415
        %v2417 = vsel %vm1493, %v2377, 0.0
        %2418 = vadd.xlane.f32.xlu0 %v2417
        %v2419 = vpop.xlane.xlu0 %2418
        %v2420 = vsel %vm1493, %v2379, 0.0
        %2421 = vadd.xlane.f32.xlu0 %v2420
        %v2422 = vpop.xlane.xlu0 %2421
        %v2423 = vsel %vm1493, %v2381, 0.0
        %2424 = vadd.xlane.f32.xlu0 %v2423
        %v2425 = vpop.xlane.xlu0 %2424
        %v2426 = vsel %vm1493, %v2383, 0.0
        %2427 = vadd.xlane.f32.xlu0 %v2426
        %v2428 = vpop.xlane.xlu0 %2427
        %v2429 = vsel %vm1493, %v2385, 0.0
        %2430 = vadd.xlane.f32.xlu0 %v2429
        %v2431 = vpop.xlane.xlu0 %2430
        %v2432 = vsel %vm1493, %v2387, 0.0
        %2433 = vadd.xlane.f32.xlu0 %v2432
        %v2434 = vpop.xlane.xlu0 %2433
        %v2435 = vsel %vm1493, %v2389, 0.0
        %2436 = vadd.xlane.f32.xlu0 %v2435
        %v2437 = vpop.xlane.xlu0 %2436
        %v2438 = vrcp.pop %v2392
        %v2439 = vrcp.pop %v2395
        %v2440 = vrcp.pop %v2398
        %v2441 = vrcp.pop %v2401
        %v2442 = vrcp.pop %v2404
        %v2443 = vrcp.pop %v2407
        %v2444 = vrcp.pop %v2410
        %v2445 = vrcp.pop %v2413
        %v2446 = vrcp.pop %v2416
        %v2447 = vrcp.pop %v2419
        %v2448 = vrcp.pop %v2422
        %v2449 = vrcp.pop %v2425
        %v2450 = vrcp.pop %v2428
        %v2451 = vrcp.pop %v2431
        %v2452 = vrcp.pop %v2434
        %v2453 = vrcp.pop %v2437
        %v2454 = vmul.f32 %v2359, %v2438
        %v2455 = vmul.f32 %v2361, %v2439
        %v2456 = vmul.f32 %v2363, %v2440
        %v2457 = vmul.f32 %v2365, %v2441
        %v2458 = vmul.f32 %v2367, %v2442
        %v2459 = vmul.f32 %v2369, %v2443
        %v2460 = vmul.f32 %v2371, %v2444
        %v2461 = vmul.f32 %v2373, %v2445
        %v2462 = vmul.f32 %v2375, %v2446
        %v2463 = vmul.f32 %v2377, %v2447
        %v2464 = vmul.f32 %v2379, %v2448
        %v2465 = vmul.f32 %v2381, %v2449
        %v2466 = vmul.f32 %v2383, %v2450
        %v2467 = vmul.f32 %v2385, %v2451
        %v2468 = vmul.f32 %v2387, %v2452
        %v2469 = vmul.f32 %v2389, %v2453
        %2470 = vrot.lane.b32.xlu0 %v1109, 56
        %v2471 = vpop.permute.xlu0 %2470
        %2472 = vrot.lane.b32.xlu0 %v1112, 56
        %v2473 = vpop.permute.xlu0 %2472
        %v2477 = vsel %vm1493, %v2454, 0
        %v2480 = vsel %vm1493, %v2455, 0
        %2482 = vmatpush.msra.mxu0 0.0
        %2483 = vmatpush.msra.mxu0 0.0
        %2484 = vmatpush.msra.mxu0 0.0
        %2485 = vmatpush.msra.mxu0 0.0
        %2486 = vmatpush.msra.mxu0 0.0
        %2487 = vmatpush.msra.mxu0 0.0
        %2488 = vmatpush.msra.mxu0 0.0
        %2489 = vmatpush.msra.mxu0 0.0
        %2490 = vmatpush.msra.mxu0 0.0
        %2491 = vmatpush.msra.mxu0 0.0
        %2492 = vmatpush.msra.mxu0 0.0
        %2493 = vmatpush.msra.mxu0 0.0
        %2494 = vmatpush.msra.mxu0 0.0
        %2495 = vmatpush.msra.mxu0 0.0
        %2496 = vmatpush.msra.mxu0 %v2473
        %2497 = vmatpush.msra.mxu0 %v2471
        %2498 = vmatmul.f32.gmra.mxu0 %v2477
        %v2499 = vpop.f32.mrf.mxu0
        %v2500 = vadd.f32 0.0, %v2499
        %2501 = vmatmul.f32.gmra.mxu0 %v2480
        %v2502 = vpop.f32.mrf.mxu0
        %v2503 = vadd.f32 0.0, %v2502
        %2504 = vdwg.mxu0
        %2505 = vrot.lane.b32.xlu0 %v1115, 56
        %v2506 = vpop.permute.xlu0 %2505
        %2507 = vrot.lane.b32.xlu0 %v1118, 56
        %v2508 = vpop.permute.xlu0 %2507
        %v2512 = vsel %vm1493, %v2456, 0
        %v2515 = vsel %vm1493, %v2457, 0
        %2517 = vmatpush.msra.mxu0 0.0
        %2518 = vmatpush.msra.mxu0 0.0
        %2519 = vmatpush.msra.mxu0 0.0
        %2520 = vmatpush.msra.mxu0 0.0
        %2521 = vmatpush.msra.mxu0 0.0
        %2522 = vmatpush.msra.mxu0 0.0
        %2523 = vmatpush.msra.mxu0 0.0
        %2524 = vmatpush.msra.mxu0 0.0
        %2525 = vmatpush.msra.mxu0 0.0
        %2526 = vmatpush.msra.mxu0 0.0
        %2527 = vmatpush.msra.mxu0 0.0
        %2528 = vmatpush.msra.mxu0 0.0
        %2529 = vmatpush.msra.mxu0 0.0
        %2530 = vmatpush.msra.mxu0 0.0
        %2531 = vmatpush.msra.mxu0 %v2508
        %2532 = vmatpush.msra.mxu0 %v2506
        %2533 = vmatmul.f32.gmra.mxu0 %v2512
        %v2534 = vpop.f32.mrf.mxu0
        %v2535 = vadd.f32 0.0, %v2534
        %2536 = vmatmul.f32.gmra.mxu0 %v2515
        %v2537 = vpop.f32.mrf.mxu0
        %v2538 = vadd.f32 0.0, %v2537
        %2539 = vdwg.mxu0
        %2540 = vrot.lane.b32.xlu0 %v1121, 56
        %v2541 = vpop.permute.xlu0 %2540
        %2542 = vrot.lane.b32.xlu0 %v1124, 56
        %v2543 = vpop.permute.xlu0 %2542
        %v2547 = vsel %vm1493, %v2458, 0
        %v2550 = vsel %vm1493, %v2459, 0
        %2552 = vmatpush.msra.mxu0 0.0
        %2553 = vmatpush.msra.mxu0 0.0
        %2554 = vmatpush.msra.mxu0 0.0
        %2555 = vmatpush.msra.mxu0 0.0
        %2556 = vmatpush.msra.mxu0 0.0
        %2557 = vmatpush.msra.mxu0 0.0
        %2558 = vmatpush.msra.mxu0 0.0
        %2559 = vmatpush.msra.mxu0 0.0
        %2560 = vmatpush.msra.mxu0 0.0
        %2561 = vmatpush.msra.mxu0 0.0
        %2562 = vmatpush.msra.mxu0 0.0
        %2563 = vmatpush.msra.mxu0 0.0
        %2564 = vmatpush.msra.mxu0 0.0
        %2565 = vmatpush.msra.mxu0 0.0
        %2566 = vmatpush.msra.mxu0 %v2543
        %2567 = vmatpush.msra.mxu0 %v2541
        %2568 = vmatmul.f32.gmra.mxu0 %v2547
        %v2569 = vpop.f32.mrf.mxu0
        %v2570 = vadd.f32 0.0, %v2569
        %2571 = vmatmul.f32.gmra.mxu0 %v2550
        %v2572 = vpop.f32.mrf.mxu0
        %v2573 = vadd.f32 0.0, %v2572
        %2574 = vdwg.mxu0
        %2575 = vrot.lane.b32.xlu0 %v1127, 56
        %v2576 = vpop.permute.xlu0 %2575
        %2577 = vrot.lane.b32.xlu0 %v1130, 56
        %v2578 = vpop.permute.xlu0 %2577
        %v2582 = vsel %vm1493, %v2460, 0
        %v2585 = vsel %vm1493, %v2461, 0
        %2587 = vmatpush.msra.mxu0 0.0
        %2588 = vmatpush.msra.mxu0 0.0
        %2589 = vmatpush.msra.mxu0 0.0
        %2590 = vmatpush.msra.mxu0 0.0
        %2591 = vmatpush.msra.mxu0 0.0
        %2592 = vmatpush.msra.mxu0 0.0
        %2593 = vmatpush.msra.mxu0 0.0
        %2594 = vmatpush.msra.mxu0 0.0
        %2595 = vmatpush.msra.mxu0 0.0
        %2596 = vmatpush.msra.mxu0 0.0
        %2597 = vmatpush.msra.mxu0 0.0
        %2598 = vmatpush.msra.mxu0 0.0
        %2599 = vmatpush.msra.mxu0 0.0
        %2600 = vmatpush.msra.mxu0 0.0
        %2601 = vmatpush.msra.mxu0 %v2578
        %2602 = vmatpush.msra.mxu0 %v2576
        %2603 = vmatmul.f32.gmra.mxu0 %v2582
        %v2604 = vpop.f32.mrf.mxu0
        %v2605 = vadd.f32 0.0, %v2604
        %2606 = vmatmul.f32.gmra.mxu0 %v2585
        %v2607 = vpop.f32.mrf.mxu0
        %v2608 = vadd.f32 0.0, %v2607
        %2609 = vdwg.mxu0
        %2610 = vrot.lane.b32.xlu0 %v1133, 56
        %v2611 = vpop.permute.xlu0 %2610
        %2612 = vrot.lane.b32.xlu0 %v1136, 56
        %v2613 = vpop.permute.xlu0 %2612
        %v2617 = vsel %vm1493, %v2462, 0
        %v2620 = vsel %vm1493, %v2463, 0
        %2622 = vmatpush.msra.mxu0 0.0
        %2623 = vmatpush.msra.mxu0 0.0
        %2624 = vmatpush.msra.mxu0 0.0
        %2625 = vmatpush.msra.mxu0 0.0
        %2626 = vmatpush.msra.mxu0 0.0
        %2627 = vmatpush.msra.mxu0 0.0
        %2628 = vmatpush.msra.mxu0 0.0
        %2629 = vmatpush.msra.mxu0 0.0
        %2630 = vmatpush.msra.mxu0 0.0
        %2631 = vmatpush.msra.mxu0 0.0
        %2632 = vmatpush.msra.mxu0 0.0
        %2633 = vmatpush.msra.mxu0 0.0
        %2634 = vmatpush.msra.mxu0 0.0
        %2635 = vmatpush.msra.mxu0 0.0
        %2636 = vmatpush.msra.mxu0 %v2613
        %2637 = vmatpush.msra.mxu0 %v2611
        %2638 = vmatmul.f32.gmra.mxu0 %v2617
        %v2639 = vpop.f32.mrf.mxu0
        %v2640 = vadd.f32 0.0, %v2639
        %2641 = vmatmul.f32.gmra.mxu0 %v2620
        %v2642 = vpop.f32.mrf.mxu0
        %v2643 = vadd.f32 0.0, %v2642
        %2644 = vdwg.mxu0
        %2645 = vrot.lane.b32.xlu0 %v1139, 56
        %v2646 = vpop.permute.xlu0 %2645
        %2647 = vrot.lane.b32.xlu0 %v1142, 56
        %v2648 = vpop.permute.xlu0 %2647
        %v2652 = vsel %vm1493, %v2464, 0
        %v2655 = vsel %vm1493, %v2465, 0
        %2657 = vmatpush.msra.mxu0 0.0
        %2658 = vmatpush.msra.mxu0 0.0
        %2659 = vmatpush.msra.mxu0 0.0
        %2660 = vmatpush.msra.mxu0 0.0
        %2661 = vmatpush.msra.mxu0 0.0
        %2662 = vmatpush.msra.mxu0 0.0
        %2663 = vmatpush.msra.mxu0 0.0
        %2664 = vmatpush.msra.mxu0 0.0
        %2665 = vmatpush.msra.mxu0 0.0
        %2666 = vmatpush.msra.mxu0 0.0
        %2667 = vmatpush.msra.mxu0 0.0
        %2668 = vmatpush.msra.mxu0 0.0
        %2669 = vmatpush.msra.mxu0 0.0
        %2670 = vmatpush.msra.mxu0 0.0
        %2671 = vmatpush.msra.mxu0 %v2648
        %2672 = vmatpush.msra.mxu0 %v2646
        %2673 = vmatmul.f32.gmra.mxu0 %v2652
        %v2674 = vpop.f32.mrf.mxu0
        %v2675 = vadd.f32 0.0, %v2674
        %2676 = vmatmul.f32.gmra.mxu0 %v2655
        %v2677 = vpop.f32.mrf.mxu0
        %v2678 = vadd.f32 0.0, %v2677
        %2679 = vdwg.mxu0
        %2680 = vrot.lane.b32.xlu0 %v1145, 56
        %v2681 = vpop.permute.xlu0 %2680
        %2682 = vrot.lane.b32.xlu0 %v1148, 56
        %v2683 = vpop.permute.xlu0 %2682
        %v2687 = vsel %vm1493, %v2466, 0
        %v2690 = vsel %vm1493, %v2467, 0
        %2692 = vmatpush.msra.mxu0 0.0
        %2693 = vmatpush.msra.mxu0 0.0
        %2694 = vmatpush.msra.mxu0 0.0
        %2695 = vmatpush.msra.mxu0 0.0
        %2696 = vmatpush.msra.mxu0 0.0
        %2697 = vmatpush.msra.mxu0 0.0
        %2698 = vmatpush.msra.mxu0 0.0
        %2699 = vmatpush.msra.mxu0 0.0
        %2700 = vmatpush.msra.mxu0 0.0
        %2701 = vmatpush.msra.mxu0 0.0
        %2702 = vmatpush.msra.mxu0 0.0
        %2703 = vmatpush.msra.mxu0 0.0
        %2704 = vmatpush.msra.mxu0 0.0
        %2705 = vmatpush.msra.mxu0 0.0
        %2706 = vmatpush.msra.mxu0 %v2683
        %2707 = vmatpush.msra.mxu0 %v2681
        %2708 = vmatmul.f32.gmra.mxu0 %v2687
        %v2709 = vpop.f32.mrf.mxu0
        %v2710 = vadd.f32 0.0, %v2709
        %2711 = vmatmul.f32.gmra.mxu0 %v2690
        %v2712 = vpop.f32.mrf.mxu0
        %v2713 = vadd.f32 0.0, %v2712
        %2714 = vdwg.mxu0
        %2715 = vrot.lane.b32.xlu0 %v1151, 56
        %v2716 = vpop.permute.xlu0 %2715
        %2717 = vrot.lane.b32.xlu0 %v1154, 56
        %v2718 = vpop.permute.xlu0 %2717
        %v2722 = vsel %vm1493, %v2468, 0
        %v2725 = vsel %vm1493, %v2469, 0
        %2727 = vmatpush.msra.mxu0 0.0
        %2728 = vmatpush.msra.mxu0 0.0
        %2729 = vmatpush.msra.mxu0 0.0
        %2730 = vmatpush.msra.mxu0 0.0
        %2731 = vmatpush.msra.mxu0 0.0
        %2732 = vmatpush.msra.mxu0 0.0
        %2733 = vmatpush.msra.mxu0 0.0
        %2734 = vmatpush.msra.mxu0 0.0
        %2735 = vmatpush.msra.mxu0 0.0
        %2736 = vmatpush.msra.mxu0 0.0
        %2737 = vmatpush.msra.mxu0 0.0
        %2738 = vmatpush.msra.mxu0 0.0
        %2739 = vmatpush.msra.mxu0 0.0
        %2740 = vmatpush.msra.mxu0 0.0
        %2741 = vmatpush.msra.mxu0 %v2718
        %2742 = vmatpush.msra.mxu0 %v2716
        %2743 = vmatmul.f32.gmra.mxu0 %v2722
        %v2744 = vpop.f32.mrf.mxu0
        %v2745 = vadd.f32 0.0, %v2744
        %2746 = vmatmul.f32.gmra.mxu0 %v2725
        %v2747 = vpop.f32.mrf.mxu0
        %v2748 = vadd.f32 0.0, %v2747
        %2749 = vdwg.mxu0
        %v2751 = vsel %vm1170, %v2500, 0
        %v2754 = vsel %vm1170, %v2503, 0
        %v2757 = vsel %vm1170, %v2535, 0
        %v2760 = vsel %vm1170, %v2538, 0
        %v2763 = vsel %vm1170, %v2570, 0
        %v2766 = vsel %vm1170, %v2573, 0
        %v2769 = vsel %vm1170, %v2605, 0
        %v2772 = vsel %vm1170, %v2608, 0
        %v2775 = vsel %vm1170, %v2640, 0
        %v2778 = vsel %vm1170, %v2643, 0
        %v2781 = vsel %vm1170, %v2675, 0
        %v2784 = vsel %vm1170, %v2678, 0
        %v2787 = vsel %vm1170, %v2710, 0
        %v2790 = vsel %vm1170, %v2713, 0
        %v2793 = vsel %vm1170, %v2745, 0
        %v2796 = vsel %vm1170, %v2748, 0
        %2798 = vmatpush.msra.mxu0 0.0
        %2799 = vmatpush.msra.mxu0 0.0
        %2800 = vmatpush.msra.mxu0 0.0
        %2801 = vmatpush.msra.mxu0 0.0
        %2802 = vmatpush.msra.mxu0 0.0
        %2803 = vmatpush.msra.mxu0 0.0
        %2804 = vmatpush.msra.mxu0 0.0
        %2805 = vmatpush.msra.mxu0 0.0
        %2806 = vmatpush.msra.mxu0 0.0
        %2807 = vmatpush.msra.mxu0 0.0
        %2808 = vmatpush.msra.mxu0 0.0
        %2809 = vmatpush.msra.mxu0 0.0
        %2810 = vmatpush.msra.mxu0 0.0
        %2811 = vmatpush.msra.mxu0 0.0
        %2812 = vmatpush.msra.mxu0 0.0
        %2813 = vmatpush.msra.mxu0 %v1161
        %2814 = vmatmul.f32.gmra.mxu0 %v2751
        %v2815 = vpop.f32.mrf.mxu0
        %v2816 = vadd.f32 0.0, %v2815
        %2817 = vmatmul.f32.gmra.mxu0 %v2754
        %v2818 = vpop.f32.mrf.mxu0
        %v2819 = vadd.f32 0.0, %v2818
        %2820 = vmatmul.f32.gmra.mxu0 %v2757
        %v2821 = vpop.f32.mrf.mxu0
        %v2822 = vadd.f32 0.0, %v2821
        %2823 = vmatmul.f32.gmra.mxu0 %v2760
        %v2824 = vpop.f32.mrf.mxu0
        %v2825 = vadd.f32 0.0, %v2824
        %2826 = vmatmul.f32.gmra.mxu0 %v2763
        %v2827 = vpop.f32.mrf.mxu0
        %v2828 = vadd.f32 0.0, %v2827
        %2829 = vmatmul.f32.gmra.mxu0 %v2766
        %v2830 = vpop.f32.mrf.mxu0
        %v2831 = vadd.f32 0.0, %v2830
        %2832 = vmatmul.f32.gmra.mxu0 %v2769
        %v2833 = vpop.f32.mrf.mxu0
        %v2834 = vadd.f32 0.0, %v2833
        %2835 = vmatmul.f32.gmra.mxu0 %v2772
        %v2836 = vpop.f32.mrf.mxu0
        %v2837 = vadd.f32 0.0, %v2836
        %2838 = vmatmul.f32.gmra.mxu0 %v2775
        %v2839 = vpop.f32.mrf.mxu0
        %v2840 = vadd.f32 0.0, %v2839
        %2841 = vmatmul.f32.gmra.mxu0 %v2778
        %v2842 = vpop.f32.mrf.mxu0
        %v2843 = vadd.f32 0.0, %v2842
        %2844 = vmatmul.f32.gmra.mxu0 %v2781
        %v2845 = vpop.f32.mrf.mxu0
        %v2846 = vadd.f32 0.0, %v2845
        %2847 = vmatmul.f32.gmra.mxu0 %v2784
        %v2848 = vpop.f32.mrf.mxu0
        %v2849 = vadd.f32 0.0, %v2848
        %2850 = vmatmul.f32.gmra.mxu0 %v2787
        %v2851 = vpop.f32.mrf.mxu0
        %v2852 = vadd.f32 0.0, %v2851
        %2853 = vmatmul.f32.gmra.mxu0 %v2790
        %v2854 = vpop.f32.mrf.mxu0
        %v2855 = vadd.f32 0.0, %v2854
        %2856 = vmatmul.f32.gmra.mxu0 %v2793
        %v2857 = vpop.f32.mrf.mxu0
        %v2858 = vadd.f32 0.0, %v2857
        %2859 = vmatmul.f32.gmra.mxu0 %v2796
        %v2860 = vpop.f32.mrf.mxu0
        %v2861 = vadd.f32 0.0, %v2860
        %2862 = vdwg.mxu0
        %v2864 = vsel %vm1170, %v1700, 0
        %v2867 = vsel %vm1170, %v1703, 0
        %v2870 = vsel %vm1170, %v1735, 0
        %v2873 = vsel %vm1170, %v1738, 0
        %v2876 = vsel %vm1170, %v1770, 0
        %v2879 = vsel %vm1170, %v1773, 0
        %v2882 = vsel %vm1170, %v1805, 0
        %v2885 = vsel %vm1170, %v1808, 0
        %v2888 = vsel %vm1170, %v1840, 0
        %v2891 = vsel %vm1170, %v1843, 0
        %v2894 = vsel %vm1170, %v1875, 0
        %v2897 = vsel %vm1170, %v1878, 0
        %v2900 = vsel %vm1170, %v1910, 0
        %v2903 = vsel %vm1170, %v1913, 0
        %v2906 = vsel %vm1170, %v1945, 0
        %v2909 = vsel %vm1170, %v1948, 0
        %2911 = vmatpush.msra.mxu0 0.0
        %2912 = vmatpush.msra.mxu0 0.0
        %2913 = vmatpush.msra.mxu0 0.0
        %2914 = vmatpush.msra.mxu0 0.0
        %2915 = vmatpush.msra.mxu0 0.0
        %2916 = vmatpush.msra.mxu0 0.0
        %2917 = vmatpush.msra.mxu0 0.0
        %2918 = vmatpush.msra.mxu0 0.0
        %2919 = vmatpush.msra.mxu0 0.0
        %2920 = vmatpush.msra.mxu0 0.0
        %2921 = vmatpush.msra.mxu0 0.0
        %2922 = vmatpush.msra.mxu0 0.0
        %2923 = vmatpush.msra.mxu0 0.0
        %2924 = vmatpush.msra.mxu0 0.0
        %2925 = vmatpush.msra.mxu0 0.0
        %2926 = vmatpush.msra.mxu0 %v1160
        %2927 = vmatmul.f32.gmra.mxu0 %v2864
        %v2928 = vpop.f32.mrf.mxu0
        %v2929 = vadd.f32 %v2816, %v2928
        %2930 = vmatmul.f32.gmra.mxu0 %v2867
        %v2931 = vpop.f32.mrf.mxu0
        %v2932 = vadd.f32 %v2819, %v2931
        %2933 = vmatmul.f32.gmra.mxu0 %v2870
        %v2934 = vpop.f32.mrf.mxu0
        %v2935 = vadd.f32 %v2822, %v2934
        %2936 = vmatmul.f32.gmra.mxu0 %v2873
        %v2937 = vpop.f32.mrf.mxu0
        %v2938 = vadd.f32 %v2825, %v2937
        %2939 = vmatmul.f32.gmra.mxu0 %v2876
        %v2940 = vpop.f32.mrf.mxu0
        %v2941 = vadd.f32 %v2828, %v2940
        %2942 = vmatmul.f32.gmra.mxu0 %v2879
        %v2943 = vpop.f32.mrf.mxu0
        %v2944 = vadd.f32 %v2831, %v2943
        %2945 = vmatmul.f32.gmra.mxu0 %v2882
        %v2946 = vpop.f32.mrf.mxu0
        %v2947 = vadd.f32 %v2834, %v2946
        %2948 = vmatmul.f32.gmra.mxu0 %v2885
        %v2949 = vpop.f32.mrf.mxu0
        %v2950 = vadd.f32 %v2837, %v2949
        %2951 = vmatmul.f32.gmra.mxu0 %v2888
        %v2952 = vpop.f32.mrf.mxu0
        %v2953 = vadd.f32 %v2840, %v2952
        %2954 = vmatmul.f32.gmra.mxu0 %v2891
        %v2955 = vpop.f32.mrf.mxu0
        %v2956 = vadd.f32 %v2843, %v2955
        %2957 = vmatmul.f32.gmra.mxu0 %v2894
        %v2958 = vpop.f32.mrf.mxu0
        %v2959 = vadd.f32 %v2846, %v2958
        %2960 = vmatmul.f32.gmra.mxu0 %v2897
        %v2961 = vpop.f32.mrf.mxu0
        %v2962 = vadd.f32 %v2849, %v2961
        %2963 = vmatmul.f32.gmra.mxu0 %v2900
        %v2964 = vpop.f32.mrf.mxu0
        %v2965 = vadd.f32 %v2852, %v2964
        %2966 = vmatmul.f32.gmra.mxu0 %v2903
        %v2967 = vpop.f32.mrf.mxu0
        %v2968 = vadd.f32 %v2855, %v2967
        %2969 = vmatmul.f32.gmra.mxu0 %v2906
        %v2970 = vpop.f32.mrf.mxu0
        %v2971 = vadd.f32 %v2858, %v2970
        %2972 = vmatmul.f32.gmra.mxu0 %v2909
        %v2973 = vpop.f32.mrf.mxu0
        %v2974 = vadd.f32 %v2861, %v2973
        %2975 = vdwg.mxu0
        %2976 = vrot.lane.b32.xlu0 %v1109, 112
        %v2977 = vpop.permute.xlu0 %2976
        %2978 = vrot.lane.b32.xlu0 %v1112, 112
        %v2979 = vpop.permute.xlu0 %2978
        %2980 = vrot.lane.b32.xlu0 %v1109, 80
        %v2981 = vpop.permute.xlu0 %2980
        %2982 = vrot.lane.b32.xlu0 %v1112, 80
        %v2983 = vpop.permute.xlu0 %2982
        %v2984 = vsel %vm1170, %v2977, 0
        %v2986 = vsel %vm1170, %v2979, 0
        %v2988 = vsel %vm1170, %v2981, 0
        %v2990 = vsel %vm1170, %v2983, 0
        %2992 = vmatpush.xpose.msra.mxu0 0.0
        %2993 = vmatpush.xpose.msra.mxu0 0.0
        %2994 = vmatpush.xpose.msra.mxu0 0.0
        %2995 = vmatpush.xpose.msra.mxu0 0.0
        %2996 = vmatpush.xpose.msra.mxu0 0.0
        %2997 = vmatpush.xpose.msra.mxu0 0.0
        %2998 = vmatpush.xpose.msra.mxu0 0.0
        %2999 = vmatpush.xpose.msra.mxu0 0.0
        %3000 = vmatpush.xpose.msra.mxu0 0.0
        %3001 = vmatpush.xpose.msra.mxu0 0.0
        %3002 = vmatpush.xpose.msra.mxu0 0.0
        %3003 = vmatpush.xpose.msra.mxu0 0.0
        %3004 = vmatpush.xpose.msra.mxu0 0.0
        %3005 = vmatpush.xpose.msra.mxu0 0.0
        %3006 = vmatpush.xpose.msra.mxu0 %v2990
        %3007 = vmatpush.xpose.msra.mxu0 %v2988
        %3008 = vmatmul.f32.gmra.mxu0 %v2984
        %v3009 = vpop.f32.mrf.mxu0
        %v3010 = vadd.f32 0.0, %v3009
        %3011 = vmatmul.f32.gmra.mxu0 %v2986
        %v3012 = vpop.f32.mrf.mxu0
        %v3013 = vadd.f32 0.0, %v3012
        %3014 = vdwg.mxu0
        %3015 = vrot.lane.b32.xlu0 %v1115, 112
        %v3016 = vpop.permute.xlu0 %3015
        %3017 = vrot.lane.b32.xlu0 %v1118, 112
        %v3018 = vpop.permute.xlu0 %3017
        %3019 = vrot.lane.b32.xlu0 %v1115, 80
        %v3020 = vpop.permute.xlu0 %3019
        %3021 = vrot.lane.b32.xlu0 %v1118, 80
        %v3022 = vpop.permute.xlu0 %3021
        %v3023 = vsel %vm1170, %v3016, 0
        %v3025 = vsel %vm1170, %v3018, 0
        %v3027 = vsel %vm1170, %v3020, 0
        %v3029 = vsel %vm1170, %v3022, 0
        %3031 = vmatpush.xpose.msra.mxu0 0.0
        %3032 = vmatpush.xpose.msra.mxu0 0.0
        %3033 = vmatpush.xpose.msra.mxu0 0.0
        %3034 = vmatpush.xpose.msra.mxu0 0.0
        %3035 = vmatpush.xpose.msra.mxu0 0.0
        %3036 = vmatpush.xpose.msra.mxu0 0.0
        %3037 = vmatpush.xpose.msra.mxu0 0.0
        %3038 = vmatpush.xpose.msra.mxu0 0.0
        %3039 = vmatpush.xpose.msra.mxu0 0.0
        %3040 = vmatpush.xpose.msra.mxu0 0.0
        %3041 = vmatpush.xpose.msra.mxu0 0.0
        %3042 = vmatpush.xpose.msra.mxu0 0.0
        %3043 = vmatpush.xpose.msra.mxu0 0.0
        %3044 = vmatpush.xpose.msra.mxu0 0.0
        %3045 = vmatpush.xpose.msra.mxu0 %v3029
        %3046 = vmatpush.xpose.msra.mxu0 %v3027
        %3047 = vmatmul.f32.gmra.mxu0 %v3023
        %v3048 = vpop.f32.mrf.mxu0
        %v3049 = vadd.f32 0.0, %v3048
        %3050 = vmatmul.f32.gmra.mxu0 %v3025
        %v3051 = vpop.f32.mrf.mxu0
        %v3052 = vadd.f32 0.0, %v3051
        %3053 = vdwg.mxu0
        %3054 = vrot.lane.b32.xlu0 %v1121, 112
        %v3055 = vpop.permute.xlu0 %3054
        %3056 = vrot.lane.b32.xlu0 %v1124, 112
        %v3057 = vpop.permute.xlu0 %3056
        %3058 = vrot.lane.b32.xlu0 %v1121, 80
        %v3059 = vpop.permute.xlu0 %3058
        %3060 = vrot.lane.b32.xlu0 %v1124, 80
        %v3061 = vpop.permute.xlu0 %3060
        %v3062 = vsel %vm1170, %v3055, 0
        %v3064 = vsel %vm1170, %v3057, 0
        %v3066 = vsel %vm1170, %v3059, 0
        %v3068 = vsel %vm1170, %v3061, 0
        %3070 = vmatpush.xpose.msra.mxu0 0.0
        %3071 = vmatpush.xpose.msra.mxu0 0.0
        %3072 = vmatpush.xpose.msra.mxu0 0.0
        %3073 = vmatpush.xpose.msra.mxu0 0.0
        %3074 = vmatpush.xpose.msra.mxu0 0.0
        %3075 = vmatpush.xpose.msra.mxu0 0.0
        %3076 = vmatpush.xpose.msra.mxu0 0.0
        %3077 = vmatpush.xpose.msra.mxu0 0.0
        %3078 = vmatpush.xpose.msra.mxu0 0.0
        %3079 = vmatpush.xpose.msra.mxu0 0.0
        %3080 = vmatpush.xpose.msra.mxu0 0.0
        %3081 = vmatpush.xpose.msra.mxu0 0.0
        %3082 = vmatpush.xpose.msra.mxu0 0.0
        %3083 = vmatpush.xpose.msra.mxu0 0.0
        %3084 = vmatpush.xpose.msra.mxu0 %v3068
        %3085 = vmatpush.xpose.msra.mxu0 %v3066
        %3086 = vmatmul.f32.gmra.mxu0 %v3062
        %v3087 = vpop.f32.mrf.mxu0
        %v3088 = vadd.f32 0.0, %v3087
        %3089 = vmatmul.f32.gmra.mxu0 %v3064
        %v3090 = vpop.f32.mrf.mxu0
        %v3091 = vadd.f32 0.0, %v3090
        %3092 = vdwg.mxu0
        %3093 = vrot.lane.b32.xlu0 %v1127, 112
        %v3094 = vpop.permute.xlu0 %3093
        %3095 = vrot.lane.b32.xlu0 %v1130, 112
        %v3096 = vpop.permute.xlu0 %3095
        %3097 = vrot.lane.b32.xlu0 %v1127, 80
        %v3098 = vpop.permute.xlu0 %3097
        %3099 = vrot.lane.b32.xlu0 %v1130, 80
        %v3100 = vpop.permute.xlu0 %3099
        %v3101 = vsel %vm1170, %v3094, 0
        %v3103 = vsel %vm1170, %v3096, 0
        %v3105 = vsel %vm1170, %v3098, 0
        %v3107 = vsel %vm1170, %v3100, 0
        %3109 = vmatpush.xpose.msra.mxu0 0.0
        %3110 = vmatpush.xpose.msra.mxu0 0.0
        %3111 = vmatpush.xpose.msra.mxu0 0.0
        %3112 = vmatpush.xpose.msra.mxu0 0.0
        %3113 = vmatpush.xpose.msra.mxu0 0.0
        %3114 = vmatpush.xpose.msra.mxu0 0.0
        %3115 = vmatpush.xpose.msra.mxu0 0.0
        %3116 = vmatpush.xpose.msra.mxu0 0.0
        %3117 = vmatpush.xpose.msra.mxu0 0.0
        %3118 = vmatpush.xpose.msra.mxu0 0.0
        %3119 = vmatpush.xpose.msra.mxu0 0.0
        %3120 = vmatpush.xpose.msra.mxu0 0.0
        %3121 = vmatpush.xpose.msra.mxu0 0.0
        %3122 = vmatpush.xpose.msra.mxu0 0.0
        %3123 = vmatpush.xpose.msra.mxu0 %v3107
        %3124 = vmatpush.xpose.msra.mxu0 %v3105
        %3125 = vmatmul.f32.gmra.mxu0 %v3101
        %v3126 = vpop.f32.mrf.mxu0
        %v3127 = vadd.f32 0.0, %v3126
        %3128 = vmatmul.f32.gmra.mxu0 %v3103
        %v3129 = vpop.f32.mrf.mxu0
        %v3130 = vadd.f32 0.0, %v3129
        %3131 = vdwg.mxu0
        %3132 = vrot.lane.b32.xlu0 %v1133, 112
        %v3133 = vpop.permute.xlu0 %3132
        %3134 = vrot.lane.b32.xlu0 %v1136, 112
        %v3135 = vpop.permute.xlu0 %3134
        %3136 = vrot.lane.b32.xlu0 %v1133, 80
        %v3137 = vpop.permute.xlu0 %3136
        %3138 = vrot.lane.b32.xlu0 %v1136, 80
        %v3139 = vpop.permute.xlu0 %3138
        %v3140 = vsel %vm1170, %v3133, 0
        %v3142 = vsel %vm1170, %v3135, 0
        %v3144 = vsel %vm1170, %v3137, 0
        %v3146 = vsel %vm1170, %v3139, 0
        %3148 = vmatpush.xpose.msra.mxu0 0.0
        %3149 = vmatpush.xpose.msra.mxu0 0.0
        %3150 = vmatpush.xpose.msra.mxu0 0.0
        %3151 = vmatpush.xpose.msra.mxu0 0.0
        %3152 = vmatpush.xpose.msra.mxu0 0.0
        %3153 = vmatpush.xpose.msra.mxu0 0.0
        %3154 = vmatpush.xpose.msra.mxu0 0.0
        %3155 = vmatpush.xpose.msra.mxu0 0.0
        %3156 = vmatpush.xpose.msra.mxu0 0.0
        %3157 = vmatpush.xpose.msra.mxu0 0.0
        %3158 = vmatpush.xpose.msra.mxu0 0.0
        %3159 = vmatpush.xpose.msra.mxu0 0.0
        %3160 = vmatpush.xpose.msra.mxu0 0.0
        %3161 = vmatpush.xpose.msra.mxu0 0.0
        %3162 = vmatpush.xpose.msra.mxu0 %v3146
        %3163 = vmatpush.xpose.msra.mxu0 %v3144
        %3164 = vmatmul.f32.gmra.mxu0 %v3140
        %v3165 = vpop.f32.mrf.mxu0
        %v3166 = vadd.f32 0.0, %v3165
        %3167 = vmatmul.f32.gmra.mxu0 %v3142
        %v3168 = vpop.f32.mrf.mxu0
        %v3169 = vadd.f32 0.0, %v3168
        %3170 = vdwg.mxu0
        %3171 = vrot.lane.b32.xlu0 %v1139, 112
        %v3172 = vpop.permute.xlu0 %3171
        %3173 = vrot.lane.b32.xlu0 %v1142, 112
        %v3174 = vpop.permute.xlu0 %3173
        %3175 = vrot.lane.b32.xlu0 %v1139, 80
        %v3176 = vpop.permute.xlu0 %3175
        %3177 = vrot.lane.b32.xlu0 %v1142, 80
        %v3178 = vpop.permute.xlu0 %3177
        %v3179 = vsel %vm1170, %v3172, 0
        %v3181 = vsel %vm1170, %v3174, 0
        %v3183 = vsel %vm1170, %v3176, 0
        %v3185 = vsel %vm1170, %v3178, 0
        %3187 = vmatpush.xpose.msra.mxu0 0.0
        %3188 = vmatpush.xpose.msra.mxu0 0.0
        %3189 = vmatpush.xpose.msra.mxu0 0.0
        %3190 = vmatpush.xpose.msra.mxu0 0.0
        %3191 = vmatpush.xpose.msra.mxu0 0.0
        %3192 = vmatpush.xpose.msra.mxu0 0.0
        %3193 = vmatpush.xpose.msra.mxu0 0.0
        %3194 = vmatpush.xpose.msra.mxu0 0.0
        %3195 = vmatpush.xpose.msra.mxu0 0.0
        %3196 = vmatpush.xpose.msra.mxu0 0.0
        %3197 = vmatpush.xpose.msra.mxu0 0.0
        %3198 = vmatpush.xpose.msra.mxu0 0.0
        %3199 = vmatpush.xpose.msra.mxu0 0.0
        %3200 = vmatpush.xpose.msra.mxu0 0.0
        %3201 = vmatpush.xpose.msra.mxu0 %v3185
        %3202 = vmatpush.xpose.msra.mxu0 %v3183
        %3203 = vmatmul.f32.gmra.mxu0 %v3179
        %v3204 = vpop.f32.mrf.mxu0
        %v3205 = vadd.f32 0.0, %v3204
        %3206 = vmatmul.f32.gmra.mxu0 %v3181
        %v3207 = vpop.f32.mrf.mxu0
        %v3208 = vadd.f32 0.0, %v3207
        %3209 = vdwg.mxu0
        %3210 = vrot.lane.b32.xlu0 %v1145, 112
        %v3211 = vpop.permute.xlu0 %3210
        %3212 = vrot.lane.b32.xlu0 %v1148, 112
        %v3213 = vpop.permute.xlu0 %3212
        %3214 = vrot.lane.b32.xlu0 %v1145, 80
        %v3215 = vpop.permute.xlu0 %3214
        %3216 = vrot.lane.b32.xlu0 %v1148, 80
        %v3217 = vpop.permute.xlu0 %3216
        %v3218 = vsel %vm1170, %v3211, 0
        %v3220 = vsel %vm1170, %v3213, 0
        %v3222 = vsel %vm1170, %v3215, 0
        %v3224 = vsel %vm1170, %v3217, 0
        %3226 = vmatpush.xpose.msra.mxu0 0.0
        %3227 = vmatpush.xpose.msra.mxu0 0.0
        %3228 = vmatpush.xpose.msra.mxu0 0.0
        %3229 = vmatpush.xpose.msra.mxu0 0.0
        %3230 = vmatpush.xpose.msra.mxu0 0.0
        %3231 = vmatpush.xpose.msra.mxu0 0.0
        %3232 = vmatpush.xpose.msra.mxu0 0.0
        %3233 = vmatpush.xpose.msra.mxu0 0.0
        %3234 = vmatpush.xpose.msra.mxu0 0.0
        %3235 = vmatpush.xpose.msra.mxu0 0.0
        %3236 = vmatpush.xpose.msra.mxu0 0.0
        %3237 = vmatpush.xpose.msra.mxu0 0.0
        %3238 = vmatpush.xpose.msra.mxu0 0.0
        %3239 = vmatpush.xpose.msra.mxu0 0.0
        %3240 = vmatpush.xpose.msra.mxu0 %v3224
        %3241 = vmatpush.xpose.msra.mxu0 %v3222
        %3242 = vmatmul.f32.gmra.mxu0 %v3218
        %v3243 = vpop.f32.mrf.mxu0
        %v3244 = vadd.f32 0.0, %v3243
        %3245 = vmatmul.f32.gmra.mxu0 %v3220
        %v3246 = vpop.f32.mrf.mxu0
        %v3247 = vadd.f32 0.0, %v3246
        %3248 = vdwg.mxu0
        %3249 = vrot.lane.b32.xlu0 %v1151, 112
        %v3250 = vpop.permute.xlu0 %3249
        %3251 = vrot.lane.b32.xlu0 %v1154, 112
        %v3252 = vpop.permute.xlu0 %3251
        %3253 = vrot.lane.b32.xlu0 %v1151, 80
        %v3254 = vpop.permute.xlu0 %3253
        %3255 = vrot.lane.b32.xlu0 %v1154, 80
        %v3256 = vpop.permute.xlu0 %3255
        %v3257 = vsel %vm1170, %v3250, 0
        %v3259 = vsel %vm1170, %v3252, 0
        %v3261 = vsel %vm1170, %v3254, 0
        %v3263 = vsel %vm1170, %v3256, 0
        %3265 = vmatpush.xpose.msra.mxu0 0.0
        %3266 = vmatpush.xpose.msra.mxu0 0.0
        %3267 = vmatpush.xpose.msra.mxu0 0.0
        %3268 = vmatpush.xpose.msra.mxu0 0.0
        %3269 = vmatpush.xpose.msra.mxu0 0.0
        %3270 = vmatpush.xpose.msra.mxu0 0.0
        %3271 = vmatpush.xpose.msra.mxu0 0.0
        %3272 = vmatpush.xpose.msra.mxu0 0.0
        %3273 = vmatpush.xpose.msra.mxu0 0.0
        %3274 = vmatpush.xpose.msra.mxu0 0.0
        %3275 = vmatpush.xpose.msra.mxu0 0.0
        %3276 = vmatpush.xpose.msra.mxu0 0.0
        %3277 = vmatpush.xpose.msra.mxu0 0.0
        %3278 = vmatpush.xpose.msra.mxu0 0.0
        %3279 = vmatpush.xpose.msra.mxu0 %v3263
        %3280 = vmatpush.xpose.msra.mxu0 %v3261
        %3281 = vmatmul.f32.gmra.mxu0 %v3257
        %v3282 = vpop.f32.mrf.mxu0
        %v3283 = vadd.f32 0.0, %v3282
        %3284 = vmatmul.f32.gmra.mxu0 %v3259
        %v3285 = vpop.f32.mrf.mxu0
        %v3286 = vadd.f32 0.0, %v3285
        %3287 = vdwg.mxu0
        %v3288 = vmul.f32 %v3010, 0.35355338
        %v3289 = vmul.f32 %v3013, 0.35355338
        %v3290 = vmul.f32 %v3049, 0.35355338
        %v3291 = vmul.f32 %v3052, 0.35355338
        %v3292 = vmul.f32 %v3088, 0.35355338
        %v3293 = vmul.f32 %v3091, 0.35355338
        %v3294 = vmul.f32 %v3127, 0.35355338
        %v3295 = vmul.f32 %v3130, 0.35355338
        %v3296 = vmul.f32 %v3166, 0.35355338
        %v3297 = vmul.f32 %v3169, 0.35355338
        %v3298 = vmul.f32 %v3205, 0.35355338
        %v3299 = vmul.f32 %v3208, 0.35355338
        %v3300 = vmul.f32 %v3244, 0.35355338
        %v3301 = vmul.f32 %v3247, 0.35355338
        %v3302 = vmul.f32 %v3283, 0.35355338
        %v3303 = vmul.f32 %v3286, 0.35355338
        %v3304 = vadd.f32 %v3288, %v1159
        %v3305 = vadd.f32 %v3289, %v1159
        %v3306 = vadd.f32 %v3290, %v1159
        %v3307 = vadd.f32 %v3291, %v1159
        %v3308 = vadd.f32 %v3292, %v1159
        %v3309 = vadd.f32 %v3293, %v1159
        %v3310 = vadd.f32 %v3294, %v1159
        %v3311 = vadd.f32 %v3295, %v1159
        %v3312 = vadd.f32 %v3296, %v1159
        %v3313 = vadd.f32 %v3297, %v1159
        %v3314 = vadd.f32 %v3298, %v1159
        %v3315 = vadd.f32 %v3299, %v1159
        %v3316 = vadd.f32 %v3300, %v1159
        %v3317 = vadd.f32 %v3301, %v1159
        %v3318 = vadd.f32 %v3302, %v1159
        %v3319 = vadd.f32 %v3303, %v1159
        %v3320 = vsel %vm1493, %v3304, -inf
        %3321 = vmax.xlane.f32.xlu0 %v3320
        %v3322 = vpop.xlane.xlu0 %3321
        %v3323 = vsel %vm1493, %v3305, -inf
        %3324 = vmax.xlane.f32.xlu0 %v3323
        %v3325 = vpop.xlane.xlu0 %3324
        %v3326 = vsel %vm1493, %v3306, -inf
        %3327 = vmax.xlane.f32.xlu0 %v3326
        %v3328 = vpop.xlane.xlu0 %3327
        %v3329 = vsel %vm1493, %v3307, -inf
        %3330 = vmax.xlane.f32.xlu0 %v3329
        %v3331 = vpop.xlane.xlu0 %3330
        %v3332 = vsel %vm1493, %v3308, -inf
        %3333 = vmax.xlane.f32.xlu0 %v3332
        %v3334 = vpop.xlane.xlu0 %3333
        %v3335 = vsel %vm1493, %v3309, -inf
        %3336 = vmax.xlane.f32.xlu0 %v3335
        %v3337 = vpop.xlane.xlu0 %3336
        %v3338 = vsel %vm1493, %v3310, -inf
        %3339 = vmax.xlane.f32.xlu0 %v3338
        %v3340 = vpop.xlane.xlu0 %3339
        %v3341 = vsel %vm1493, %v3311, -inf
        %3342 = vmax.xlane.f32.xlu0 %v3341
        %v3343 = vpop.xlane.xlu0 %3342
        %v3344 = vsel %vm1493, %v3312, -inf
        %3345 = vmax.xlane.f32.xlu0 %v3344
        %v3346 = vpop.xlane.xlu0 %3345
        %v3347 = vsel %vm1493, %v3313, -inf
        %3348 = vmax.xlane.f32.xlu0 %v3347
        %v3349 = vpop.xlane.xlu0 %3348
        %v3350 = vsel %vm1493, %v3314, -inf
        %3351 = vmax.xlane.f32.xlu0 %v3350
        %v3352 = vpop.xlane.xlu0 %3351
        %v3353 = vsel %vm1493, %v3315, -inf
        %3354 = vmax.xlane.f32.xlu0 %v3353
        %v3355 = vpop.xlane.xlu0 %3354
        %v3356 = vsel %vm1493, %v3316, -inf
        %3357 = vmax.xlane.f32.xlu0 %v3356
        %v3358 = vpop.xlane.xlu0 %3357
        %v3359 = vsel %vm1493, %v3317, -inf
        %3360 = vmax.xlane.f32.xlu0 %v3359
        %v3361 = vpop.xlane.xlu0 %3360
        %v3362 = vsel %vm1493, %v3318, -inf
        %3363 = vmax.xlane.f32.xlu0 %v3362
        %v3364 = vpop.xlane.xlu0 %3363
        %v3365 = vsel %vm1493, %v3319, -inf
        %3366 = vmax.xlane.f32.xlu0 %v3365
        %v3367 = vpop.xlane.xlu0 %3366
        %v3368 = vsub.f32 %v3304, %v3322
        %v3369 = vsub.f32 %v3305, %v3325
        %v3370 = vsub.f32 %v3306, %v3328
        %v3371 = vsub.f32 %v3307, %v3331
        %v3372 = vsub.f32 %v3308, %v3334
        %v3373 = vsub.f32 %v3309, %v3337
        %v3374 = vsub.f32 %v3310, %v3340
        %v3375 = vsub.f32 %v3311, %v3343
        %v3376 = vsub.f32 %v3312, %v3346
        %v3377 = vsub.f32 %v3313, %v3349
        %v3378 = vsub.f32 %v3314, %v3352
        %v3379 = vsub.f32 %v3315, %v3355
        %v3380 = vsub.f32 %v3316, %v3358
        %v3381 = vsub.f32 %v3317, %v3361
        %v3382 = vsub.f32 %v3318, %v3364
        %v3383 = vsub.f32 %v3319, %v3367
        %v3384 = vmul.f32 %v3368, 1.442695
        %v3385 = vpow.pop %v3384
        %v3386 = vmul.f32 %v3369, 1.442695
        %v3387 = vpow.pop %v3386
        %v3388 = vmul.f32 %v3370, 1.442695
        %v3389 = vpow.pop %v3388
        %v3390 = vmul.f32 %v3371, 1.442695
        %v3391 = vpow.pop %v3390
        %v3392 = vmul.f32 %v3372, 1.442695
        %v3393 = vpow.pop %v3392
        %v3394 = vmul.f32 %v3373, 1.442695
        %v3395 = vpow.pop %v3394
        %v3396 = vmul.f32 %v3374, 1.442695
        %v3397 = vpow.pop %v3396
        %v3398 = vmul.f32 %v3375, 1.442695
        %v3399 = vpow.pop %v3398
        %v3400 = vmul.f32 %v3376, 1.442695
        %v3401 = vpow.pop %v3400
        %v3402 = vmul.f32 %v3377, 1.442695
        %v3403 = vpow.pop %v3402
        %v3404 = vmul.f32 %v3378, 1.442695
        %v3405 = vpow.pop %v3404
        %v3406 = vmul.f32 %v3379, 1.442695
        %v3407 = vpow.pop %v3406
        %v3408 = vmul.f32 %v3380, 1.442695
        %v3409 = vpow.pop %v3408
        %v3410 = vmul.f32 %v3381, 1.442695
        %v3411 = vpow.pop %v3410
        %v3412 = vmul.f32 %v3382, 1.442695
        %v3413 = vpow.pop %v3412
        %v3414 = vmul.f32 %v3383, 1.442695
        %v3415 = vpow.pop %v3414
        %v3416 = vsel %vm1493, %v3385, 0.0
        %3417 = vadd.xlane.f32.xlu0 %v3416
        %v3418 = vpop.xlane.xlu0 %3417
        %v3419 = vsel %vm1493, %v3387, 0.0
        %3420 = vadd.xlane.f32.xlu0 %v3419
        %v3421 = vpop.xlane.xlu0 %3420
        %v3422 = vsel %vm1493, %v3389, 0.0
        %3423 = vadd.xlane.f32.xlu0 %v3422
        %v3424 = vpop.xlane.xlu0 %3423
        %v3425 = vsel %vm1493, %v3391, 0.0
        %3426 = vadd.xlane.f32.xlu0 %v3425
        %v3427 = vpop.xlane.xlu0 %3426
        %v3428 = vsel %vm1493, %v3393, 0.0
        %3429 = vadd.xlane.f32.xlu0 %v3428
        %v3430 = vpop.xlane.xlu0 %3429
        %v3431 = vsel %vm1493, %v3395, 0.0
        %3432 = vadd.xlane.f32.xlu0 %v3431
        %v3433 = vpop.xlane.xlu0 %3432
        %v3434 = vsel %vm1493, %v3397, 0.0
        %3435 = vadd.xlane.f32.xlu0 %v3434
        %v3436 = vpop.xlane.xlu0 %3435
        %v3437 = vsel %vm1493, %v3399, 0.0
        %3438 = vadd.xlane.f32.xlu0 %v3437
        %v3439 = vpop.xlane.xlu0 %3438
        %v3440 = vsel %vm1493, %v3401, 0.0
        %3441 = vadd.xlane.f32.xlu0 %v3440
        %v3442 = vpop.xlane.xlu0 %3441
        %v3443 = vsel %vm1493, %v3403, 0.0
        %3444 = vadd.xlane.f32.xlu0 %v3443
        %v3445 = vpop.xlane.xlu0 %3444
        %v3446 = vsel %vm1493, %v3405, 0.0
        %3447 = vadd.xlane.f32.xlu0 %v3446
        %v3448 = vpop.xlane.xlu0 %3447
        %v3449 = vsel %vm1493, %v3407, 0.0
        %3450 = vadd.xlane.f32.xlu0 %v3449
        %v3451 = vpop.xlane.xlu0 %3450
        %v3452 = vsel %vm1493, %v3409, 0.0
        %3453 = vadd.xlane.f32.xlu0 %v3452
        %v3454 = vpop.xlane.xlu0 %3453
        %v3455 = vsel %vm1493, %v3411, 0.0
        %3456 = vadd.xlane.f32.xlu0 %v3455
        %v3457 = vpop.xlane.xlu0 %3456
        %v3458 = vsel %vm1493, %v3413, 0.0
        %3459 = vadd.xlane.f32.xlu0 %v3458
        %v3460 = vpop.xlane.xlu0 %3459
        %v3461 = vsel %vm1493, %v3415, 0.0
        %3462 = vadd.xlane.f32.xlu0 %v3461
        %v3463 = vpop.xlane.xlu0 %3462
        %v3464 = vrcp.pop %v3418
        %v3465 = vrcp.pop %v3421
        %v3466 = vrcp.pop %v3424
        %v3467 = vrcp.pop %v3427
        %v3468 = vrcp.pop %v3430
        %v3469 = vrcp.pop %v3433
        %v3470 = vrcp.pop %v3436
        %v3471 = vrcp.pop %v3439
        %v3472 = vrcp.pop %v3442
        %v3473 = vrcp.pop %v3445
        %v3474 = vrcp.pop %v3448
        %v3475 = vrcp.pop %v3451
        %v3476 = vrcp.pop %v3454
        %v3477 = vrcp.pop %v3457
        %v3478 = vrcp.pop %v3460
        %v3479 = vrcp.pop %v3463
        %v3480 = vmul.f32 %v3385, %v3464
        %v3481 = vmul.f32 %v3387, %v3465
        %v3482 = vmul.f32 %v3389, %v3466
        %v3483 = vmul.f32 %v3391, %v3467
        %v3484 = vmul.f32 %v3393, %v3468
        %v3485 = vmul.f32 %v3395, %v3469
        %v3486 = vmul.f32 %v3397, %v3470
        %v3487 = vmul.f32 %v3399, %v3471
        %v3488 = vmul.f32 %v3401, %v3472
        %v3489 = vmul.f32 %v3403, %v3473
        %v3490 = vmul.f32 %v3405, %v3474
        %v3491 = vmul.f32 %v3407, %v3475
        %v3492 = vmul.f32 %v3409, %v3476
        %v3493 = vmul.f32 %v3411, %v3477
        %v3494 = vmul.f32 %v3413, %v3478
        %v3495 = vmul.f32 %v3415, %v3479
        %3496 = vrot.lane.b32.xlu0 %v1109, 48
        %v3497 = vpop.permute.xlu0 %3496
        %3498 = vrot.lane.b32.xlu0 %v1112, 48
        %v3499 = vpop.permute.xlu0 %3498
        %v3503 = vsel %vm1493, %v3480, 0
        %v3506 = vsel %vm1493, %v3481, 0
        %3508 = vmatpush.msra.mxu0 0.0
        %3509 = vmatpush.msra.mxu0 0.0
        %3510 = vmatpush.msra.mxu0 0.0
        %3511 = vmatpush.msra.mxu0 0.0
        %3512 = vmatpush.msra.mxu0 0.0
        %3513 = vmatpush.msra.mxu0 0.0
        %3514 = vmatpush.msra.mxu0 0.0
        %3515 = vmatpush.msra.mxu0 0.0
        %3516 = vmatpush.msra.mxu0 0.0
        %3517 = vmatpush.msra.mxu0 0.0
        %3518 = vmatpush.msra.mxu0 0.0
        %3519 = vmatpush.msra.mxu0 0.0
        %3520 = vmatpush.msra.mxu0 0.0
        %3521 = vmatpush.msra.mxu0 0.0
        %3522 = vmatpush.msra.mxu0 %v3499
        %3523 = vmatpush.msra.mxu0 %v3497
        %3524 = vmatmul.f32.gmra.mxu0 %v3503
        %v3525 = vpop.f32.mrf.mxu0
        %v3526 = vadd.f32 0.0, %v3525
        %3527 = vmatmul.f32.gmra.mxu0 %v3506
        %v3528 = vpop.f32.mrf.mxu0
        %v3529 = vadd.f32 0.0, %v3528
        %3530 = vdwg.mxu0
        %3531 = vrot.lane.b32.xlu0 %v1115, 48
        %v3532 = vpop.permute.xlu0 %3531
        %3533 = vrot.lane.b32.xlu0 %v1118, 48
        %v3534 = vpop.permute.xlu0 %3533
        %v3538 = vsel %vm1493, %v3482, 0
        %v3541 = vsel %vm1493, %v3483, 0
        %3543 = vmatpush.msra.mxu0 0.0
        %3544 = vmatpush.msra.mxu0 0.0
        %3545 = vmatpush.msra.mxu0 0.0
        %3546 = vmatpush.msra.mxu0 0.0
        %3547 = vmatpush.msra.mxu0 0.0
        %3548 = vmatpush.msra.mxu0 0.0
        %3549 = vmatpush.msra.mxu0 0.0
        %3550 = vmatpush.msra.mxu0 0.0
        %3551 = vmatpush.msra.mxu0 0.0
        %3552 = vmatpush.msra.mxu0 0.0
        %3553 = vmatpush.msra.mxu0 0.0
        %3554 = vmatpush.msra.mxu0 0.0
        %3555 = vmatpush.msra.mxu0 0.0
        %3556 = vmatpush.msra.mxu0 0.0
        %3557 = vmatpush.msra.mxu0 %v3534
        %3558 = vmatpush.msra.mxu0 %v3532
        %3559 = vmatmul.f32.gmra.mxu0 %v3538
        %v3560 = vpop.f32.mrf.mxu0
        %v3561 = vadd.f32 0.0, %v3560
        %3562 = vmatmul.f32.gmra.mxu0 %v3541
        %v3563 = vpop.f32.mrf.mxu0
        %v3564 = vadd.f32 0.0, %v3563
        %3565 = vdwg.mxu0
        %3566 = vrot.lane.b32.xlu0 %v1121, 48
        %v3567 = vpop.permute.xlu0 %3566
        %3568 = vrot.lane.b32.xlu0 %v1124, 48
        %v3569 = vpop.permute.xlu0 %3568
        %v3573 = vsel %vm1493, %v3484, 0
        %v3576 = vsel %vm1493, %v3485, 0
        %3578 = vmatpush.msra.mxu0 0.0
        %3579 = vmatpush.msra.mxu0 0.0
        %3580 = vmatpush.msra.mxu0 0.0
        %3581 = vmatpush.msra.mxu0 0.0
        %3582 = vmatpush.msra.mxu0 0.0
        %3583 = vmatpush.msra.mxu0 0.0
        %3584 = vmatpush.msra.mxu0 0.0
        %3585 = vmatpush.msra.mxu0 0.0
        %3586 = vmatpush.msra.mxu0 0.0
        %3587 = vmatpush.msra.mxu0 0.0
        %3588 = vmatpush.msra.mxu0 0.0
        %3589 = vmatpush.msra.mxu0 0.0
        %3590 = vmatpush.msra.mxu0 0.0
        %3591 = vmatpush.msra.mxu0 0.0
        %3592 = vmatpush.msra.mxu0 %v3569
        %3593 = vmatpush.msra.mxu0 %v3567
        %3594 = vmatmul.f32.gmra.mxu0 %v3573
        %v3595 = vpop.f32.mrf.mxu0
        %v3596 = vadd.f32 0.0, %v3595
        %3597 = vmatmul.f32.gmra.mxu0 %v3576
        %v3598 = vpop.f32.mrf.mxu0
        %v3599 = vadd.f32 0.0, %v3598
        %3600 = vdwg.mxu0
        %3601 = vrot.lane.b32.xlu0 %v1127, 48
        %v3602 = vpop.permute.xlu0 %3601
        %3603 = vrot.lane.b32.xlu0 %v1130, 48
        %v3604 = vpop.permute.xlu0 %3603
        %v3608 = vsel %vm1493, %v3486, 0
        %v3611 = vsel %vm1493, %v3487, 0
        %3613 = vmatpush.msra.mxu0 0.0
        %3614 = vmatpush.msra.mxu0 0.0
        %3615 = vmatpush.msra.mxu0 0.0
        %3616 = vmatpush.msra.mxu0 0.0
        %3617 = vmatpush.msra.mxu0 0.0
        %3618 = vmatpush.msra.mxu0 0.0
        %3619 = vmatpush.msra.mxu0 0.0
        %3620 = vmatpush.msra.mxu0 0.0
        %3621 = vmatpush.msra.mxu0 0.0
        %3622 = vmatpush.msra.mxu0 0.0
        %3623 = vmatpush.msra.mxu0 0.0
        %3624 = vmatpush.msra.mxu0 0.0
        %3625 = vmatpush.msra.mxu0 0.0
        %3626 = vmatpush.msra.mxu0 0.0
        %3627 = vmatpush.msra.mxu0 %v3604
        %3628 = vmatpush.msra.mxu0 %v3602
        %3629 = vmatmul.f32.gmra.mxu0 %v3608
        %v3630 = vpop.f32.mrf.mxu0
        %v3631 = vadd.f32 0.0, %v3630
        %3632 = vmatmul.f32.gmra.mxu0 %v3611
        %v3633 = vpop.f32.mrf.mxu0
        %v3634 = vadd.f32 0.0, %v3633
        %3635 = vdwg.mxu0
        %3636 = vrot.lane.b32.xlu0 %v1133, 48
        %v3637 = vpop.permute.xlu0 %3636
        %3638 = vrot.lane.b32.xlu0 %v1136, 48
        %v3639 = vpop.permute.xlu0 %3638
        %v3643 = vsel %vm1493, %v3488, 0
        %v3646 = vsel %vm1493, %v3489, 0
        %3648 = vmatpush.msra.mxu0 0.0
        %3649 = vmatpush.msra.mxu0 0.0
        %3650 = vmatpush.msra.mxu0 0.0
        %3651 = vmatpush.msra.mxu0 0.0
        %3652 = vmatpush.msra.mxu0 0.0
        %3653 = vmatpush.msra.mxu0 0.0
        %3654 = vmatpush.msra.mxu0 0.0
        %3655 = vmatpush.msra.mxu0 0.0
        %3656 = vmatpush.msra.mxu0 0.0
        %3657 = vmatpush.msra.mxu0 0.0
        %3658 = vmatpush.msra.mxu0 0.0
        %3659 = vmatpush.msra.mxu0 0.0
        %3660 = vmatpush.msra.mxu0 0.0
        %3661 = vmatpush.msra.mxu0 0.0
        %3662 = vmatpush.msra.mxu0 %v3639
        %3663 = vmatpush.msra.mxu0 %v3637
        %3664 = vmatmul.f32.gmra.mxu0 %v3643
        %v3665 = vpop.f32.mrf.mxu0
        %v3666 = vadd.f32 0.0, %v3665
        %3667 = vmatmul.f32.gmra.mxu0 %v3646
        %v3668 = vpop.f32.mrf.mxu0
        %v3669 = vadd.f32 0.0, %v3668
        %3670 = vdwg.mxu0
        %3671 = vrot.lane.b32.xlu0 %v1139, 48
        %v3672 = vpop.permute.xlu0 %3671
        %3673 = vrot.lane.b32.xlu0 %v1142, 48
        %v3674 = vpop.permute.xlu0 %3673
        %v3678 = vsel %vm1493, %v3490, 0
        %v3681 = vsel %vm1493, %v3491, 0
        %3683 = vmatpush.msra.mxu0 0.0
        %3684 = vmatpush.msra.mxu0 0.0
        %3685 = vmatpush.msra.mxu0 0.0
        %3686 = vmatpush.msra.mxu0 0.0
        %3687 = vmatpush.msra.mxu0 0.0
        %3688 = vmatpush.msra.mxu0 0.0
        %3689 = vmatpush.msra.mxu0 0.0
        %3690 = vmatpush.msra.mxu0 0.0
        %3691 = vmatpush.msra.mxu0 0.0
        %3692 = vmatpush.msra.mxu0 0.0
        %3693 = vmatpush.msra.mxu0 0.0
        %3694 = vmatpush.msra.mxu0 0.0
        %3695 = vmatpush.msra.mxu0 0.0
        %3696 = vmatpush.msra.mxu0 0.0
        %3697 = vmatpush.msra.mxu0 %v3674
        %3698 = vmatpush.msra.mxu0 %v3672
        %3699 = vmatmul.f32.gmra.mxu0 %v3678
        %v3700 = vpop.f32.mrf.mxu0
        %v3701 = vadd.f32 0.0, %v3700
        %3702 = vmatmul.f32.gmra.mxu0 %v3681
        %v3703 = vpop.f32.mrf.mxu0
        %v3704 = vadd.f32 0.0, %v3703
        %3705 = vdwg.mxu0
        %3706 = vrot.lane.b32.xlu0 %v1145, 48
        %v3707 = vpop.permute.xlu0 %3706
        %3708 = vrot.lane.b32.xlu0 %v1148, 48
        %v3709 = vpop.permute.xlu0 %3708
        %v3713 = vsel %vm1493, %v3492, 0
        %v3716 = vsel %vm1493, %v3493, 0
        %3718 = vmatpush.msra.mxu0 0.0
        %3719 = vmatpush.msra.mxu0 0.0
        %3720 = vmatpush.msra.mxu0 0.0
        %3721 = vmatpush.msra.mxu0 0.0
        %3722 = vmatpush.msra.mxu0 0.0
        %3723 = vmatpush.msra.mxu0 0.0
        %3724 = vmatpush.msra.mxu0 0.0
        %3725 = vmatpush.msra.mxu0 0.0
        %3726 = vmatpush.msra.mxu0 0.0
        %3727 = vmatpush.msra.mxu0 0.0
        %3728 = vmatpush.msra.mxu0 0.0
        %3729 = vmatpush.msra.mxu0 0.0
        %3730 = vmatpush.msra.mxu0 0.0
        %3731 = vmatpush.msra.mxu0 0.0
        %3732 = vmatpush.msra.mxu0 %v3709
        %3733 = vmatpush.msra.mxu0 %v3707
        %3734 = vmatmul.f32.gmra.mxu0 %v3713
        %v3735 = vpop.f32.mrf.mxu0
        %v3736 = vadd.f32 0.0, %v3735
        %3737 = vmatmul.f32.gmra.mxu0 %v3716
        %v3738 = vpop.f32.mrf.mxu0
        %v3739 = vadd.f32 0.0, %v3738
        %3740 = vdwg.mxu0
        %3741 = vrot.lane.b32.xlu0 %v1151, 48
        %v3742 = vpop.permute.xlu0 %3741
        %3743 = vrot.lane.b32.xlu0 %v1154, 48
        %v3744 = vpop.permute.xlu0 %3743
        %v3748 = vsel %vm1493, %v3494, 0
        %v3751 = vsel %vm1493, %v3495, 0
        %3753 = vmatpush.msra.mxu0 0.0
        %3754 = vmatpush.msra.mxu0 0.0
        %3755 = vmatpush.msra.mxu0 0.0
        %3756 = vmatpush.msra.mxu0 0.0
        %3757 = vmatpush.msra.mxu0 0.0
        %3758 = vmatpush.msra.mxu0 0.0
        %3759 = vmatpush.msra.mxu0 0.0
        %3760 = vmatpush.msra.mxu0 0.0
        %3761 = vmatpush.msra.mxu0 0.0
        %3762 = vmatpush.msra.mxu0 0.0
        %3763 = vmatpush.msra.mxu0 0.0
        %3764 = vmatpush.msra.mxu0 0.0
        %3765 = vmatpush.msra.mxu0 0.0
        %3766 = vmatpush.msra.mxu0 0.0
        %3767 = vmatpush.msra.mxu0 %v3744
        %3768 = vmatpush.msra.mxu0 %v3742
        %3769 = vmatmul.f32.gmra.mxu0 %v3748
        %v3770 = vpop.f32.mrf.mxu0
        %v3771 = vadd.f32 0.0, %v3770
        %3772 = vmatmul.f32.gmra.mxu0 %v3751
        %v3773 = vpop.f32.mrf.mxu0
        %v3774 = vadd.f32 0.0, %v3773
        %3775 = vdwg.mxu0
        %v3777 = vsel %vm1170, %v3526, 0
        %v3780 = vsel %vm1170, %v3529, 0
        %v3783 = vsel %vm1170, %v3561, 0
        %v3786 = vsel %vm1170, %v3564, 0
        %v3789 = vsel %vm1170, %v3596, 0
        %v3792 = vsel %vm1170, %v3599, 0
        %v3795 = vsel %vm1170, %v3631, 0
        %v3798 = vsel %vm1170, %v3634, 0
        %v3801 = vsel %vm1170, %v3666, 0
        %v3804 = vsel %vm1170, %v3669, 0
        %v3807 = vsel %vm1170, %v3701, 0
        %v3810 = vsel %vm1170, %v3704, 0
        %v3813 = vsel %vm1170, %v3736, 0
        %v3816 = vsel %vm1170, %v3739, 0
        %v3819 = vsel %vm1170, %v3771, 0
        %v3822 = vsel %vm1170, %v3774, 0
        %3824 = vmatpush.msra.mxu0 0.0
        %3825 = vmatpush.msra.mxu0 0.0
        %3826 = vmatpush.msra.mxu0 0.0
        %3827 = vmatpush.msra.mxu0 0.0
        %3828 = vmatpush.msra.mxu0 0.0
        %3829 = vmatpush.msra.mxu0 0.0
        %3830 = vmatpush.msra.mxu0 0.0
        %3831 = vmatpush.msra.mxu0 0.0
        %3832 = vmatpush.msra.mxu0 0.0
        %3833 = vmatpush.msra.mxu0 0.0
        %3834 = vmatpush.msra.mxu0 0.0
        %3835 = vmatpush.msra.mxu0 0.0
        %3836 = vmatpush.msra.mxu0 0.0
        %3837 = vmatpush.msra.mxu0 0.0
        %3838 = vmatpush.msra.mxu0 0.0
        %3839 = vmatpush.msra.mxu0 %v1162
        %3840 = vmatmul.f32.gmra.mxu0 %v3777
        %v3841 = vpop.f32.mrf.mxu0
        %v3842 = vadd.f32 0.0, %v3841
        %3843 = vmatmul.f32.gmra.mxu0 %v3780
        %v3844 = vpop.f32.mrf.mxu0
        %v3845 = vadd.f32 0.0, %v3844
        %3846 = vmatmul.f32.gmra.mxu0 %v3783
        %v3847 = vpop.f32.mrf.mxu0
        %v3848 = vadd.f32 0.0, %v3847
        %3849 = vmatmul.f32.gmra.mxu0 %v3786
        %v3850 = vpop.f32.mrf.mxu0
        %v3851 = vadd.f32 0.0, %v3850
        %3852 = vmatmul.f32.gmra.mxu0 %v3789
        %v3853 = vpop.f32.mrf.mxu0
        %v3854 = vadd.f32 0.0, %v3853
        %3855 = vmatmul.f32.gmra.mxu0 %v3792
        %v3856 = vpop.f32.mrf.mxu0
        %v3857 = vadd.f32 0.0, %v3856
        %3858 = vmatmul.f32.gmra.mxu0 %v3795
        %v3859 = vpop.f32.mrf.mxu0
        %v3860 = vadd.f32 0.0, %v3859
        %3861 = vmatmul.f32.gmra.mxu0 %v3798
        %v3862 = vpop.f32.mrf.mxu0
        %v3863 = vadd.f32 0.0, %v3862
        %3864 = vmatmul.f32.gmra.mxu0 %v3801
        %v3865 = vpop.f32.mrf.mxu0
        %v3866 = vadd.f32 0.0, %v3865
        %3867 = vmatmul.f32.gmra.mxu0 %v3804
        %v3868 = vpop.f32.mrf.mxu0
        %v3869 = vadd.f32 0.0, %v3868
        %3870 = vmatmul.f32.gmra.mxu0 %v3807
        %v3871 = vpop.f32.mrf.mxu0
        %v3872 = vadd.f32 0.0, %v3871
        %3873 = vmatmul.f32.gmra.mxu0 %v3810
        %v3874 = vpop.f32.mrf.mxu0
        %v3875 = vadd.f32 0.0, %v3874
        %3876 = vmatmul.f32.gmra.mxu0 %v3813
        %v3877 = vpop.f32.mrf.mxu0
        %v3878 = vadd.f32 0.0, %v3877
        %3879 = vmatmul.f32.gmra.mxu0 %v3816
        %v3880 = vpop.f32.mrf.mxu0
        %v3881 = vadd.f32 0.0, %v3880
        %3882 = vmatmul.f32.gmra.mxu0 %v3819
        %v3883 = vpop.f32.mrf.mxu0
        %v3884 = vadd.f32 0.0, %v3883
        %3885 = vmatmul.f32.gmra.mxu0 %v3822
        %v3886 = vpop.f32.mrf.mxu0
        %v3887 = vadd.f32 0.0, %v3886
        %3888 = vdwg.mxu0
        %v3889 = vadd.f32 %v2929, %v3842
        %v3890 = vadd.f32 %v2932, %v3845
        %v3891 = vadd.f32 %v2935, %v3848
        %v3892 = vadd.f32 %v2938, %v3851
        %v3893 = vadd.f32 %v2941, %v3854
        %v3894 = vadd.f32 %v2944, %v3857
        %v3895 = vadd.f32 %v2947, %v3860
        %v3896 = vadd.f32 %v2950, %v3863
        %v3897 = vadd.f32 %v2953, %v3866
        %v3898 = vadd.f32 %v2956, %v3869
        %v3899 = vadd.f32 %v2959, %v3872
        %v3900 = vadd.f32 %v2962, %v3875
        %v3901 = vadd.f32 %v2965, %v3878
        %v3902 = vadd.f32 %v2968, %v3881
        %v3903 = vadd.f32 %v2971, %v3884
        %v3904 = vadd.f32 %v2974, %v3887
        %3905 = vrot.lane.b32.xlu0 %v1109, 104
        %v3906 = vpop.permute.xlu0 %3905
        %3907 = vrot.lane.b32.xlu0 %v1112, 104
        %v3908 = vpop.permute.xlu0 %3907
        %3909 = vrot.lane.b32.xlu0 %v1109, 72
        %v3910 = vpop.permute.xlu0 %3909
        %3911 = vrot.lane.b32.xlu0 %v1112, 72
        %v3912 = vpop.permute.xlu0 %3911
        %v3913 = vsel %vm1170, %v3906, 0
        %v3915 = vsel %vm1170, %v3908, 0
        %v3917 = vsel %vm1170, %v3910, 0
        %v3919 = vsel %vm1170, %v3912, 0
        %3921 = vmatpush.xpose.msra.mxu0 0.0
        %3922 = vmatpush.xpose.msra.mxu0 0.0
        %3923 = vmatpush.xpose.msra.mxu0 0.0
        %3924 = vmatpush.xpose.msra.mxu0 0.0
        %3925 = vmatpush.xpose.msra.mxu0 0.0
        %3926 = vmatpush.xpose.msra.mxu0 0.0
        %3927 = vmatpush.xpose.msra.mxu0 0.0
        %3928 = vmatpush.xpose.msra.mxu0 0.0
        %3929 = vmatpush.xpose.msra.mxu0 0.0
        %3930 = vmatpush.xpose.msra.mxu0 0.0
        %3931 = vmatpush.xpose.msra.mxu0 0.0
        %3932 = vmatpush.xpose.msra.mxu0 0.0
        %3933 = vmatpush.xpose.msra.mxu0 0.0
        %3934 = vmatpush.xpose.msra.mxu0 0.0
        %3935 = vmatpush.xpose.msra.mxu0 %v3919
        %3936 = vmatpush.xpose.msra.mxu0 %v3917
        %3937 = vmatmul.f32.gmra.mxu0 %v3913
        %v3938 = vpop.f32.mrf.mxu0
        %v3939 = vadd.f32 0.0, %v3938
        %3940 = vmatmul.f32.gmra.mxu0 %v3915
        %v3941 = vpop.f32.mrf.mxu0
        %v3942 = vadd.f32 0.0, %v3941
        %3943 = vdwg.mxu0
        %3944 = vrot.lane.b32.xlu0 %v1115, 104
        %v3945 = vpop.permute.xlu0 %3944
        %3946 = vrot.lane.b32.xlu0 %v1118, 104
        %v3947 = vpop.permute.xlu0 %3946
        %3948 = vrot.lane.b32.xlu0 %v1115, 72
        %v3949 = vpop.permute.xlu0 %3948
        %3950 = vrot.lane.b32.xlu0 %v1118, 72
        %v3951 = vpop.permute.xlu0 %3950
        %v3952 = vsel %vm1170, %v3945, 0
        %v3954 = vsel %vm1170, %v3947, 0
        %v3956 = vsel %vm1170, %v3949, 0
        %v3958 = vsel %vm1170, %v3951, 0
        %3960 = vmatpush.xpose.msra.mxu0 0.0
        %3961 = vmatpush.xpose.msra.mxu0 0.0
        %3962 = vmatpush.xpose.msra.mxu0 0.0
        %3963 = vmatpush.xpose.msra.mxu0 0.0
        %3964 = vmatpush.xpose.msra.mxu0 0.0
        %3965 = vmatpush.xpose.msra.mxu0 0.0
        %3966 = vmatpush.xpose.msra.mxu0 0.0
        %3967 = vmatpush.xpose.msra.mxu0 0.0
        %3968 = vmatpush.xpose.msra.mxu0 0.0
        %3969 = vmatpush.xpose.msra.mxu0 0.0
        %3970 = vmatpush.xpose.msra.mxu0 0.0
        %3971 = vmatpush.xpose.msra.mxu0 0.0
        %3972 = vmatpush.xpose.msra.mxu0 0.0
        %3973 = vmatpush.xpose.msra.mxu0 0.0
        %3974 = vmatpush.xpose.msra.mxu0 %v3958
        %3975 = vmatpush.xpose.msra.mxu0 %v3956
        %3976 = vmatmul.f32.gmra.mxu0 %v3952
        %v3977 = vpop.f32.mrf.mxu0
        %v3978 = vadd.f32 0.0, %v3977
        %3979 = vmatmul.f32.gmra.mxu0 %v3954
        %v3980 = vpop.f32.mrf.mxu0
        %v3981 = vadd.f32 0.0, %v3980
        %3982 = vdwg.mxu0
        %3983 = vrot.lane.b32.xlu0 %v1121, 104
        %v3984 = vpop.permute.xlu0 %3983
        %3985 = vrot.lane.b32.xlu0 %v1124, 104
        %v3986 = vpop.permute.xlu0 %3985
        %3987 = vrot.lane.b32.xlu0 %v1121, 72
        %v3988 = vpop.permute.xlu0 %3987
        %3989 = vrot.lane.b32.xlu0 %v1124, 72
        %v3990 = vpop.permute.xlu0 %3989
        %v3991 = vsel %vm1170, %v3984, 0
        %v3993 = vsel %vm1170, %v3986, 0
        %v3995 = vsel %vm1170, %v3988, 0
        %v3997 = vsel %vm1170, %v3990, 0
        %3999 = vmatpush.xpose.msra.mxu0 0.0
        %4000 = vmatpush.xpose.msra.mxu0 0.0
        %4001 = vmatpush.xpose.msra.mxu0 0.0
        %4002 = vmatpush.xpose.msra.mxu0 0.0
        %4003 = vmatpush.xpose.msra.mxu0 0.0
        %4004 = vmatpush.xpose.msra.mxu0 0.0
        %4005 = vmatpush.xpose.msra.mxu0 0.0
        %4006 = vmatpush.xpose.msra.mxu0 0.0
        %4007 = vmatpush.xpose.msra.mxu0 0.0
        %4008 = vmatpush.xpose.msra.mxu0 0.0
        %4009 = vmatpush.xpose.msra.mxu0 0.0
        %4010 = vmatpush.xpose.msra.mxu0 0.0
        %4011 = vmatpush.xpose.msra.mxu0 0.0
        %4012 = vmatpush.xpose.msra.mxu0 0.0
        %4013 = vmatpush.xpose.msra.mxu0 %v3997
        %4014 = vmatpush.xpose.msra.mxu0 %v3995
        %4015 = vmatmul.f32.gmra.mxu0 %v3991
        %v4016 = vpop.f32.mrf.mxu0
        %v4017 = vadd.f32 0.0, %v4016
        %4018 = vmatmul.f32.gmra.mxu0 %v3993
        %v4019 = vpop.f32.mrf.mxu0
        %v4020 = vadd.f32 0.0, %v4019
        %4021 = vdwg.mxu0
        %4022 = vrot.lane.b32.xlu0 %v1127, 104
        %v4023 = vpop.permute.xlu0 %4022
        %4024 = vrot.lane.b32.xlu0 %v1130, 104
        %v4025 = vpop.permute.xlu0 %4024
        %4026 = vrot.lane.b32.xlu0 %v1127, 72
        %v4027 = vpop.permute.xlu0 %4026
        %4028 = vrot.lane.b32.xlu0 %v1130, 72
        %v4029 = vpop.permute.xlu0 %4028
        %v4030 = vsel %vm1170, %v4023, 0
        %v4032 = vsel %vm1170, %v4025, 0
        %v4034 = vsel %vm1170, %v4027, 0
        %v4036 = vsel %vm1170, %v4029, 0
        %4038 = vmatpush.xpose.msra.mxu0 0.0
        %4039 = vmatpush.xpose.msra.mxu0 0.0
        %4040 = vmatpush.xpose.msra.mxu0 0.0
        %4041 = vmatpush.xpose.msra.mxu0 0.0
        %4042 = vmatpush.xpose.msra.mxu0 0.0
        %4043 = vmatpush.xpose.msra.mxu0 0.0
        %4044 = vmatpush.xpose.msra.mxu0 0.0
        %4045 = vmatpush.xpose.msra.mxu0 0.0
        %4046 = vmatpush.xpose.msra.mxu0 0.0
        %4047 = vmatpush.xpose.msra.mxu0 0.0
        %4048 = vmatpush.xpose.msra.mxu0 0.0
        %4049 = vmatpush.xpose.msra.mxu0 0.0
        %4050 = vmatpush.xpose.msra.mxu0 0.0
        %4051 = vmatpush.xpose.msra.mxu0 0.0
        %4052 = vmatpush.xpose.msra.mxu0 %v4036
        %4053 = vmatpush.xpose.msra.mxu0 %v4034
        %4054 = vmatmul.f32.gmra.mxu0 %v4030
        %v4055 = vpop.f32.mrf.mxu0
        %v4056 = vadd.f32 0.0, %v4055
        %4057 = vmatmul.f32.gmra.mxu0 %v4032
        %v4058 = vpop.f32.mrf.mxu0
        %v4059 = vadd.f32 0.0, %v4058
        %4060 = vdwg.mxu0
        %4061 = vrot.lane.b32.xlu0 %v1133, 104
        %v4062 = vpop.permute.xlu0 %4061
        %4063 = vrot.lane.b32.xlu0 %v1136, 104
        %v4064 = vpop.permute.xlu0 %4063
        %4065 = vrot.lane.b32.xlu0 %v1133, 72
        %v4066 = vpop.permute.xlu0 %4065
        %4067 = vrot.lane.b32.xlu0 %v1136, 72
        %v4068 = vpop.permute.xlu0 %4067
        %v4069 = vsel %vm1170, %v4062, 0
        %v4071 = vsel %vm1170, %v4064, 0
        %v4073 = vsel %vm1170, %v4066, 0
        %v4075 = vsel %vm1170, %v4068, 0
        %4077 = vmatpush.xpose.msra.mxu0 0.0
        %4078 = vmatpush.xpose.msra.mxu0 0.0
        %4079 = vmatpush.xpose.msra.mxu0 0.0
        %4080 = vmatpush.xpose.msra.mxu0 0.0
        %4081 = vmatpush.xpose.msra.mxu0 0.0
        %4082 = vmatpush.xpose.msra.mxu0 0.0
        %4083 = vmatpush.xpose.msra.mxu0 0.0
        %4084 = vmatpush.xpose.msra.mxu0 0.0
        %4085 = vmatpush.xpose.msra.mxu0 0.0
        %4086 = vmatpush.xpose.msra.mxu0 0.0
        %4087 = vmatpush.xpose.msra.mxu0 0.0
        %4088 = vmatpush.xpose.msra.mxu0 0.0
        %4089 = vmatpush.xpose.msra.mxu0 0.0
        %4090 = vmatpush.xpose.msra.mxu0 0.0
        %4091 = vmatpush.xpose.msra.mxu0 %v4075
        %4092 = vmatpush.xpose.msra.mxu0 %v4073
        %4093 = vmatmul.f32.gmra.mxu0 %v4069
        %v4094 = vpop.f32.mrf.mxu0
        %v4095 = vadd.f32 0.0, %v4094
        %4096 = vmatmul.f32.gmra.mxu0 %v4071
        %v4097 = vpop.f32.mrf.mxu0
        %v4098 = vadd.f32 0.0, %v4097
        %4099 = vdwg.mxu0
        %4100 = vrot.lane.b32.xlu0 %v1139, 104
        %v4101 = vpop.permute.xlu0 %4100
        %4102 = vrot.lane.b32.xlu0 %v1142, 104
        %v4103 = vpop.permute.xlu0 %4102
        %4104 = vrot.lane.b32.xlu0 %v1139, 72
        %v4105 = vpop.permute.xlu0 %4104
        %4106 = vrot.lane.b32.xlu0 %v1142, 72
        %v4107 = vpop.permute.xlu0 %4106
        %v4108 = vsel %vm1170, %v4101, 0
        %v4110 = vsel %vm1170, %v4103, 0
        %v4112 = vsel %vm1170, %v4105, 0
        %v4114 = vsel %vm1170, %v4107, 0
        %4116 = vmatpush.xpose.msra.mxu0 0.0
        %4117 = vmatpush.xpose.msra.mxu0 0.0
        %4118 = vmatpush.xpose.msra.mxu0 0.0
        %4119 = vmatpush.xpose.msra.mxu0 0.0
        %4120 = vmatpush.xpose.msra.mxu0 0.0
        %4121 = vmatpush.xpose.msra.mxu0 0.0
        %4122 = vmatpush.xpose.msra.mxu0 0.0
        %4123 = vmatpush.xpose.msra.mxu0 0.0
        %4124 = vmatpush.xpose.msra.mxu0 0.0
        %4125 = vmatpush.xpose.msra.mxu0 0.0
        %4126 = vmatpush.xpose.msra.mxu0 0.0
        %4127 = vmatpush.xpose.msra.mxu0 0.0
        %4128 = vmatpush.xpose.msra.mxu0 0.0
        %4129 = vmatpush.xpose.msra.mxu0 0.0
        %4130 = vmatpush.xpose.msra.mxu0 %v4114
        %4131 = vmatpush.xpose.msra.mxu0 %v4112
        %4132 = vmatmul.f32.gmra.mxu0 %v4108
        %v4133 = vpop.f32.mrf.mxu0
        %v4134 = vadd.f32 0.0, %v4133
        %4135 = vmatmul.f32.gmra.mxu0 %v4110
        %v4136 = vpop.f32.mrf.mxu0
        %v4137 = vadd.f32 0.0, %v4136
        %4138 = vdwg.mxu0
        %4139 = vrot.lane.b32.xlu0 %v1145, 104
        %v4140 = vpop.permute.xlu0 %4139
        %4141 = vrot.lane.b32.xlu0 %v1148, 104
        %v4142 = vpop.permute.xlu0 %4141
        %4143 = vrot.lane.b32.xlu0 %v1145, 72
        %v4144 = vpop.permute.xlu0 %4143
        %4145 = vrot.lane.b32.xlu0 %v1148, 72
        %v4146 = vpop.permute.xlu0 %4145
        %v4147 = vsel %vm1170, %v4140, 0
        %v4149 = vsel %vm1170, %v4142, 0
        %v4151 = vsel %vm1170, %v4144, 0
        %v4153 = vsel %vm1170, %v4146, 0
        %4155 = vmatpush.xpose.msra.mxu0 0.0
        %4156 = vmatpush.xpose.msra.mxu0 0.0
        %4157 = vmatpush.xpose.msra.mxu0 0.0
        %4158 = vmatpush.xpose.msra.mxu0 0.0
        %4159 = vmatpush.xpose.msra.mxu0 0.0
        %4160 = vmatpush.xpose.msra.mxu0 0.0
        %4161 = vmatpush.xpose.msra.mxu0 0.0
        %4162 = vmatpush.xpose.msra.mxu0 0.0
        %4163 = vmatpush.xpose.msra.mxu0 0.0
        %4164 = vmatpush.xpose.msra.mxu0 0.0
        %4165 = vmatpush.xpose.msra.mxu0 0.0
        %4166 = vmatpush.xpose.msra.mxu0 0.0
        %4167 = vmatpush.xpose.msra.mxu0 0.0
        %4168 = vmatpush.xpose.msra.mxu0 0.0
        %4169 = vmatpush.xpose.msra.mxu0 %v4153
        %4170 = vmatpush.xpose.msra.mxu0 %v4151
        %4171 = vmatmul.f32.gmra.mxu0 %v4147
        %v4172 = vpop.f32.mrf.mxu0
        %v4173 = vadd.f32 0.0, %v4172
        %4174 = vmatmul.f32.gmra.mxu0 %v4149
        %v4175 = vpop.f32.mrf.mxu0
        %v4176 = vadd.f32 0.0, %v4175
        %4177 = vdwg.mxu0
        %4178 = vrot.lane.b32.xlu0 %v1151, 104
        %v4179 = vpop.permute.xlu0 %4178
        %4180 = vrot.lane.b32.xlu0 %v1154, 104
        %v4181 = vpop.permute.xlu0 %4180
        %4182 = vrot.lane.b32.xlu0 %v1151, 72
        %v4183 = vpop.permute.xlu0 %4182
        %4184 = vrot.lane.b32.xlu0 %v1154, 72
        %v4185 = vpop.permute.xlu0 %4184
        %v4186 = vsel %vm1170, %v4179, 0
        %v4188 = vsel %vm1170, %v4181, 0
        %v4190 = vsel %vm1170, %v4183, 0
        %v4192 = vsel %vm1170, %v4185, 0
        %4194 = vmatpush.xpose.msra.mxu0 0.0
        %4195 = vmatpush.xpose.msra.mxu0 0.0
        %4196 = vmatpush.xpose.msra.mxu0 0.0
        %4197 = vmatpush.xpose.msra.mxu0 0.0
        %4198 = vmatpush.xpose.msra.mxu0 0.0
        %4199 = vmatpush.xpose.msra.mxu0 0.0
        %4200 = vmatpush.xpose.msra.mxu0 0.0
        %4201 = vmatpush.xpose.msra.mxu0 0.0
        %4202 = vmatpush.xpose.msra.mxu0 0.0
        %4203 = vmatpush.xpose.msra.mxu0 0.0
        %4204 = vmatpush.xpose.msra.mxu0 0.0
        %4205 = vmatpush.xpose.msra.mxu0 0.0
        %4206 = vmatpush.xpose.msra.mxu0 0.0
        %4207 = vmatpush.xpose.msra.mxu0 0.0
        %4208 = vmatpush.xpose.msra.mxu0 %v4192
        %4209 = vmatpush.xpose.msra.mxu0 %v4190
        %4210 = vmatmul.f32.gmra.mxu0 %v4186
        %v4211 = vpop.f32.mrf.mxu0
        %v4212 = vadd.f32 0.0, %v4211
        %4213 = vmatmul.f32.gmra.mxu0 %v4188
        %v4214 = vpop.f32.mrf.mxu0
        %v4215 = vadd.f32 0.0, %v4214
        %4216 = vdwg.mxu0
        %v4217 = vmul.f32 %v3939, 0.35355338
        %v4218 = vmul.f32 %v3942, 0.35355338
        %v4219 = vmul.f32 %v3978, 0.35355338
        %v4220 = vmul.f32 %v3981, 0.35355338
        %v4221 = vmul.f32 %v4017, 0.35355338
        %v4222 = vmul.f32 %v4020, 0.35355338
        %v4223 = vmul.f32 %v4056, 0.35355338
        %v4224 = vmul.f32 %v4059, 0.35355338
        %v4225 = vmul.f32 %v4095, 0.35355338
        %v4226 = vmul.f32 %v4098, 0.35355338
        %v4227 = vmul.f32 %v4134, 0.35355338
        %v4228 = vmul.f32 %v4137, 0.35355338
        %v4229 = vmul.f32 %v4173, 0.35355338
        %v4230 = vmul.f32 %v4176, 0.35355338
        %v4231 = vmul.f32 %v4212, 0.35355338
        %v4232 = vmul.f32 %v4215, 0.35355338
        %v4233 = vadd.f32 %v4217, %v1159
        %v4234 = vadd.f32 %v4218, %v1159
        %v4235 = vadd.f32 %v4219, %v1159
        %v4236 = vadd.f32 %v4220, %v1159
        %v4237 = vadd.f32 %v4221, %v1159
        %v4238 = vadd.f32 %v4222, %v1159
        %v4239 = vadd.f32 %v4223, %v1159
        %v4240 = vadd.f32 %v4224, %v1159
        %v4241 = vadd.f32 %v4225, %v1159
        %v4242 = vadd.f32 %v4226, %v1159
        %v4243 = vadd.f32 %v4227, %v1159
        %v4244 = vadd.f32 %v4228, %v1159
        %v4245 = vadd.f32 %v4229, %v1159
        %v4246 = vadd.f32 %v4230, %v1159
        %v4247 = vadd.f32 %v4231, %v1159
        %v4248 = vadd.f32 %v4232, %v1159
        %v4249 = vsel %vm1493, %v4233, -inf
        %4250 = vmax.xlane.f32.xlu0 %v4249
        %v4251 = vpop.xlane.xlu0 %4250
        %v4252 = vsel %vm1493, %v4234, -inf
        %4253 = vmax.xlane.f32.xlu0 %v4252
        %v4254 = vpop.xlane.xlu0 %4253
        %v4255 = vsel %vm1493, %v4235, -inf
        %4256 = vmax.xlane.f32.xlu0 %v4255
        %v4257 = vpop.xlane.xlu0 %4256
        %v4258 = vsel %vm1493, %v4236, -inf
        %4259 = vmax.xlane.f32.xlu0 %v4258
        %v4260 = vpop.xlane.xlu0 %4259
        %v4261 = vsel %vm1493, %v4237, -inf
        %4262 = vmax.xlane.f32.xlu0 %v4261
        %v4263 = vpop.xlane.xlu0 %4262
        %v4264 = vsel %vm1493, %v4238, -inf
        %4265 = vmax.xlane.f32.xlu0 %v4264
        %v4266 = vpop.xlane.xlu0 %4265
        %v4267 = vsel %vm1493, %v4239, -inf
        %4268 = vmax.xlane.f32.xlu0 %v4267
        %v4269 = vpop.xlane.xlu0 %4268
        %v4270 = vsel %vm1493, %v4240, -inf
        %4271 = vmax.xlane.f32.xlu0 %v4270
        %v4272 = vpop.xlane.xlu0 %4271
        %v4273 = vsel %vm1493, %v4241, -inf
        %4274 = vmax.xlane.f32.xlu0 %v4273
        %v4275 = vpop.xlane.xlu0 %4274
        %v4276 = vsel %vm1493, %v4242, -inf
        %4277 = vmax.xlane.f32.xlu0 %v4276
        %v4278 = vpop.xlane.xlu0 %4277
        %v4279 = vsel %vm1493, %v4243, -inf
        %4280 = vmax.xlane.f32.xlu0 %v4279
        %v4281 = vpop.xlane.xlu0 %4280
        %v4282 = vsel %vm1493, %v4244, -inf
        %4283 = vmax.xlane.f32.xlu0 %v4282
        %v4284 = vpop.xlane.xlu0 %4283
        %v4285 = vsel %vm1493, %v4245, -inf
        %4286 = vmax.xlane.f32.xlu0 %v4285
        %v4287 = vpop.xlane.xlu0 %4286
        %v4288 = vsel %vm1493, %v4246, -inf
        %4289 = vmax.xlane.f32.xlu0 %v4288
        %v4290 = vpop.xlane.xlu0 %4289
        %v4291 = vsel %vm1493, %v4247, -inf
        %4292 = vmax.xlane.f32.xlu0 %v4291
        %v4293 = vpop.xlane.xlu0 %4292
        %v4294 = vsel %vm1493, %v4248, -inf
        %4295 = vmax.xlane.f32.xlu0 %v4294
        %v4296 = vpop.xlane.xlu0 %4295
        %v4297 = vsub.f32 %v4233, %v4251
        %v4298 = vsub.f32 %v4234, %v4254
        %v4299 = vsub.f32 %v4235, %v4257
        %v4300 = vsub.f32 %v4236, %v4260
        %v4301 = vsub.f32 %v4237, %v4263
        %v4302 = vsub.f32 %v4238, %v4266
        %v4303 = vsub.f32 %v4239, %v4269
        %v4304 = vsub.f32 %v4240, %v4272
        %v4305 = vsub.f32 %v4241, %v4275
        %v4306 = vsub.f32 %v4242, %v4278
        %v4307 = vsub.f32 %v4243, %v4281
        %v4308 = vsub.f32 %v4244, %v4284
        %v4309 = vsub.f32 %v4245, %v4287
        %v4310 = vsub.f32 %v4246, %v4290
        %v4311 = vsub.f32 %v4247, %v4293
        %v4312 = vsub.f32 %v4248, %v4296
        %v4313 = vmul.f32 %v4297, 1.442695
        %v4314 = vpow.pop %v4313
        %v4315 = vmul.f32 %v4298, 1.442695
        %v4316 = vpow.pop %v4315
        %v4317 = vmul.f32 %v4299, 1.442695
        %v4318 = vpow.pop %v4317
        %v4319 = vmul.f32 %v4300, 1.442695
        %v4320 = vpow.pop %v4319
        %v4321 = vmul.f32 %v4301, 1.442695
        %v4322 = vpow.pop %v4321
        %v4323 = vmul.f32 %v4302, 1.442695
        %v4324 = vpow.pop %v4323
        %v4325 = vmul.f32 %v4303, 1.442695
        %v4326 = vpow.pop %v4325
        %v4327 = vmul.f32 %v4304, 1.442695
        %v4328 = vpow.pop %v4327
        %v4329 = vmul.f32 %v4305, 1.442695
        %v4330 = vpow.pop %v4329
        %v4331 = vmul.f32 %v4306, 1.442695
        %v4332 = vpow.pop %v4331
        %v4333 = vmul.f32 %v4307, 1.442695
        %v4334 = vpow.pop %v4333
        %v4335 = vmul.f32 %v4308, 1.442695
        %v4336 = vpow.pop %v4335
        %v4337 = vmul.f32 %v4309, 1.442695
        %v4338 = vpow.pop %v4337
        %v4339 = vmul.f32 %v4310, 1.442695
        %v4340 = vpow.pop %v4339
        %v4341 = vmul.f32 %v4311, 1.442695
        %v4342 = vpow.pop %v4341
        %v4343 = vmul.f32 %v4312, 1.442695
        %v4344 = vpow.pop %v4343
        %v4345 = vsel %vm1493, %v4314, 0.0
        %4346 = vadd.xlane.f32.xlu0 %v4345
        %v4347 = vpop.xlane.xlu0 %4346
        %v4348 = vsel %vm1493, %v4316, 0.0
        %4349 = vadd.xlane.f32.xlu0 %v4348
        %v4350 = vpop.xlane.xlu0 %4349
        %v4351 = vsel %vm1493, %v4318, 0.0
        %4352 = vadd.xlane.f32.xlu0 %v4351
        %v4353 = vpop.xlane.xlu0 %4352
        %v4354 = vsel %vm1493, %v4320, 0.0
        %4355 = vadd.xlane.f32.xlu0 %v4354
        %v4356 = vpop.xlane.xlu0 %4355
        %v4357 = vsel %vm1493, %v4322, 0.0
        %4358 = vadd.xlane.f32.xlu0 %v4357
        %v4359 = vpop.xlane.xlu0 %4358
        %v4360 = vsel %vm1493, %v4324, 0.0
        %4361 = vadd.xlane.f32.xlu0 %v4360
        %v4362 = vpop.xlane.xlu0 %4361
        %v4363 = vsel %vm1493, %v4326, 0.0
        %4364 = vadd.xlane.f32.xlu0 %v4363
        %v4365 = vpop.xlane.xlu0 %4364
        %v4366 = vsel %vm1493, %v4328, 0.0
        %4367 = vadd.xlane.f32.xlu0 %v4366
        %v4368 = vpop.xlane.xlu0 %4367
        %v4369 = vsel %vm1493, %v4330, 0.0
        %4370 = vadd.xlane.f32.xlu0 %v4369
        %v4371 = vpop.xlane.xlu0 %4370
        %v4372 = vsel %vm1493, %v4332, 0.0
        %4373 = vadd.xlane.f32.xlu0 %v4372
        %v4374 = vpop.xlane.xlu0 %4373
        %v4375 = vsel %vm1493, %v4334, 0.0
        %4376 = vadd.xlane.f32.xlu0 %v4375
        %v4377 = vpop.xlane.xlu0 %4376
        %v4378 = vsel %vm1493, %v4336, 0.0
        %4379 = vadd.xlane.f32.xlu0 %v4378
        %v4380 = vpop.xlane.xlu0 %4379
        %v4381 = vsel %vm1493, %v4338, 0.0
        %4382 = vadd.xlane.f32.xlu0 %v4381
        %v4383 = vpop.xlane.xlu0 %4382
        %v4384 = vsel %vm1493, %v4340, 0.0
        %4385 = vadd.xlane.f32.xlu0 %v4384
        %v4386 = vpop.xlane.xlu0 %4385
        %v4387 = vsel %vm1493, %v4342, 0.0
        %4388 = vadd.xlane.f32.xlu0 %v4387
        %v4389 = vpop.xlane.xlu0 %4388
        %v4390 = vsel %vm1493, %v4344, 0.0
        %4391 = vadd.xlane.f32.xlu0 %v4390
        %v4392 = vpop.xlane.xlu0 %4391
        %v4393 = vrcp.pop %v4347
        %v4394 = vrcp.pop %v4350
        %v4395 = vrcp.pop %v4353
        %v4396 = vrcp.pop %v4356
        %v4397 = vrcp.pop %v4359
        %v4398 = vrcp.pop %v4362
        %v4399 = vrcp.pop %v4365
        %v4400 = vrcp.pop %v4368
        %v4401 = vrcp.pop %v4371
        %v4402 = vrcp.pop %v4374
        %v4403 = vrcp.pop %v4377
        %v4404 = vrcp.pop %v4380
        %v4405 = vrcp.pop %v4383
        %v4406 = vrcp.pop %v4386
        %v4407 = vrcp.pop %v4389
        %v4408 = vrcp.pop %v4392
        %v4409 = vmul.f32 %v4314, %v4393
        %v4410 = vmul.f32 %v4316, %v4394
        %v4411 = vmul.f32 %v4318, %v4395
        %v4412 = vmul.f32 %v4320, %v4396
        %v4413 = vmul.f32 %v4322, %v4397
        %v4414 = vmul.f32 %v4324, %v4398
        %v4415 = vmul.f32 %v4326, %v4399
        %v4416 = vmul.f32 %v4328, %v4400
        %v4417 = vmul.f32 %v4330, %v4401
        %v4418 = vmul.f32 %v4332, %v4402
        %v4419 = vmul.f32 %v4334, %v4403
        %v4420 = vmul.f32 %v4336, %v4404
        %v4421 = vmul.f32 %v4338, %v4405
        %v4422 = vmul.f32 %v4340, %v4406
        %v4423 = vmul.f32 %v4342, %v4407
        %v4424 = vmul.f32 %v4344, %v4408
        %4425 = vrot.lane.b32.xlu0 %v1109, 40
        %v4426 = vpop.permute.xlu0 %4425
        %4427 = vrot.lane.b32.xlu0 %v1112, 40
        %v4428 = vpop.permute.xlu0 %4427
        %v4432 = vsel %vm1493, %v4409, 0
        %v4435 = vsel %vm1493, %v4410, 0
        %4437 = vmatpush.msra.mxu0 0.0
        %4438 = vmatpush.msra.mxu0 0.0
        %4439 = vmatpush.msra.mxu0 0.0
        %4440 = vmatpush.msra.mxu0 0.0
        %4441 = vmatpush.msra.mxu0 0.0
        %4442 = vmatpush.msra.mxu0 0.0
        %4443 = vmatpush.msra.mxu0 0.0
        %4444 = vmatpush.msra.mxu0 0.0
        %4445 = vmatpush.msra.mxu0 0.0
        %4446 = vmatpush.msra.mxu0 0.0
        %4447 = vmatpush.msra.mxu0 0.0
        %4448 = vmatpush.msra.mxu0 0.0
        %4449 = vmatpush.msra.mxu0 0.0
        %4450 = vmatpush.msra.mxu0 0.0
        %4451 = vmatpush.msra.mxu0 %v4428
        %4452 = vmatpush.msra.mxu0 %v4426
        %4453 = vmatmul.f32.gmra.mxu0 %v4432
        %v4454 = vpop.f32.mrf.mxu0
        %v4455 = vadd.f32 0.0, %v4454
        %4456 = vmatmul.f32.gmra.mxu0 %v4435
        %v4457 = vpop.f32.mrf.mxu0
        %v4458 = vadd.f32 0.0, %v4457
        %4459 = vdwg.mxu0
        %4460 = vrot.lane.b32.xlu0 %v1115, 40
        %v4461 = vpop.permute.xlu0 %4460
        %4462 = vrot.lane.b32.xlu0 %v1118, 40
        %v4463 = vpop.permute.xlu0 %4462
        %v4467 = vsel %vm1493, %v4411, 0
        %v4470 = vsel %vm1493, %v4412, 0
        %4472 = vmatpush.msra.mxu0 0.0
        %4473 = vmatpush.msra.mxu0 0.0
        %4474 = vmatpush.msra.mxu0 0.0
        %4475 = vmatpush.msra.mxu0 0.0
        %4476 = vmatpush.msra.mxu0 0.0
        %4477 = vmatpush.msra.mxu0 0.0
        %4478 = vmatpush.msra.mxu0 0.0
        %4479 = vmatpush.msra.mxu0 0.0
        %4480 = vmatpush.msra.mxu0 0.0
        %4481 = vmatpush.msra.mxu0 0.0
        %4482 = vmatpush.msra.mxu0 0.0
        %4483 = vmatpush.msra.mxu0 0.0
        %4484 = vmatpush.msra.mxu0 0.0
        %4485 = vmatpush.msra.mxu0 0.0
        %4486 = vmatpush.msra.mxu0 %v4463
        %4487 = vmatpush.msra.mxu0 %v4461
        %4488 = vmatmul.f32.gmra.mxu0 %v4467
        %v4489 = vpop.f32.mrf.mxu0
        %v4490 = vadd.f32 0.0, %v4489
        %4491 = vmatmul.f32.gmra.mxu0 %v4470
        %v4492 = vpop.f32.mrf.mxu0
        %v4493 = vadd.f32 0.0, %v4492
        %4494 = vdwg.mxu0
        %4495 = vrot.lane.b32.xlu0 %v1121, 40
        %v4496 = vpop.permute.xlu0 %4495
        %4497 = vrot.lane.b32.xlu0 %v1124, 40
        %v4498 = vpop.permute.xlu0 %4497
        %v4502 = vsel %vm1493, %v4413, 0
        %v4505 = vsel %vm1493, %v4414, 0
        %4507 = vmatpush.msra.mxu0 0.0
        %4508 = vmatpush.msra.mxu0 0.0
        %4509 = vmatpush.msra.mxu0 0.0
        %4510 = vmatpush.msra.mxu0 0.0
        %4511 = vmatpush.msra.mxu0 0.0
        %4512 = vmatpush.msra.mxu0 0.0
        %4513 = vmatpush.msra.mxu0 0.0
        %4514 = vmatpush.msra.mxu0 0.0
        %4515 = vmatpush.msra.mxu0 0.0
        %4516 = vmatpush.msra.mxu0 0.0
        %4517 = vmatpush.msra.mxu0 0.0
        %4518 = vmatpush.msra.mxu0 0.0
        %4519 = vmatpush.msra.mxu0 0.0
        %4520 = vmatpush.msra.mxu0 0.0
        %4521 = vmatpush.msra.mxu0 %v4498
        %4522 = vmatpush.msra.mxu0 %v4496
        %4523 = vmatmul.f32.gmra.mxu0 %v4502
        %v4524 = vpop.f32.mrf.mxu0
        %v4525 = vadd.f32 0.0, %v4524
        %4526 = vmatmul.f32.gmra.mxu0 %v4505
        %v4527 = vpop.f32.mrf.mxu0
        %v4528 = vadd.f32 0.0, %v4527
        %4529 = vdwg.mxu0
        %4530 = vrot.lane.b32.xlu0 %v1127, 40
        %v4531 = vpop.permute.xlu0 %4530
        %4532 = vrot.lane.b32.xlu0 %v1130, 40
        %v4533 = vpop.permute.xlu0 %4532
        %v4537 = vsel %vm1493, %v4415, 0
        %v4540 = vsel %vm1493, %v4416, 0
        %4542 = vmatpush.msra.mxu0 0.0
        %4543 = vmatpush.msra.mxu0 0.0
        %4544 = vmatpush.msra.mxu0 0.0
        %4545 = vmatpush.msra.mxu0 0.0
        %4546 = vmatpush.msra.mxu0 0.0
        %4547 = vmatpush.msra.mxu0 0.0
        %4548 = vmatpush.msra.mxu0 0.0
        %4549 = vmatpush.msra.mxu0 0.0
        %4550 = vmatpush.msra.mxu0 0.0
        %4551 = vmatpush.msra.mxu0 0.0
        %4552 = vmatpush.msra.mxu0 0.0
        %4553 = vmatpush.msra.mxu0 0.0
        %4554 = vmatpush.msra.mxu0 0.0
        %4555 = vmatpush.msra.mxu0 0.0
        %4556 = vmatpush.msra.mxu0 %v4533
        %4557 = vmatpush.msra.mxu0 %v4531
        %4558 = vmatmul.f32.gmra.mxu0 %v4537
        %v4559 = vpop.f32.mrf.mxu0
        %v4560 = vadd.f32 0.0, %v4559
        %4561 = vmatmul.f32.gmra.mxu0 %v4540
        %v4562 = vpop.f32.mrf.mxu0
        %v4563 = vadd.f32 0.0, %v4562
        %4564 = vdwg.mxu0
        %4565 = vrot.lane.b32.xlu0 %v1133, 40
        %v4566 = vpop.permute.xlu0 %4565
        %4567 = vrot.lane.b32.xlu0 %v1136, 40
        %v4568 = vpop.permute.xlu0 %4567
        %v4572 = vsel %vm1493, %v4417, 0
        %v4575 = vsel %vm1493, %v4418, 0
        %4577 = vmatpush.msra.mxu0 0.0
        %4578 = vmatpush.msra.mxu0 0.0
        %4579 = vmatpush.msra.mxu0 0.0
        %4580 = vmatpush.msra.mxu0 0.0
        %4581 = vmatpush.msra.mxu0 0.0
        %4582 = vmatpush.msra.mxu0 0.0
        %4583 = vmatpush.msra.mxu0 0.0
        %4584 = vmatpush.msra.mxu0 0.0
        %4585 = vmatpush.msra.mxu0 0.0
        %4586 = vmatpush.msra.mxu0 0.0
        %4587 = vmatpush.msra.mxu0 0.0
        %4588 = vmatpush.msra.mxu0 0.0
        %4589 = vmatpush.msra.mxu0 0.0
        %4590 = vmatpush.msra.mxu0 0.0
        %4591 = vmatpush.msra.mxu0 %v4568
        %4592 = vmatpush.msra.mxu0 %v4566
        %4593 = vmatmul.f32.gmra.mxu0 %v4572
        %v4594 = vpop.f32.mrf.mxu0
        %v4595 = vadd.f32 0.0, %v4594
        %4596 = vmatmul.f32.gmra.mxu0 %v4575
        %v4597 = vpop.f32.mrf.mxu0
        %v4598 = vadd.f32 0.0, %v4597
        %4599 = vdwg.mxu0
        %4600 = vrot.lane.b32.xlu0 %v1139, 40
        %v4601 = vpop.permute.xlu0 %4600
        %4602 = vrot.lane.b32.xlu0 %v1142, 40
        %v4603 = vpop.permute.xlu0 %4602
        %v4607 = vsel %vm1493, %v4419, 0
        %v4610 = vsel %vm1493, %v4420, 0
        %4612 = vmatpush.msra.mxu0 0.0
        %4613 = vmatpush.msra.mxu0 0.0
        %4614 = vmatpush.msra.mxu0 0.0
        %4615 = vmatpush.msra.mxu0 0.0
        %4616 = vmatpush.msra.mxu0 0.0
        %4617 = vmatpush.msra.mxu0 0.0
        %4618 = vmatpush.msra.mxu0 0.0
        %4619 = vmatpush.msra.mxu0 0.0
        %4620 = vmatpush.msra.mxu0 0.0
        %4621 = vmatpush.msra.mxu0 0.0
        %4622 = vmatpush.msra.mxu0 0.0
        %4623 = vmatpush.msra.mxu0 0.0
        %4624 = vmatpush.msra.mxu0 0.0
        %4625 = vmatpush.msra.mxu0 0.0
        %4626 = vmatpush.msra.mxu0 %v4603
        %4627 = vmatpush.msra.mxu0 %v4601
        %4628 = vmatmul.f32.gmra.mxu0 %v4607
        %v4629 = vpop.f32.mrf.mxu0
        %v4630 = vadd.f32 0.0, %v4629
        %4631 = vmatmul.f32.gmra.mxu0 %v4610
        %v4632 = vpop.f32.mrf.mxu0
        %v4633 = vadd.f32 0.0, %v4632
        %4634 = vdwg.mxu0
        %4635 = vrot.lane.b32.xlu0 %v1145, 40
        %v4636 = vpop.permute.xlu0 %4635
        %4637 = vrot.lane.b32.xlu0 %v1148, 40
        %v4638 = vpop.permute.xlu0 %4637
        %v4642 = vsel %vm1493, %v4421, 0
        %v4645 = vsel %vm1493, %v4422, 0
        %4647 = vmatpush.msra.mxu0 0.0
        %4648 = vmatpush.msra.mxu0 0.0
        %4649 = vmatpush.msra.mxu0 0.0
        %4650 = vmatpush.msra.mxu0 0.0
        %4651 = vmatpush.msra.mxu0 0.0
        %4652 = vmatpush.msra.mxu0 0.0
        %4653 = vmatpush.msra.mxu0 0.0
        %4654 = vmatpush.msra.mxu0 0.0
        %4655 = vmatpush.msra.mxu0 0.0
        %4656 = vmatpush.msra.mxu0 0.0
        %4657 = vmatpush.msra.mxu0 0.0
        %4658 = vmatpush.msra.mxu0 0.0
        %4659 = vmatpush.msra.mxu0 0.0
        %4660 = vmatpush.msra.mxu0 0.0
        %4661 = vmatpush.msra.mxu0 %v4638
        %4662 = vmatpush.msra.mxu0 %v4636
        %4663 = vmatmul.f32.gmra.mxu0 %v4642
        %v4664 = vpop.f32.mrf.mxu0
        %v4665 = vadd.f32 0.0, %v4664
        %4666 = vmatmul.f32.gmra.mxu0 %v4645
        %v4667 = vpop.f32.mrf.mxu0
        %v4668 = vadd.f32 0.0, %v4667
        %4669 = vdwg.mxu0
        %4670 = vrot.lane.b32.xlu0 %v1151, 40
        %v4671 = vpop.permute.xlu0 %4670
        %4672 = vrot.lane.b32.xlu0 %v1154, 40
        %v4673 = vpop.permute.xlu0 %4672
        %v4677 = vsel %vm1493, %v4423, 0
        %v4680 = vsel %vm1493, %v4424, 0
        %4682 = vmatpush.msra.mxu0 0.0
        %4683 = vmatpush.msra.mxu0 0.0
        %4684 = vmatpush.msra.mxu0 0.0
        %4685 = vmatpush.msra.mxu0 0.0
        %4686 = vmatpush.msra.mxu0 0.0
        %4687 = vmatpush.msra.mxu0 0.0
        %4688 = vmatpush.msra.mxu0 0.0
        %4689 = vmatpush.msra.mxu0 0.0
        %4690 = vmatpush.msra.mxu0 0.0
        %4691 = vmatpush.msra.mxu0 0.0
        %4692 = vmatpush.msra.mxu0 0.0
        %4693 = vmatpush.msra.mxu0 0.0
        %4694 = vmatpush.msra.mxu0 0.0
        %4695 = vmatpush.msra.mxu0 0.0
        %4696 = vmatpush.msra.mxu0 %v4673
        %4697 = vmatpush.msra.mxu0 %v4671
        %4698 = vmatmul.f32.gmra.mxu0 %v4677
        %v4699 = vpop.f32.mrf.mxu0
        %v4700 = vadd.f32 0.0, %v4699
        %4701 = vmatmul.f32.gmra.mxu0 %v4680
        %v4702 = vpop.f32.mrf.mxu0
        %v4703 = vadd.f32 0.0, %v4702
        %4704 = vdwg.mxu0
        %v4706 = vsel %vm1170, %v4455, 0
        %v4709 = vsel %vm1170, %v4458, 0
        %v4712 = vsel %vm1170, %v4490, 0
        %v4715 = vsel %vm1170, %v4493, 0
        %v4718 = vsel %vm1170, %v4525, 0
        %v4721 = vsel %vm1170, %v4528, 0
        %v4724 = vsel %vm1170, %v4560, 0
        %v4727 = vsel %vm1170, %v4563, 0
        %v4730 = vsel %vm1170, %v4595, 0
        %v4733 = vsel %vm1170, %v4598, 0
        %v4736 = vsel %vm1170, %v4630, 0
        %v4739 = vsel %vm1170, %v4633, 0
        %v4742 = vsel %vm1170, %v4665, 0
        %v4745 = vsel %vm1170, %v4668, 0
        %v4748 = vsel %vm1170, %v4700, 0
        %v4751 = vsel %vm1170, %v4703, 0
        %4753 = vmatpush.msra.mxu0 0.0
        %4754 = vmatpush.msra.mxu0 0.0
        %4755 = vmatpush.msra.mxu0 0.0
        %4756 = vmatpush.msra.mxu0 0.0
        %4757 = vmatpush.msra.mxu0 0.0
        %4758 = vmatpush.msra.mxu0 0.0
        %4759 = vmatpush.msra.mxu0 0.0
        %4760 = vmatpush.msra.mxu0 0.0
        %4761 = vmatpush.msra.mxu0 0.0
        %4762 = vmatpush.msra.mxu0 0.0
        %4763 = vmatpush.msra.mxu0 0.0
        %4764 = vmatpush.msra.mxu0 0.0
        %4765 = vmatpush.msra.mxu0 0.0
        %4766 = vmatpush.msra.mxu0 0.0
        %4767 = vmatpush.msra.mxu0 0.0
        %4768 = vmatpush.msra.mxu0 %v1163
        %4769 = vmatmul.f32.gmra.mxu0 %v4706
        %v4770 = vpop.f32.mrf.mxu0
        %v4771 = vadd.f32 0.0, %v4770
        %4772 = vmatmul.f32.gmra.mxu0 %v4709
        %v4773 = vpop.f32.mrf.mxu0
        %v4774 = vadd.f32 0.0, %v4773
        %4775 = vmatmul.f32.gmra.mxu0 %v4712
        %v4776 = vpop.f32.mrf.mxu0
        %v4777 = vadd.f32 0.0, %v4776
        %4778 = vmatmul.f32.gmra.mxu0 %v4715
        %v4779 = vpop.f32.mrf.mxu0
        %v4780 = vadd.f32 0.0, %v4779
        %4781 = vmatmul.f32.gmra.mxu0 %v4718
        %v4782 = vpop.f32.mrf.mxu0
        %v4783 = vadd.f32 0.0, %v4782
        %4784 = vmatmul.f32.gmra.mxu0 %v4721
        %v4785 = vpop.f32.mrf.mxu0
        %v4786 = vadd.f32 0.0, %v4785
        %4787 = vmatmul.f32.gmra.mxu0 %v4724
        %v4788 = vpop.f32.mrf.mxu0
        %v4789 = vadd.f32 0.0, %v4788
        %4790 = vmatmul.f32.gmra.mxu0 %v4727
        %v4791 = vpop.f32.mrf.mxu0
        %v4792 = vadd.f32 0.0, %v4791
        %4793 = vmatmul.f32.gmra.mxu0 %v4730
        %v4794 = vpop.f32.mrf.mxu0
        %v4795 = vadd.f32 0.0, %v4794
        %4796 = vmatmul.f32.gmra.mxu0 %v4733
        %v4797 = vpop.f32.mrf.mxu0
        %v4798 = vadd.f32 0.0, %v4797
        %4799 = vmatmul.f32.gmra.mxu0 %v4736
        %v4800 = vpop.f32.mrf.mxu0
        %v4801 = vadd.f32 0.0, %v4800
        %4802 = vmatmul.f32.gmra.mxu0 %v4739
        %v4803 = vpop.f32.mrf.mxu0
        %v4804 = vadd.f32 0.0, %v4803
        %4805 = vmatmul.f32.gmra.mxu0 %v4742
        %v4806 = vpop.f32.mrf.mxu0
        %v4807 = vadd.f32 0.0, %v4806
        %4808 = vmatmul.f32.gmra.mxu0 %v4745
        %v4809 = vpop.f32.mrf.mxu0
        %v4810 = vadd.f32 0.0, %v4809
        %4811 = vmatmul.f32.gmra.mxu0 %v4748
        %v4812 = vpop.f32.mrf.mxu0
        %v4813 = vadd.f32 0.0, %v4812
        %4814 = vmatmul.f32.gmra.mxu0 %v4751
        %v4815 = vpop.f32.mrf.mxu0
        %v4816 = vadd.f32 0.0, %v4815
        %4817 = vdwg.mxu0
        %v4818 = vadd.f32 %v3889, %v4771
        %v4819 = vadd.f32 %v3890, %v4774
        %v4820 = vadd.f32 %v3891, %v4777
        %v4821 = vadd.f32 %v3892, %v4780
        %v4822 = vadd.f32 %v3893, %v4783
        %v4823 = vadd.f32 %v3894, %v4786
        %v4824 = vadd.f32 %v3895, %v4789
        %v4825 = vadd.f32 %v3896, %v4792
        %v4826 = vadd.f32 %v3897, %v4795
        %v4827 = vadd.f32 %v3898, %v4798
        %v4828 = vadd.f32 %v3899, %v4801
        %v4829 = vadd.f32 %v3900, %v4804
        %v4830 = vadd.f32 %v3901, %v4807
        %v4831 = vadd.f32 %v3902, %v4810
        %v4832 = vadd.f32 %v3903, %v4813
        %v4833 = vadd.f32 %v3904, %v4816
        %v4834 = vld [vmem:[%s796] sm:$0x1]
        %v4836 = vperm.slane %v4834, 0
        %v4838 = vadd.f32 %v4818, %v4836
        %v4839 = vadd.f32 %v4819, %v4836
        %v4840 = vadd.f32 %v4820, %v4836
        %v4841 = vadd.f32 %v4821, %v4836
        %v4842 = vadd.f32 %v4822, %v4836
        %v4843 = vadd.f32 %v4823, %v4836
        %v4844 = vadd.f32 %v4824, %v4836
        %v4845 = vadd.f32 %v4825, %v4836
        %v4846 = vadd.f32 %v4826, %v4836
        %v4847 = vadd.f32 %v4827, %v4836
        %v4848 = vadd.f32 %v4828, %v4836
        %v4849 = vadd.f32 %v4829, %v4836
        %v4850 = vadd.f32 %v4830, %v4836
        %v4851 = vadd.f32 %v4831, %v4836
        %v4852 = vadd.f32 %v4832, %v4836
        %v4853 = vadd.f32 %v4833, %v4836
        %v4854 = vadd.f32 %v1018, %v4838
        %v4855 = vadd.f32 %v1019, %v4839
        %v4856 = vadd.f32 %v1020, %v4840
        %v4857 = vadd.f32 %v1021, %v4841
        %v4858 = vadd.f32 %v1022, %v4842
        %v4859 = vadd.f32 %v1023, %v4843
        %v4860 = vadd.f32 %v1024, %v4844
        %v4861 = vadd.f32 %v1025, %v4845
        %v4862 = vadd.f32 %v1026, %v4846
        %v4863 = vadd.f32 %v1027, %v4847
        %v4864 = vadd.f32 %v1028, %v4848
        %v4865 = vadd.f32 %v1029, %v4849
        %v4866 = vadd.f32 %v1030, %v4850
        %v4867 = vadd.f32 %v1031, %v4851
        %v4868 = vadd.f32 %v1032, %v4852
        %v4869 = vadd.f32 %v1033, %v4853
        %v4870 = vld [vmem:[%s799] sm:$0x1]
        %v4871 = vld [vmem:[%s802] sm:$0x1]
        %v4872 = vsel %vm1042, %v4854, 0.0
        %4873 = vadd.xlane.f32.xlu0 %v4872
        %v4874 = vpop.xlane.xlu0 %4873
        %v4875 = vsel %vm1042, %v4855, 0.0
        %4876 = vadd.xlane.f32.xlu0 %v4875
        %v4877 = vpop.xlane.xlu0 %4876
        %v4878 = vsel %vm1042, %v4856, 0.0
        %4879 = vadd.xlane.f32.xlu0 %v4878
        %v4880 = vpop.xlane.xlu0 %4879
        %v4881 = vsel %vm1042, %v4857, 0.0
        %4882 = vadd.xlane.f32.xlu0 %v4881
        %v4883 = vpop.xlane.xlu0 %4882
        %v4884 = vsel %vm1042, %v4858, 0.0
        %4885 = vadd.xlane.f32.xlu0 %v4884
        %v4886 = vpop.xlane.xlu0 %4885
        %v4887 = vsel %vm1042, %v4859, 0.0
        %4888 = vadd.xlane.f32.xlu0 %v4887
        %v4889 = vpop.xlane.xlu0 %4888
        %v4890 = vsel %vm1042, %v4860, 0.0
        %4891 = vadd.xlane.f32.xlu0 %v4890
        %v4892 = vpop.xlane.xlu0 %4891
        %v4893 = vsel %vm1042, %v4861, 0.0
        %4894 = vadd.xlane.f32.xlu0 %v4893
        %v4895 = vpop.xlane.xlu0 %4894
        %v4896 = vsel %vm1042, %v4862, 0.0
        %4897 = vadd.xlane.f32.xlu0 %v4896
        %v4898 = vpop.xlane.xlu0 %4897
        %v4899 = vsel %vm1042, %v4863, 0.0
        %4900 = vadd.xlane.f32.xlu0 %v4899
        %v4901 = vpop.xlane.xlu0 %4900
        %v4902 = vsel %vm1042, %v4864, 0.0
        %4903 = vadd.xlane.f32.xlu0 %v4902
        %v4904 = vpop.xlane.xlu0 %4903
        %v4905 = vsel %vm1042, %v4865, 0.0
        %4906 = vadd.xlane.f32.xlu0 %v4905
        %v4907 = vpop.xlane.xlu0 %4906
        %v4908 = vsel %vm1042, %v4866, 0.0
        %4909 = vadd.xlane.f32.xlu0 %v4908
        %v4910 = vpop.xlane.xlu0 %4909
        %v4911 = vsel %vm1042, %v4867, 0.0
        %4912 = vadd.xlane.f32.xlu0 %v4911
        %v4913 = vpop.xlane.xlu0 %4912
        %v4914 = vsel %vm1042, %v4868, 0.0
        %4915 = vadd.xlane.f32.xlu0 %v4914
        %v4916 = vpop.xlane.xlu0 %4915
        %v4917 = vsel %vm1042, %v4869, 0.0
        %4918 = vadd.xlane.f32.xlu0 %v4917
        %v4919 = vpop.xlane.xlu0 %4918
        %v4920 = vrcp.pop 32.0
        %v4921 = vmul.f32 32.0, %v4920
        %v4922 = vsub.f32 1.0, %v4921
        %v4923 = vmul.f32 %v4920, %v4922
        %v4924 = vadd.f32 %v4920, %v4923
        %vm4925 = vweird.f32 %v4920
        %v4926 = vsel %vm4925, %v4920, %v4924
        %v4927 = vmul.f32 %v4874, %v4926
        %v4928 = vmul.f32 %v4877, %v4926
        %v4929 = vmul.f32 %v4880, %v4926
        %v4930 = vmul.f32 %v4883, %v4926
        %v4931 = vmul.f32 %v4886, %v4926
        %v4932 = vmul.f32 %v4889, %v4926
        %v4933 = vmul.f32 %v4892, %v4926
        %v4934 = vmul.f32 %v4895, %v4926
        %v4935 = vmul.f32 %v4898, %v4926
        %v4936 = vmul.f32 %v4901, %v4926
        %v4937 = vmul.f32 %v4904, %v4926
        %v4938 = vmul.f32 %v4907, %v4926
        %v4939 = vmul.f32 %v4910, %v4926
        %v4940 = vmul.f32 %v4913, %v4926
        %v4941 = vmul.f32 %v4916, %v4926
        %v4942 = vmul.f32 %v4919, %v4926
        %v4943 = vsub.f32 %v4854, %v4927
        %v4944 = vsub.f32 %v4855, %v4928
        %v4945 = vsub.f32 %v4856, %v4929
        %v4946 = vsub.f32 %v4857, %v4930
        %v4947 = vsub.f32 %v4858, %v4931
        %v4948 = vsub.f32 %v4859, %v4932
        %v4949 = vsub.f32 %v4860, %v4933
        %v4950 = vsub.f32 %v4861, %v4934
        %v4951 = vsub.f32 %v4862, %v4935
        %v4952 = vsub.f32 %v4863, %v4936
        %v4953 = vsub.f32 %v4864, %v4937
        %v4954 = vsub.f32 %v4865, %v4938
        %v4955 = vsub.f32 %v4866, %v4939
        %v4956 = vsub.f32 %v4867, %v4940
        %v4957 = vsub.f32 %v4868, %v4941
        %v4958 = vsub.f32 %v4869, %v4942
        %v4959 = vmul.f32 %v4943, %v4943
        %v4960 = vmul.f32 %v4944, %v4944
        %v4961 = vmul.f32 %v4945, %v4945
        %v4962 = vmul.f32 %v4946, %v4946
        %v4963 = vmul.f32 %v4947, %v4947
        %v4964 = vmul.f32 %v4948, %v4948
        %v4965 = vmul.f32 %v4949, %v4949
        %v4966 = vmul.f32 %v4950, %v4950
        %v4967 = vmul.f32 %v4951, %v4951
        %v4968 = vmul.f32 %v4952, %v4952
        %v4969 = vmul.f32 %v4953, %v4953
        %v4970 = vmul.f32 %v4954, %v4954
        %v4971 = vmul.f32 %v4955, %v4955
        %v4972 = vmul.f32 %v4956, %v4956
        %v4973 = vmul.f32 %v4957, %v4957
        %v4974 = vmul.f32 %v4958, %v4958
        %v4975 = vsel %vm1042, %v4959, 0.0
        %4976 = vadd.xlane.f32.xlu0 %v4975
        %v4977 = vpop.xlane.xlu0 %4976
        %v4978 = vsel %vm1042, %v4960, 0.0
        %4979 = vadd.xlane.f32.xlu0 %v4978
        %v4980 = vpop.xlane.xlu0 %4979
        %v4981 = vsel %vm1042, %v4961, 0.0
        %4982 = vadd.xlane.f32.xlu0 %v4981
        %v4983 = vpop.xlane.xlu0 %4982
        %v4984 = vsel %vm1042, %v4962, 0.0
        %4985 = vadd.xlane.f32.xlu0 %v4984
        %v4986 = vpop.xlane.xlu0 %4985
        %v4987 = vsel %vm1042, %v4963, 0.0
        %4988 = vadd.xlane.f32.xlu0 %v4987
        %v4989 = vpop.xlane.xlu0 %4988
        %v4990 = vsel %vm1042, %v4964, 0.0
        %4991 = vadd.xlane.f32.xlu0 %v4990
        %v4992 = vpop.xlane.xlu0 %4991
        %v4993 = vsel %vm1042, %v4965, 0.0
        %4994 = vadd.xlane.f32.xlu0 %v4993
        %v4995 = vpop.xlane.xlu0 %4994
        %v4996 = vsel %vm1042, %v4966, 0.0
        %4997 = vadd.xlane.f32.xlu0 %v4996
        %v4998 = vpop.xlane.xlu0 %4997
        %v4999 = vsel %vm1042, %v4967, 0.0
        %5000 = vadd.xlane.f32.xlu0 %v4999
        %v5001 = vpop.xlane.xlu0 %5000
        %v5002 = vsel %vm1042, %v4968, 0.0
        %5003 = vadd.xlane.f32.xlu0 %v5002
        %v5004 = vpop.xlane.xlu0 %5003
        %v5005 = vsel %vm1042, %v4969, 0.0
        %5006 = vadd.xlane.f32.xlu0 %v5005
        %v5007 = vpop.xlane.xlu0 %5006
        %v5008 = vsel %vm1042, %v4970, 0.0
        %5009 = vadd.xlane.f32.xlu0 %v5008
        %v5010 = vpop.xlane.xlu0 %5009
        %v5011 = vsel %vm1042, %v4971, 0.0
        %5012 = vadd.xlane.f32.xlu0 %v5011
        %v5013 = vpop.xlane.xlu0 %5012
        %v5014 = vsel %vm1042, %v4972, 0.0
        %5015 = vadd.xlane.f32.xlu0 %v5014
        %v5016 = vpop.xlane.xlu0 %5015
        %v5017 = vsel %vm1042, %v4973, 0.0
        %5018 = vadd.xlane.f32.xlu0 %v5017
        %v5019 = vpop.xlane.xlu0 %5018
        %v5020 = vsel %vm1042, %v4974, 0.0
        %5021 = vadd.xlane.f32.xlu0 %v5020
        %v5022 = vpop.xlane.xlu0 %5021
        %v5023 = vmul.f32 %v4977, %v4926
        %v5024 = vmul.f32 %v4980, %v4926
        %v5025 = vmul.f32 %v4983, %v4926
        %v5026 = vmul.f32 %v4986, %v4926
        %v5027 = vmul.f32 %v4989, %v4926
        %v5028 = vmul.f32 %v4992, %v4926
        %v5029 = vmul.f32 %v4995, %v4926
        %v5030 = vmul.f32 %v4998, %v4926
        %v5031 = vmul.f32 %v5001, %v4926
        %v5032 = vmul.f32 %v5004, %v4926
        %v5033 = vmul.f32 %v5007, %v4926
        %v5034 = vmul.f32 %v5010, %v4926
        %v5035 = vmul.f32 %v5013, %v4926
        %v5036 = vmul.f32 %v5016, %v4926
        %v5037 = vmul.f32 %v5019, %v4926
        %v5038 = vmul.f32 %v5022, %v4926
        %v5039 = vadd.f32 %v5023, 1e-05
        %v5040 = vadd.f32 %v5024, 1e-05
        %v5041 = vadd.f32 %v5025, 1e-05
        %v5042 = vadd.f32 %v5026, 1e-05
        %v5043 = vadd.f32 %v5027, 1e-05
        %v5044 = vadd.f32 %v5028, 1e-05
        %v5045 = vadd.f32 %v5029, 1e-05
        %v5046 = vadd.f32 %v5030, 1e-05
        %v5047 = vadd.f32 %v5031, 1e-05
        %v5048 = vadd.f32 %v5032, 1e-05
        %v5049 = vadd.f32 %v5033, 1e-05
        %v5050 = vadd.f32 %v5034, 1e-05
        %v5051 = vadd.f32 %v5035, 1e-05
        %v5052 = vadd.f32 %v5036, 1e-05
        %v5053 = vadd.f32 %v5037, 1e-05
        %v5054 = vadd.f32 %v5038, 1e-05
        %v5055 = vrsqrt.pop %v5039
        %v5056 = vmul.f32 %v5055, %v5039
        %v5057 = vmul.f32 %v5056, %v5055
        %v5058 = vmul.f32 0.5, %v5057
        %v5059 = vsub.f32 1.5, %v5058
        %v5060 = vmul.f32 %v5055, %v5059
        %vm5061 = vweird.f32 %v5039
        %vm5062 = vweird.f32 %v5055
        %vm5063 = vmor %vm5061, %vm5062
        %v5064 = vsel %vm5063, %v5055, %v5060
        %v5065 = vrsqrt.pop %v5040
        %v5066 = vmul.f32 %v5065, %v5040
        %v5067 = vmul.f32 %v5066, %v5065
        %v5068 = vmul.f32 0.5, %v5067
        %v5069 = vsub.f32 1.5, %v5068
        %v5070 = vmul.f32 %v5065, %v5069
        %vm5071 = vweird.f32 %v5040
        %vm5072 = vweird.f32 %v5065
        %vm5073 = vmor %vm5071, %vm5072
        %v5074 = vsel %vm5073, %v5065, %v5070
        %v5075 = vrsqrt.pop %v5041
        %v5076 = vmul.f32 %v5075, %v5041
        %v5077 = vmul.f32 %v5076, %v5075
        %v5078 = vmul.f32 0.5, %v5077
        %v5079 = vsub.f32 1.5, %v5078
        %v5080 = vmul.f32 %v5075, %v5079
        %vm5081 = vweird.f32 %v5041
        %vm5082 = vweird.f32 %v5075
        %vm5083 = vmor %vm5081, %vm5082
        %v5084 = vsel %vm5083, %v5075, %v5080
        %v5085 = vrsqrt.pop %v5042
        %v5086 = vmul.f32 %v5085, %v5042
        %v5087 = vmul.f32 %v5086, %v5085
        %v5088 = vmul.f32 0.5, %v5087
        %v5089 = vsub.f32 1.5, %v5088
        %v5090 = vmul.f32 %v5085, %v5089
        %vm5091 = vweird.f32 %v5042
        %vm5092 = vweird.f32 %v5085
        %vm5093 = vmor %vm5091, %vm5092
        %v5094 = vsel %vm5093, %v5085, %v5090
        %v5095 = vrsqrt.pop %v5043
        %v5096 = vmul.f32 %v5095, %v5043
        %v5097 = vmul.f32 %v5096, %v5095
        %v5098 = vmul.f32 0.5, %v5097
        %v5099 = vsub.f32 1.5, %v5098
        %v5100 = vmul.f32 %v5095, %v5099
        %vm5101 = vweird.f32 %v5043
        %vm5102 = vweird.f32 %v5095
        %vm5103 = vmor %vm5101, %vm5102
        %v5104 = vsel %vm5103, %v5095, %v5100
        %v5105 = vrsqrt.pop %v5044
        %v5106 = vmul.f32 %v5105, %v5044
        %v5107 = vmul.f32 %v5106, %v5105
        %v5108 = vmul.f32 0.5, %v5107
        %v5109 = vsub.f32 1.5, %v5108
        %v5110 = vmul.f32 %v5105, %v5109
        %vm5111 = vweird.f32 %v5044
        %vm5112 = vweird.f32 %v5105
        %vm5113 = vmor %vm5111, %vm5112
        %v5114 = vsel %vm5113, %v5105, %v5110
        %v5115 = vrsqrt.pop %v5045
        %v5116 = vmul.f32 %v5115, %v5045
        %v5117 = vmul.f32 %v5116, %v5115
        %v5118 = vmul.f32 0.5, %v5117
        %v5119 = vsub.f32 1.5, %v5118
        %v5120 = vmul.f32 %v5115, %v5119
        %vm5121 = vweird.f32 %v5045
        %vm5122 = vweird.f32 %v5115
        %vm5123 = vmor %vm5121, %vm5122
        %v5124 = vsel %vm5123, %v5115, %v5120
        %v5125 = vrsqrt.pop %v5046
        %v5126 = vmul.f32 %v5125, %v5046
        %v5127 = vmul.f32 %v5126, %v5125
        %v5128 = vmul.f32 0.5, %v5127
        %v5129 = vsub.f32 1.5, %v5128
        %v5130 = vmul.f32 %v5125, %v5129
        %vm5131 = vweird.f32 %v5046
        %vm5132 = vweird.f32 %v5125
        %vm5133 = vmor %vm5131, %vm5132
        %v5134 = vsel %vm5133, %v5125, %v5130
        %v5135 = vrsqrt.pop %v5047
        %v5136 = vmul.f32 %v5135, %v5047
        %v5137 = vmul.f32 %v5136, %v5135
        %v5138 = vmul.f32 0.5, %v5137
        %v5139 = vsub.f32 1.5, %v5138
        %v5140 = vmul.f32 %v5135, %v5139
        %vm5141 = vweird.f32 %v5047
        %vm5142 = vweird.f32 %v5135
        %vm5143 = vmor %vm5141, %vm5142
        %v5144 = vsel %vm5143, %v5135, %v5140
        %v5145 = vrsqrt.pop %v5048
        %v5146 = vmul.f32 %v5145, %v5048
        %v5147 = vmul.f32 %v5146, %v5145
        %v5148 = vmul.f32 0.5, %v5147
        %v5149 = vsub.f32 1.5, %v5148
        %v5150 = vmul.f32 %v5145, %v5149
        %vm5151 = vweird.f32 %v5048
        %vm5152 = vweird.f32 %v5145
        %vm5153 = vmor %vm5151, %vm5152
        %v5154 = vsel %vm5153, %v5145, %v5150
        %v5155 = vrsqrt.pop %v5049
        %v5156 = vmul.f32 %v5155, %v5049
        %v5157 = vmul.f32 %v5156, %v5155
        %v5158 = vmul.f32 0.5, %v5157
        %v5159 = vsub.f32 1.5, %v5158
        %v5160 = vmul.f32 %v5155, %v5159
        %vm5161 = vweird.f32 %v5049
        %vm5162 = vweird.f32 %v5155
        %vm5163 = vmor %vm5161, %vm5162
        %v5164 = vsel %vm5163, %v5155, %v5160
        %v5165 = vrsqrt.pop %v5050
        %v5166 = vmul.f32 %v5165, %v5050
        %v5167 = vmul.f32 %v5166, %v5165
        %v5168 = vmul.f32 0.5, %v5167
        %v5169 = vsub.f32 1.5, %v5168
        %v5170 = vmul.f32 %v5165, %v5169
        %vm5171 = vweird.f32 %v5050
        %vm5172 = vweird.f32 %v5165
        %vm5173 = vmor %vm5171, %vm5172
        %v5174 = vsel %vm5173, %v5165, %v5170
        %v5175 = vrsqrt.pop %v5051
        %v5176 = vmul.f32 %v5175, %v5051
        %v5177 = vmul.f32 %v5176, %v5175
        %v5178 = vmul.f32 0.5, %v5177
        %v5179 = vsub.f32 1.5, %v5178
        %v5180 = vmul.f32 %v5175, %v5179
        %vm5181 = vweird.f32 %v5051
        %vm5182 = vweird.f32 %v5175
        %vm5183 = vmor %vm5181, %vm5182
        %v5184 = vsel %vm5183, %v5175, %v5180
        %v5185 = vrsqrt.pop %v5052
        %v5186 = vmul.f32 %v5185, %v5052
        %v5187 = vmul.f32 %v5186, %v5185
        %v5188 = vmul.f32 0.5, %v5187
        %v5189 = vsub.f32 1.5, %v5188
        %v5190 = vmul.f32 %v5185, %v5189
        %vm5191 = vweird.f32 %v5052
        %vm5192 = vweird.f32 %v5185
        %vm5193 = vmor %vm5191, %vm5192
        %v5194 = vsel %vm5193, %v5185, %v5190
        %v5195 = vrsqrt.pop %v5053
        %v5196 = vmul.f32 %v5195, %v5053
        %v5197 = vmul.f32 %v5196, %v5195
        %v5198 = vmul.f32 0.5, %v5197
        %v5199 = vsub.f32 1.5, %v5198
        %v5200 = vmul.f32 %v5195, %v5199
        %vm5201 = vweird.f32 %v5053
        %vm5202 = vweird.f32 %v5195
        %vm5203 = vmor %vm5201, %vm5202
        %v5204 = vsel %vm5203, %v5195, %v5200
        %v5205 = vrsqrt.pop %v5054
        %v5206 = vmul.f32 %v5205, %v5054
        %v5207 = vmul.f32 %v5206, %v5205
        %v5208 = vmul.f32 0.5, %v5207
        %v5209 = vsub.f32 1.5, %v5208
        %v5210 = vmul.f32 %v5205, %v5209
        %vm5211 = vweird.f32 %v5054
        %vm5212 = vweird.f32 %v5205
        %vm5213 = vmor %vm5211, %vm5212
        %v5214 = vsel %vm5213, %v5205, %v5210
        %v5215 = vmul.f32 %v4943, %v5064
        %v5216 = vmul.f32 %v4944, %v5074
        %v5217 = vmul.f32 %v4945, %v5084
        %v5218 = vmul.f32 %v4946, %v5094
        %v5219 = vmul.f32 %v4947, %v5104
        %v5220 = vmul.f32 %v4948, %v5114
        %v5221 = vmul.f32 %v4949, %v5124
        %v5222 = vmul.f32 %v4950, %v5134
        %v5223 = vmul.f32 %v4951, %v5144
        %v5224 = vmul.f32 %v4952, %v5154
        %v5225 = vmul.f32 %v4953, %v5164
        %v5226 = vmul.f32 %v4954, %v5174
        %v5227 = vmul.f32 %v4955, %v5184
        %v5228 = vmul.f32 %v4956, %v5194
        %v5229 = vmul.f32 %v4957, %v5204
        %v5230 = vmul.f32 %v4958, %v5214
        %v5232 = vperm.slane %v4870, 0
        %v5234 = vmul.f32 %v5215, %v5232
        %v5235 = vmul.f32 %v5216, %v5232
        %v5236 = vmul.f32 %v5217, %v5232
        %v5237 = vmul.f32 %v5218, %v5232
        %v5238 = vmul.f32 %v5219, %v5232
        %v5239 = vmul.f32 %v5220, %v5232
        %v5240 = vmul.f32 %v5221, %v5232
        %v5241 = vmul.f32 %v5222, %v5232
        %v5242 = vmul.f32 %v5223, %v5232
        %v5243 = vmul.f32 %v5224, %v5232
        %v5244 = vmul.f32 %v5225, %v5232
        %v5245 = vmul.f32 %v5226, %v5232
        %v5246 = vmul.f32 %v5227, %v5232
        %v5247 = vmul.f32 %v5228, %v5232
        %v5248 = vmul.f32 %v5229, %v5232
        %v5249 = vmul.f32 %v5230, %v5232
        %v5251 = vperm.slane %v4871, 0
        %v5253 = vadd.f32 %v5234, %v5251
        %v5254 = vadd.f32 %v5235, %v5251
        %v5255 = vadd.f32 %v5236, %v5251
        %v5256 = vadd.f32 %v5237, %v5251
        %v5257 = vadd.f32 %v5238, %v5251
        %v5258 = vadd.f32 %v5239, %v5251
        %v5259 = vadd.f32 %v5240, %v5251
        %v5260 = vadd.f32 %v5241, %v5251
        %v5261 = vadd.f32 %v5242, %v5251
        %v5262 = vadd.f32 %v5243, %v5251
        %v5263 = vadd.f32 %v5244, %v5251
        %v5264 = vadd.f32 %v5245, %v5251
        %v5265 = vadd.f32 %v5246, %v5251
        %v5266 = vadd.f32 %v5247, %v5251
        %v5267 = vadd.f32 %v5248, %v5251
        %v5268 = vadd.f32 %v5249, %v5251
        %v5269 = vld [vmem:[%s685] sm:$0xff]
        %v5270 = vld [vmem:[%s685 + $0x8] sm:$0xff]
        %v5271 = vld [vmem:[%s685 + $0x10] sm:$0xff]
        %v5272 = vld [vmem:[%s685 + $0x18] sm:$0xff]
        %v5273 = vld [vmem:[%s805] sm:$0x1]
        %v5275 = vperm.slane %v5273, 0
        %v5278 = vsel %vm1042, %v5253, 0
        %v5281 = vsel %vm1042, %v5254, 0
        %v5284 = vsel %vm1042, %v5255, 0
        %v5287 = vsel %vm1042, %v5256, 0
        %v5290 = vsel %vm1042, %v5257, 0
        %v5293 = vsel %vm1042, %v5258, 0
        %v5296 = vsel %vm1042, %v5259, 0
        %v5299 = vsel %vm1042, %v5260, 0
        %v5302 = vsel %vm1042, %v5261, 0
        %v5305 = vsel %vm1042, %v5262, 0
        %v5308 = vsel %vm1042, %v5263, 0
        %v5311 = vsel %vm1042, %v5264, 0
        %v5314 = vsel %vm1042, %v5265, 0
        %v5317 = vsel %vm1042, %v5266, 0
        %v5320 = vsel %vm1042, %v5267, 0
        %v5323 = vsel %vm1042, %v5268, 0
        %5325 = vmatpush.msra.mxu0 0.0
        %5326 = vmatpush.msra.mxu0 0.0
        %5327 = vmatpush.msra.mxu0 0.0
        %5328 = vmatpush.msra.mxu0 0.0
        %5329 = vmatpush.msra.mxu0 0.0
        %5330 = vmatpush.msra.mxu0 0.0
        %5331 = vmatpush.msra.mxu0 0.0
        %5332 = vmatpush.msra.mxu0 0.0
        %5333 = vmatpush.msra.mxu0 0.0
        %5334 = vmatpush.msra.mxu0 0.0
        %5335 = vmatpush.msra.mxu0 0.0
        %5336 = vmatpush.msra.mxu0 0.0
        %5337 = vmatpush.msra.mxu0 %v5272
        %5338 = vmatpush.msra.mxu0 %v5271
        %5339 = vmatpush.msra.mxu0 %v5270
        %5340 = vmatpush.msra.mxu0 %v5269
        %5341 = vmatmul.f32.gmra.mxu0 %v5278
        %v5342 = vpop.f32.mrf.mxu0
        %v5343 = vadd.f32 %v5275, %v5342
        %5344 = vmatmul.f32.gmra.mxu0 %v5281
        %v5345 = vpop.f32.mrf.mxu0
        %v5346 = vadd.f32 %v5275, %v5345
        %5347 = vmatmul.f32.gmra.mxu0 %v5284
        %v5348 = vpop.f32.mrf.mxu0
        %v5349 = vadd.f32 %v5275, %v5348
        %5350 = vmatmul.f32.gmra.mxu0 %v5287
        %v5351 = vpop.f32.mrf.mxu0
        %v5352 = vadd.f32 %v5275, %v5351
        %5353 = vmatmul.f32.gmra.mxu0 %v5290
        %v5354 = vpop.f32.mrf.mxu0
        %v5355 = vadd.f32 %v5275, %v5354
        %5356 = vmatmul.f32.gmra.mxu0 %v5293
        %v5357 = vpop.f32.mrf.mxu0
        %v5358 = vadd.f32 %v5275, %v5357
        %5359 = vmatmul.f32.gmra.mxu0 %v5296
        %v5360 = vpop.f32.mrf.mxu0
        %v5361 = vadd.f32 %v5275, %v5360
        %5362 = vmatmul.f32.gmra.mxu0 %v5299
        %v5363 = vpop.f32.mrf.mxu0
        %v5364 = vadd.f32 %v5275, %v5363
        %5365 = vmatmul.f32.gmra.mxu0 %v5302
        %v5366 = vpop.f32.mrf.mxu0
        %v5367 = vadd.f32 %v5275, %v5366
        %5368 = vmatmul.f32.gmra.mxu0 %v5305
        %v5369 = vpop.f32.mrf.mxu0
        %v5370 = vadd.f32 %v5275, %v5369
        %5371 = vmatmul.f32.gmra.mxu0 %v5308
        %v5372 = vpop.f32.mrf.mxu0
        %v5373 = vadd.f32 %v5275, %v5372
        %5374 = vmatmul.f32.gmra.mxu0 %v5311
        %v5375 = vpop.f32.mrf.mxu0
        %v5376 = vadd.f32 %v5275, %v5375
        %5377 = vmatmul.f32.gmra.mxu0 %v5314
        %v5378 = vpop.f32.mrf.mxu0
        %v5379 = vadd.f32 %v5275, %v5378
        %5380 = vmatmul.f32.gmra.mxu0 %v5317
        %v5381 = vpop.f32.mrf.mxu0
        %v5382 = vadd.f32 %v5275, %v5381
        %5383 = vmatmul.f32.gmra.mxu0 %v5320
        %v5384 = vpop.f32.mrf.mxu0
        %v5385 = vadd.f32 %v5275, %v5384
        %5386 = vmatmul.f32.gmra.mxu0 %v5323
        %v5387 = vpop.f32.mrf.mxu0
        %v5388 = vadd.f32 %v5275, %v5387
        %5389 = vdwg.mxu0
        %v5390 = vmax.f32 %v5343, 0.0
        %v5391 = vmax.f32 %v5346, 0.0
        %v5392 = vmax.f32 %v5349, 0.0
        %v5393 = vmax.f32 %v5352, 0.0
        %v5394 = vmax.f32 %v5355, 0.0
        %v5395 = vmax.f32 %v5358, 0.0
        %v5396 = vmax.f32 %v5361, 0.0
        %v5397 = vmax.f32 %v5364, 0.0
        %v5398 = vmax.f32 %v5367, 0.0
        %v5399 = vmax.f32 %v5370, 0.0
        %v5400 = vmax.f32 %v5373, 0.0
        %v5401 = vmax.f32 %v5376, 0.0
        %v5402 = vmax.f32 %v5379, 0.0
        %v5403 = vmax.f32 %v5382, 0.0
        %v5404 = vmax.f32 %v5385, 0.0
        %v5405 = vmax.f32 %v5388, 0.0
        %v5406 = vld [vmem:[%s810] sm:$0xff]
        %v5407 = vld [vmem:[%s810 + $0x8] sm:$0xff]
        %v5408 = vld [vmem:[%s810 + $0x10] sm:$0xff]
        %v5409 = vld [vmem:[%s810 + $0x18] sm:$0xff]
        %v5410 = vld [vmem:[%s810 + $0x20] sm:$0xff]
        %v5411 = vld [vmem:[%s810 + $0x28] sm:$0xff]
        %v5412 = vld [vmem:[%s810 + $0x30] sm:$0xff]
        %v5413 = vld [vmem:[%s810 + $0x38] sm:$0xff]
        %v5414 = vld [vmem:[%s813] sm:$0x1]
        %v5416 = vperm.slane %v5414, 0
        %vm5418 = vcmask 523264
        %v5420 = vsel %vm5418, %v5390, 0
        %v5423 = vsel %vm5418, %v5391, 0
        %v5426 = vsel %vm5418, %v5392, 0
        %v5429 = vsel %vm5418, %v5393, 0
        %v5432 = vsel %vm5418, %v5394, 0
        %v5435 = vsel %vm5418, %v5395, 0
        %v5438 = vsel %vm5418, %v5396, 0
        %v5441 = vsel %vm5418, %v5397, 0
        %v5444 = vsel %vm5418, %v5398, 0
        %v5447 = vsel %vm5418, %v5399, 0
        %v5450 = vsel %vm5418, %v5400, 0
        %v5453 = vsel %vm5418, %v5401, 0
        %v5456 = vsel %vm5418, %v5402, 0
        %v5459 = vsel %vm5418, %v5403, 0
        %v5462 = vsel %vm5418, %v5404, 0
        %v5465 = vsel %vm5418, %v5405, 0
        %5467 = vmatpush.msra.mxu0 0.0
        %5468 = vmatpush.msra.mxu0 0.0
        %5469 = vmatpush.msra.mxu0 0.0
        %5470 = vmatpush.msra.mxu0 0.0
        %5471 = vmatpush.msra.mxu0 0.0
        %5472 = vmatpush.msra.mxu0 0.0
        %5473 = vmatpush.msra.mxu0 0.0
        %5474 = vmatpush.msra.mxu0 0.0
        %5475 = vmatpush.msra.mxu0 %v5413
        %5476 = vmatpush.msra.mxu0 %v5412
        %5477 = vmatpush.msra.mxu0 %v5411
        %5478 = vmatpush.msra.mxu0 %v5410
        %5479 = vmatpush.msra.mxu0 %v5409
        %5480 = vmatpush.msra.mxu0 %v5408
        %5481 = vmatpush.msra.mxu0 %v5407
        %5482 = vmatpush.msra.mxu0 %v5406
        %5483 = vmatmul.f32.gmra.mxu0 %v5420
        %v5484 = vpop.f32.mrf.mxu0
        %v5485 = vadd.f32 %v5416, %v5484
        %5486 = vmatmul.f32.gmra.mxu0 %v5423
        %v5487 = vpop.f32.mrf.mxu0
        %v5488 = vadd.f32 %v5416, %v5487
        %5489 = vmatmul.f32.gmra.mxu0 %v5426
        %v5490 = vpop.f32.mrf.mxu0
        %v5491 = vadd.f32 %v5416, %v5490
        %5492 = vmatmul.f32.gmra.mxu0 %v5429
        %v5493 = vpop.f32.mrf.mxu0
        %v5494 = vadd.f32 %v5416, %v5493
        %5495 = vmatmul.f32.gmra.mxu0 %v5432
        %v5496 = vpop.f32.mrf.mxu0
        %v5497 = vadd.f32 %v5416, %v5496
        %5498 = vmatmul.f32.gmra.mxu0 %v5435
        %v5499 = vpop.f32.mrf.mxu0
        %v5500 = vadd.f32 %v5416, %v5499
        %5501 = vmatmul.f32.gmra.mxu0 %v5438
        %v5502 = vpop.f32.mrf.mxu0
        %v5503 = vadd.f32 %v5416, %v5502
        %5504 = vmatmul.f32.gmra.mxu0 %v5441
        %v5505 = vpop.f32.mrf.mxu0
        %v5506 = vadd.f32 %v5416, %v5505
        %5507 = vmatmul.f32.gmra.mxu0 %v5444
        %v5508 = vpop.f32.mrf.mxu0
        %v5509 = vadd.f32 %v5416, %v5508
        %5510 = vmatmul.f32.gmra.mxu0 %v5447
        %v5511 = vpop.f32.mrf.mxu0
        %v5512 = vadd.f32 %v5416, %v5511
        %5513 = vmatmul.f32.gmra.mxu0 %v5450
        %v5514 = vpop.f32.mrf.mxu0
        %v5515 = vadd.f32 %v5416, %v5514
        %5516 = vmatmul.f32.gmra.mxu0 %v5453
        %v5517 = vpop.f32.mrf.mxu0
        %v5518 = vadd.f32 %v5416, %v5517
        %5519 = vmatmul.f32.gmra.mxu0 %v5456
        %v5520 = vpop.f32.mrf.mxu0
        %v5521 = vadd.f32 %v5416, %v5520
        %5522 = vmatmul.f32.gmra.mxu0 %v5459
        %v5523 = vpop.f32.mrf.mxu0
        %v5524 = vadd.f32 %v5416, %v5523
        %5525 = vmatmul.f32.gmra.mxu0 %v5462
        %v5526 = vpop.f32.mrf.mxu0
        %v5527 = vadd.f32 %v5416, %v5526
        %5528 = vmatmul.f32.gmra.mxu0 %v5465
        %v5529 = vpop.f32.mrf.mxu0
        %v5530 = vadd.f32 %v5416, %v5529
        %5531 = vdwg.mxu0
        %v5532 = vadd.f32 %v5253, %v5485
        %v5533 = vadd.f32 %v5254, %v5488
        %v5534 = vadd.f32 %v5255, %v5491
        %v5535 = vadd.f32 %v5256, %v5494
        %v5536 = vadd.f32 %v5257, %v5497
        %v5537 = vadd.f32 %v5258, %v5500
        %v5538 = vadd.f32 %v5259, %v5503
        %v5539 = vadd.f32 %v5260, %v5506
        %v5540 = vadd.f32 %v5261, %v5509
        %v5541 = vadd.f32 %v5262, %v5512
        %v5542 = vadd.f32 %v5263, %v5515
        %v5543 = vadd.f32 %v5264, %v5518
        %v5544 = vadd.f32 %v5265, %v5521
        %v5545 = vadd.f32 %v5266, %v5524
        %v5546 = vadd.f32 %v5267, %v5527
        %v5547 = vadd.f32 %v5268, %v5530
        %v5548 = vld [vmem:[%s816] sm:$0x1]
        %v5549 = vld [vmem:[%s819] sm:$0x1]
        %v5550 = vsel %vm1042, %v5532, 0.0
        %5551 = vadd.xlane.f32.xlu0 %v5550
        %v5552 = vpop.xlane.xlu0 %5551
        %v5553 = vsel %vm1042, %v5533, 0.0
        %5554 = vadd.xlane.f32.xlu0 %v5553
        %v5555 = vpop.xlane.xlu0 %5554
        %v5556 = vsel %vm1042, %v5534, 0.0
        %5557 = vadd.xlane.f32.xlu0 %v5556
        %v5558 = vpop.xlane.xlu0 %5557
        %v5559 = vsel %vm1042, %v5535, 0.0
        %5560 = vadd.xlane.f32.xlu0 %v5559
        %v5561 = vpop.xlane.xlu0 %5560
        %v5562 = vsel %vm1042, %v5536, 0.0
        %5563 = vadd.xlane.f32.xlu0 %v5562
        %v5564 = vpop.xlane.xlu0 %5563
        %v5565 = vsel %vm1042, %v5537, 0.0
        %5566 = vadd.xlane.f32.xlu0 %v5565
        %v5567 = vpop.xlane.xlu0 %5566
        %v5568 = vsel %vm1042, %v5538, 0.0
        %5569 = vadd.xlane.f32.xlu0 %v5568
        %v5570 = vpop.xlane.xlu0 %5569
        %v5571 = vsel %vm1042, %v5539, 0.0
        %5572 = vadd.xlane.f32.xlu0 %v5571
        %v5573 = vpop.xlane.xlu0 %5572
        %v5574 = vsel %vm1042, %v5540, 0.0
        %5575 = vadd.xlane.f32.xlu0 %v5574
        %v5576 = vpop.xlane.xlu0 %5575
        %v5577 = vsel %vm1042, %v5541, 0.0
        %5578 = vadd.xlane.f32.xlu0 %v5577
        %v5579 = vpop.xlane.xlu0 %5578
        %v5580 = vsel %vm1042, %v5542, 0.0
        %5581 = vadd.xlane.f32.xlu0 %v5580
        %v5582 = vpop.xlane.xlu0 %5581
        %v5583 = vsel %vm1042, %v5543, 0.0
        %5584 = vadd.xlane.f32.xlu0 %v5583
        %v5585 = vpop.xlane.xlu0 %5584
        %v5586 = vsel %vm1042, %v5544, 0.0
        %5587 = vadd.xlane.f32.xlu0 %v5586
        %v5588 = vpop.xlane.xlu0 %5587
        %v5589 = vsel %vm1042, %v5545, 0.0
        %5590 = vadd.xlane.f32.xlu0 %v5589
        %v5591 = vpop.xlane.xlu0 %5590
        %v5592 = vsel %vm1042, %v5546, 0.0
        %5593 = vadd.xlane.f32.xlu0 %v5592
        %v5594 = vpop.xlane.xlu0 %5593
        %v5595 = vsel %vm1042, %v5547, 0.0
        %5596 = vadd.xlane.f32.xlu0 %v5595
        %v5597 = vpop.xlane.xlu0 %5596
        %v5598 = vmul.f32 %v5552, %v4926
        %v5599 = vmul.f32 %v5555, %v4926
        %v5600 = vmul.f32 %v5558, %v4926
        %v5601 = vmul.f32 %v5561, %v4926
        %v5602 = vmul.f32 %v5564, %v4926
        %v5603 = vmul.f32 %v5567, %v4926
        %v5604 = vmul.f32 %v5570, %v4926
        %v5605 = vmul.f32 %v5573, %v4926
        %v5606 = vmul.f32 %v5576, %v4926
        %v5607 = vmul.f32 %v5579, %v4926
        %v5608 = vmul.f32 %v5582, %v4926
        %v5609 = vmul.f32 %v5585, %v4926
        %v5610 = vmul.f32 %v5588, %v4926
        %v5611 = vmul.f32 %v5591, %v4926
        %v5612 = vmul.f32 %v5594, %v4926
        %v5613 = vmul.f32 %v5597, %v4926
        %v5614 = vsub.f32 %v5532, %v5598
        %v5615 = vsub.f32 %v5533, %v5599
        %v5616 = vsub.f32 %v5534, %v5600
        %v5617 = vsub.f32 %v5535, %v5601
        %v5618 = vsub.f32 %v5536, %v5602
        %v5619 = vsub.f32 %v5537, %v5603
        %v5620 = vsub.f32 %v5538, %v5604
        %v5621 = vsub.f32 %v5539, %v5605
        %v5622 = vsub.f32 %v5540, %v5606
        %v5623 = vsub.f32 %v5541, %v5607
        %v5624 = vsub.f32 %v5542, %v5608
        %v5625 = vsub.f32 %v5543, %v5609
        %v5626 = vsub.f32 %v5544, %v5610
        %v5627 = vsub.f32 %v5545, %v5611
        %v5628 = vsub.f32 %v5546, %v5612
        %v5629 = vsub.f32 %v5547, %v5613
        %v5630 = vmul.f32 %v5614, %v5614
        %v5631 = vmul.f32 %v5615, %v5615
        %v5632 = vmul.f32 %v5616, %v5616
        %v5633 = vmul.f32 %v5617, %v5617
        %v5634 = vmul.f32 %v5618, %v5618
        %v5635 = vmul.f32 %v5619, %v5619
        %v5636 = vmul.f32 %v5620, %v5620
        %v5637 = vmul.f32 %v5621, %v5621
        %v5638 = vmul.f32 %v5622, %v5622
        %v5639 = vmul.f32 %v5623, %v5623
        %v5640 = vmul.f32 %v5624, %v5624
        %v5641 = vmul.f32 %v5625, %v5625
        %v5642 = vmul.f32 %v5626, %v5626
        %v5643 = vmul.f32 %v5627, %v5627
        %v5644 = vmul.f32 %v5628, %v5628
        %v5645 = vmul.f32 %v5629, %v5629
        %v5646 = vsel %vm1042, %v5630, 0.0
        %5647 = vadd.xlane.f32.xlu0 %v5646
        %v5648 = vpop.xlane.xlu0 %5647
        %v5649 = vsel %vm1042, %v5631, 0.0
        %5650 = vadd.xlane.f32.xlu0 %v5649
        %v5651 = vpop.xlane.xlu0 %5650
        %v5652 = vsel %vm1042, %v5632, 0.0
        %5653 = vadd.xlane.f32.xlu0 %v5652
        %v5654 = vpop.xlane.xlu0 %5653
        %v5655 = vsel %vm1042, %v5633, 0.0
        %5656 = vadd.xlane.f32.xlu0 %v5655
        %v5657 = vpop.xlane.xlu0 %5656
        %v5658 = vsel %vm1042, %v5634, 0.0
        %5659 = vadd.xlane.f32.xlu0 %v5658
        %v5660 = vpop.xlane.xlu0 %5659
        %v5661 = vsel %vm1042, %v5635, 0.0
        %5662 = vadd.xlane.f32.xlu0 %v5661
        %v5663 = vpop.xlane.xlu0 %5662
        %v5664 = vsel %vm1042, %v5636, 0.0
        %5665 = vadd.xlane.f32.xlu0 %v5664
        %v5666 = vpop.xlane.xlu0 %5665
        %v5667 = vsel %vm1042, %v5637, 0.0
        %5668 = vadd.xlane.f32.xlu0 %v5667
        %v5669 = vpop.xlane.xlu0 %5668
        %v5670 = vsel %vm1042, %v5638, 0.0
        %5671 = vadd.xlane.f32.xlu0 %v5670
        %v5672 = vpop.xlane.xlu0 %5671
        %v5673 = vsel %vm1042, %v5639, 0.0
        %5674 = vadd.xlane.f32.xlu0 %v5673
        %v5675 = vpop.xlane.xlu0 %5674
        %v5676 = vsel %vm1042, %v5640, 0.0
        %5677 = vadd.xlane.f32.xlu0 %v5676
        %v5678 = vpop.xlane.xlu0 %5677
        %v5679 = vsel %vm1042, %v5641, 0.0
        %5680 = vadd.xlane.f32.xlu0 %v5679
        %v5681 = vpop.xlane.xlu0 %5680
        %v5682 = vsel %vm1042, %v5642, 0.0
        %5683 = vadd.xlane.f32.xlu0 %v5682
        %v5684 = vpop.xlane.xlu0 %5683
        %v5685 = vsel %vm1042, %v5643, 0.0
        %5686 = vadd.xlane.f32.xlu0 %v5685
        %v5687 = vpop.xlane.xlu0 %5686
        %v5688 = vsel %vm1042, %v5644, 0.0
        %5689 = vadd.xlane.f32.xlu0 %v5688
        %v5690 = vpop.xlane.xlu0 %5689
        %v5691 = vsel %vm1042, %v5645, 0.0
        %5692 = vadd.xlane.f32.xlu0 %v5691
        %v5693 = vpop.xlane.xlu0 %5692
        %v5694 = vmul.f32 %v5648, %v4926
        %v5695 = vmul.f32 %v5651, %v4926
        %v5696 = vmul.f32 %v5654, %v4926
        %v5697 = vmul.f32 %v5657, %v4926
        %v5698 = vmul.f32 %v5660, %v4926
        %v5699 = vmul.f32 %v5663, %v4926
        %v5700 = vmul.f32 %v5666, %v4926
        %v5701 = vmul.f32 %v5669, %v4926
        %v5702 = vmul.f32 %v5672, %v4926
        %v5703 = vmul.f32 %v5675, %v4926
        %v5704 = vmul.f32 %v5678, %v4926
        %v5705 = vmul.f32 %v5681, %v4926
        %v5706 = vmul.f32 %v5684, %v4926
        %v5707 = vmul.f32 %v5687, %v4926
        %v5708 = vmul.f32 %v5690, %v4926
        %v5709 = vmul.f32 %v5693, %v4926
        %v5710 = vadd.f32 %v5694, 1e-05
        %v5711 = vadd.f32 %v5695, 1e-05
        %v5712 = vadd.f32 %v5696, 1e-05
        %v5713 = vadd.f32 %v5697, 1e-05
        %v5714 = vadd.f32 %v5698, 1e-05
        %v5715 = vadd.f32 %v5699, 1e-05
        %v5716 = vadd.f32 %v5700, 1e-05
        %v5717 = vadd.f32 %v5701, 1e-05
        %v5718 = vadd.f32 %v5702, 1e-05
        %v5719 = vadd.f32 %v5703, 1e-05
        %v5720 = vadd.f32 %v5704, 1e-05
        %v5721 = vadd.f32 %v5705, 1e-05
        %v5722 = vadd.f32 %v5706, 1e-05
        %v5723 = vadd.f32 %v5707, 1e-05
        %v5724 = vadd.f32 %v5708, 1e-05
        %v5725 = vadd.f32 %v5709, 1e-05
        %v5726 = vrsqrt.pop %v5710
        %v5727 = vmul.f32 %v5726, %v5710
        %v5728 = vmul.f32 %v5727, %v5726
        %v5729 = vmul.f32 0.5, %v5728
        %v5730 = vsub.f32 1.5, %v5729
        %v5731 = vmul.f32 %v5726, %v5730
        %vm5732 = vweird.f32 %v5710
        %vm5733 = vweird.f32 %v5726
        %vm5734 = vmor %vm5732, %vm5733
        %v5735 = vsel %vm5734, %v5726, %v5731
        %v5736 = vrsqrt.pop %v5711
        %v5737 = vmul.f32 %v5736, %v5711
        %v5738 = vmul.f32 %v5737, %v5736
        %v5739 = vmul.f32 0.5, %v5738
        %v5740 = vsub.f32 1.5, %v5739
        %v5741 = vmul.f32 %v5736, %v5740
        %vm5742 = vweird.f32 %v5711
        %vm5743 = vweird.f32 %v5736
        %vm5744 = vmor %vm5742, %vm5743
        %v5745 = vsel %vm5744, %v5736, %v5741
        %v5746 = vrsqrt.pop %v5712
        %v5747 = vmul.f32 %v5746, %v5712
        %v5748 = vmul.f32 %v5747, %v5746
        %v5749 = vmul.f32 0.5, %v5748
        %v5750 = vsub.f32 1.5, %v5749
        %v5751 = vmul.f32 %v5746, %v5750
        %vm5752 = vweird.f32 %v5712
        %vm5753 = vweird.f32 %v5746
        %vm5754 = vmor %vm5752, %vm5753
        %v5755 = vsel %vm5754, %v5746, %v5751
        %v5756 = vrsqrt.pop %v5713
        %v5757 = vmul.f32 %v5756, %v5713
        %v5758 = vmul.f32 %v5757, %v5756
        %v5759 = vmul.f32 0.5, %v5758
        %v5760 = vsub.f32 1.5, %v5759
        %v5761 = vmul.f32 %v5756, %v5760
        %vm5762 = vweird.f32 %v5713
        %vm5763 = vweird.f32 %v5756
        %vm5764 = vmor %vm5762, %vm5763
        %v5765 = vsel %vm5764, %v5756, %v5761
        %v5766 = vrsqrt.pop %v5714
        %v5767 = vmul.f32 %v5766, %v5714
        %v5768 = vmul.f32 %v5767, %v5766
        %v5769 = vmul.f32 0.5, %v5768
        %v5770 = vsub.f32 1.5, %v5769
        %v5771 = vmul.f32 %v5766, %v5770
        %vm5772 = vweird.f32 %v5714
        %vm5773 = vweird.f32 %v5766
        %vm5774 = vmor %vm5772, %vm5773
        %v5775 = vsel %vm5774, %v5766, %v5771
        %v5776 = vrsqrt.pop %v5715
        %v5777 = vmul.f32 %v5776, %v5715
        %v5778 = vmul.f32 %v5777, %v5776
        %v5779 = vmul.f32 0.5, %v5778
        %v5780 = vsub.f32 1.5, %v5779
        %v5781 = vmul.f32 %v5776, %v5780
        %vm5782 = vweird.f32 %v5715
        %vm5783 = vweird.f32 %v5776
        %vm5784 = vmor %vm5782, %vm5783
        %v5785 = vsel %vm5784, %v5776, %v5781
        %v5786 = vrsqrt.pop %v5716
        %v5787 = vmul.f32 %v5786, %v5716
        %v5788 = vmul.f32 %v5787, %v5786
        %v5789 = vmul.f32 0.5, %v5788
        %v5790 = vsub.f32 1.5, %v5789
        %v5791 = vmul.f32 %v5786, %v5790
        %vm5792 = vweird.f32 %v5716
        %vm5793 = vweird.f32 %v5786
        %vm5794 = vmor %vm5792, %vm5793
        %v5795 = vsel %vm5794, %v5786, %v5791
        %v5796 = vrsqrt.pop %v5717
        %v5797 = vmul.f32 %v5796, %v5717
        %v5798 = vmul.f32 %v5797, %v5796
        %v5799 = vmul.f32 0.5, %v5798
        %v5800 = vsub.f32 1.5, %v5799
        %v5801 = vmul.f32 %v5796, %v5800
        %vm5802 = vweird.f32 %v5717
        %vm5803 = vweird.f32 %v5796
        %vm5804 = vmor %vm5802, %vm5803
        %v5805 = vsel %vm5804, %v5796, %v5801
        %v5806 = vrsqrt.pop %v5718
        %v5807 = vmul.f32 %v5806, %v5718
        %v5808 = vmul.f32 %v5807, %v5806
        %v5809 = vmul.f32 0.5, %v5808
        %v5810 = vsub.f32 1.5, %v5809
        %v5811 = vmul.f32 %v5806, %v5810
        %vm5812 = vweird.f32 %v5718
        %vm5813 = vweird.f32 %v5806
        %vm5814 = vmor %vm5812, %vm5813
        %v5815 = vsel %vm5814, %v5806, %v5811
        %v5816 = vrsqrt.pop %v5719
        %v5817 = vmul.f32 %v5816, %v5719
        %v5818 = vmul.f32 %v5817, %v5816
        %v5819 = vmul.f32 0.5, %v5818
        %v5820 = vsub.f32 1.5, %v5819
        %v5821 = vmul.f32 %v5816, %v5820
        %vm5822 = vweird.f32 %v5719
        %vm5823 = vweird.f32 %v5816
        %vm5824 = vmor %vm5822, %vm5823
        %v5825 = vsel %vm5824, %v5816, %v5821
        %v5826 = vrsqrt.pop %v5720
        %v5827 = vmul.f32 %v5826, %v5720
        %v5828 = vmul.f32 %v5827, %v5826
        %v5829 = vmul.f32 0.5, %v5828
        %v5830 = vsub.f32 1.5, %v5829
        %v5831 = vmul.f32 %v5826, %v5830
        %vm5832 = vweird.f32 %v5720
        %vm5833 = vweird.f32 %v5826
        %vm5834 = vmor %vm5832, %vm5833
        %v5835 = vsel %vm5834, %v5826, %v5831
        %v5836 = vrsqrt.pop %v5721
        %v5837 = vmul.f32 %v5836, %v5721
        %v5838 = vmul.f32 %v5837, %v5836
        %v5839 = vmul.f32 0.5, %v5838
        %v5840 = vsub.f32 1.5, %v5839
        %v5841 = vmul.f32 %v5836, %v5840
        %vm5842 = vweird.f32 %v5721
        %vm5843 = vweird.f32 %v5836
        %vm5844 = vmor %vm5842, %vm5843
        %v5845 = vsel %vm5844, %v5836, %v5841
        %v5846 = vrsqrt.pop %v5722
        %v5847 = vmul.f32 %v5846, %v5722
        %v5848 = vmul.f32 %v5847, %v5846
        %v5849 = vmul.f32 0.5, %v5848
        %v5850 = vsub.f32 1.5, %v5849
        %v5851 = vmul.f32 %v5846, %v5850
        %vm5852 = vweird.f32 %v5722
        %vm5853 = vweird.f32 %v5846
        %vm5854 = vmor %vm5852, %vm5853
        %v5855 = vsel %vm5854, %v5846, %v5851
        %v5856 = vrsqrt.pop %v5723
        %v5857 = vmul.f32 %v5856, %v5723
        %v5858 = vmul.f32 %v5857, %v5856
        %v5859 = vmul.f32 0.5, %v5858
        %v5860 = vsub.f32 1.5, %v5859
        %v5861 = vmul.f32 %v5856, %v5860
        %vm5862 = vweird.f32 %v5723
        %vm5863 = vweird.f32 %v5856
        %vm5864 = vmor %vm5862, %vm5863
        %v5865 = vsel %vm5864, %v5856, %v5861
        %v5866 = vrsqrt.pop %v5724
        %v5867 = vmul.f32 %v5866, %v5724
        %v5868 = vmul.f32 %v5867, %v5866
        %v5869 = vmul.f32 0.5, %v5868
        %v5870 = vsub.f32 1.5, %v5869
        %v5871 = vmul.f32 %v5866, %v5870
        %vm5872 = vweird.f32 %v5724
        %vm5873 = vweird.f32 %v5866
        %vm5874 = vmor %vm5872, %vm5873
        %v5875 = vsel %vm5874, %v5866, %v5871
        %v5876 = vrsqrt.pop %v5725
        %v5877 = vmul.f32 %v5876, %v5725
        %v5878 = vmul.f32 %v5877, %v5876
        %v5879 = vmul.f32 0.5, %v5878
        %v5880 = vsub.f32 1.5, %v5879
        %v5881 = vmul.f32 %v5876, %v5880
        %vm5882 = vweird.f32 %v5725
        %vm5883 = vweird.f32 %v5876
        %vm5884 = vmor %vm5882, %vm5883
        %v5885 = vsel %vm5884, %v5876, %v5881
        %v5886 = vmul.f32 %v5614, %v5735
        %v5887 = vmul.f32 %v5615, %v5745
        %v5888 = vmul.f32 %v5616, %v5755
        %v5889 = vmul.f32 %v5617, %v5765
        %v5890 = vmul.f32 %v5618, %v5775
        %v5891 = vmul.f32 %v5619, %v5785
        %v5892 = vmul.f32 %v5620, %v5795
        %v5893 = vmul.f32 %v5621, %v5805
        %v5894 = vmul.f32 %v5622, %v5815
        %v5895 = vmul.f32 %v5623, %v5825
        %v5896 = vmul.f32 %v5624, %v5835
        %v5897 = vmul.f32 %v5625, %v5845
        %v5898 = vmul.f32 %v5626, %v5855
        %v5899 = vmul.f32 %v5627, %v5865
        %v5900 = vmul.f32 %v5628, %v5875
        %v5901 = vmul.f32 %v5629, %v5885
        %v5903 = vperm.slane %v5548, 0
        %v5905 = vmul.f32 %v5886, %v5903
        %v5906 = vmul.f32 %v5887, %v5903
        %v5907 = vmul.f32 %v5888, %v5903
        %v5908 = vmul.f32 %v5889, %v5903
        %v5909 = vmul.f32 %v5890, %v5903
        %v5910 = vmul.f32 %v5891, %v5903
        %v5911 = vmul.f32 %v5892, %v5903
        %v5912 = vmul.f32 %v5893, %v5903
        %v5913 = vmul.f32 %v5894, %v5903
        %v5914 = vmul.f32 %v5895, %v5903
        %v5915 = vmul.f32 %v5896, %v5903
        %v5916 = vmul.f32 %v5897, %v5903
        %v5917 = vmul.f32 %v5898, %v5903
        %v5918 = vmul.f32 %v5899, %v5903
        %v5919 = vmul.f32 %v5900, %v5903
        %v5920 = vmul.f32 %v5901, %v5903
        %v5922 = vperm.slane %v5549, 0
        %v5924 = vadd.f32 %v5905, %v5922
        %v5925 = vadd.f32 %v5906, %v5922
        %v5926 = vadd.f32 %v5907, %v5922
        %v5927 = vadd.f32 %v5908, %v5922
        %v5928 = vadd.f32 %v5909, %v5922
        %v5929 = vadd.f32 %v5910, %v5922
        %v5930 = vadd.f32 %v5911, %v5922
        %v5931 = vadd.f32 %v5912, %v5922
        %v5932 = vadd.f32 %v5913, %v5922
        %v5933 = vadd.f32 %v5914, %v5922
        %v5934 = vadd.f32 %v5915, %v5922
        %v5935 = vadd.f32 %v5916, %v5922
        %v5936 = vadd.f32 %v5917, %v5922
        %v5937 = vadd.f32 %v5918, %v5922
        %v5938 = vadd.f32 %v5919, %v5922
        %v5939 = vadd.f32 %v5920, %v5922
        %5940 = vst.msk [vmem:[#allocation2] sm:$0xff] %vm1042, %v5924
        %5941 = vst.msk [vmem:[#allocation2 + $0x8] sm:$0xff] %vm1042, %v5925
        %5942 = vst.msk [vmem:[#allocation2 + $0x10] sm:$0xff] %vm1042, %v5926
        %5943 = vst.msk [vmem:[#allocation2 + $0x18] sm:$0xff] %vm1042, %v5927
        %5944 = vst.msk [vmem:[#allocation2 + $0x20] sm:$0xff] %vm1042, %v5928
        %5945 = vst.msk [vmem:[#allocation2 + $0x28] sm:$0xff] %vm1042, %v5929
        %5946 = vst.msk [vmem:[#allocation2 + $0x30] sm:$0xff] %vm1042, %v5930
        %5947 = vst.msk [vmem:[#allocation2 + $0x38] sm:$0xff] %vm1042, %v5931
        %5948 = vst.msk [vmem:[#allocation2 + $0x40] sm:$0xff] %vm1042, %v5932
        %5949 = vst.msk [vmem:[#allocation2 + $0x48] sm:$0xff] %vm1042, %v5933
        %5950 = vst.msk [vmem:[#allocation2 + $0x50] sm:$0xff] %vm1042, %v5934
        %5951 = vst.msk [vmem:[#allocation2 + $0x58] sm:$0xff] %vm1042, %v5935
        %5952 = vst.msk [vmem:[#allocation2 + $0x60] sm:$0xff] %vm1042, %v5936
        %5953 = vst.msk [vmem:[#allocation2 + $0x68] sm:$0xff] %vm1042, %v5937
        %5954 = vst.msk [vmem:[#allocation2 + $0x70] sm:$0xff] %vm1042, %v5938
        %5955 = vst.msk [vmem:[#allocation2 + $0x78] sm:$0xff] %vm1042, %v5939
        %p5956 = scmp.eq.s32.totalorder %s41, 1
        // Predicated region
        $region105: #{tpu_custom_call.1} parent=91 // pred_check
          %p5957 = pneg %p5956
        $region106: #{tpu_custom_call.1} parent=91 // pred_check_branch
          %5959 = sbr.rel (%p5957) target = $region108
        $region107: #{tpu_custom_call.1} parent=91 // pred_region
          %v5960 = vlaneseq
          %v5961 = vshrl.u32 %v5960, 7
          %v5962 = vmul.u32 %v5961, 16
          %v5963 = vsub.s32 %v1157, %v5962
          %vm5964 = vcmp.eq.s32.totalorder %v5963, 0
          %v5965 = vsel %vm5964, 1, 0
          %v5966 = vcvt.s32.f32 %v5965
          %5967 = vmatpush.msra.mxu0 %v5939
          %5968 = vmatpush.msra.mxu0 %v5938
          %5969 = vmatpush.msra.mxu0 %v5937
          %5970 = vmatpush.msra.mxu0 %v5936
          %5971 = vmatpush.msra.mxu0 %v5935
          %5972 = vmatpush.msra.mxu0 %v5934
          %5973 = vmatpush.msra.mxu0 %v5933
          %5974 = vmatpush.msra.mxu0 %v5932
          %5975 = vmatpush.msra.mxu0 %v5931
          %5976 = vmatpush.msra.mxu0 %v5930
          %5977 = vmatpush.msra.mxu0 %v5929
          %5978 = vmatpush.msra.mxu0 %v5928
          %5979 = vmatpush.msra.mxu0 %v5927
          %5980 = vmatpush.msra.mxu0 %v5926
          %5981 = vmatpush.msra.mxu0 %v5925
          %5982 = vmatpush.msra.mxu0 %v5924
          %5983 = vmatmul.f32.gmra.mxu0 %v5966
          %v5984 = vpop.f32.mrf.mxu0
          %v5985 = vadd.f32 0.0, %v5984
          %5986 = vdwg.mxu0
          %v5987 = vld [vmem:[%s16] sm:$0xff]
          %v5988 = vld [vmem:[%s16 + $0x8] sm:$0xff]
          %v5989 = vld [vmem:[%s16 + $0x10] sm:$0xff]
          %v5990 = vld [vmem:[%s16 + $0x18] sm:$0xff]
          %v5991 = vld [vmem:[%s17] sm:$0x1]
          %v5993 = vperm.slane %v5991, 0
          %v5996 = vsel %vm1042, %v5985, 0
          %5998 = vmatpush.msra.mxu0 0.0
          %5999 = vmatpush.msra.mxu0 0.0
          %6000 = vmatpush.msra.mxu0 0.0
          %6001 = vmatpush.msra.mxu0 0.0
          %6002 = vmatpush.msra.mxu0 0.0
          %6003 = vmatpush.msra.mxu0 0.0
          %6004 = vmatpush.msra.mxu0 0.0
          %6005 = vmatpush.msra.mxu0 0.0
          %6006 = vmatpush.msra.mxu0 0.0
          %6007 = vmatpush.msra.mxu0 0.0
          %6008 = vmatpush.msra.mxu0 0.0
          %6009 = vmatpush.msra.mxu0 0.0
          %6010 = vmatpush.msra.mxu0 %v5990
          %6011 = vmatpush.msra.mxu0 %v5989
          %6012 = vmatpush.msra.mxu0 %v5988
          %6013 = vmatpush.msra.mxu0 %v5987
          %6014 = vmatmul.f32.gmra.mxu0 %v5996
          %v6015 = vpop.f32.mrf.mxu0
          %v6016 = vadd.f32 %v5993, %v6015
          %6017 = vdwg.mxu0
          %6018 = vst.msk [vmem:[#allocation8] sm:$0xff] %vm1170, %v6016
        $region108: #{tpu_custom_call.1} parent=91 // pred_fallthru
          _
        // Predicated region
        $region109: #{tpu_custom_call.1} parent=91 // pred_check
          %p6019 = pneg %p509
        $region110: #{tpu_custom_call.1} parent=91 // pred_check_branch
          %6021 = sbr.rel (%p6019) target = $region112
        $region111: #{tpu_custom_call.1} parent=91 // pred_region
          %6023 = vsyncadd [#allocation5], 0
          %s6024 = smul.addr %s40, 8
          %s6025 = scalar_lea.hbm %s18, %s6024
          %s6027 = sshll.u32 [#allocation8], 4
          %s6028 = int_to_ptr.vmem [resolvable:$true] %s6027
          %s6029 = sshll.u32 %s6025, 4
          %s6030 = int_to_ptr.hbm [resolvable:$true] %s6029
          %6032 = dma.vmem_to_hbm [thread:$0]  %s6028, 128, %s6030, [#allocation5]
        $region112: #{tpu_custom_call.1} parent=91 // pred_fallthru
          _
        // Predicated region
        $region113: #{tpu_custom_call.1} parent=91 // pred_check
          %p6033 = pneg %p509
        $region114: #{tpu_custom_call.1} parent=91 // pred_check_branch
          %6035 = sbr.rel (%p6033) target = $region116
        $region115: #{tpu_custom_call.1} parent=91 // pred_region
          %6037 = dma.done [#allocation5], 128
        $region116: #{tpu_custom_call.1} parent=91 // pred_fallthru
          _
      $region92: #{tpu_custom_call.1} parent=5 // pred_fallthru
        _
      %p6038 = scmp.le.s32.totalorder 2, %s31
      // Predicated region
      $region117: #{tpu_custom_call.1} parent=5 // pred_check
        %p6039 = pneg %p6038
      $region118: #{tpu_custom_call.1} parent=5 // pred_check_branch
        %6041 = sbr.rel (%p6039) target = $region120
      $region119: #{tpu_custom_call.1} parent=5 // pred_region
        %s6042 = ssub.s32 %s31, 2
      $region120: #{tpu_custom_call.1} parent=5 // pred_fallthru
        _
    $region6: #{tpu_custom_call.1} parent=1 // loop_footer
      %s35 = sadd.s32 1, %s31
    $region7: #{tpu_custom_call.1} parent=1 // loop_footer_branch
      %30 = sbr.rel target = $region3
    $region8: #{tpu_custom_call.1} parent=1 // loop_exit
      _
    %6043 = vsyncpa [#allocation4], 1
    %s6044 = scalar_lea.sflag [#allocation4], 1
    %6045 = vsyncpa %s6044, 1
    %6046 = vsyncpa [#allocation7], 1
    %s6047 = scalar_lea.sflag [#allocation7], 1
    %6048 = vsyncpa %s6047, 1
    %6049 = vsyncpa [#allocation5], 1
    %s6050 = scalar_lea.sflag [#allocation5], 1
    %6051 = vsyncpa %s6050, 1

</llo_original>
